<compile_context>
chip_gen: v7x
topology: tpu7x:2x2x1
jax: 0.10.0
libtpu: 0.0.40
codegen_flags: <defaults>
</compile_context>

<pallas_src>
import math

import jax
import jax.numpy as jnp
import numpy as np
from jax import lax
from jax.experimental import pallas as pl
from jax.experimental.pallas import tpu as pltpu  # noqa: F401  (TPU backend)

# ----------------------------- model config ---------------------------------
SRC_VOCAB = 16
TGT_VOCAB = 10
D_MODEL = 32
NUM_HEADS = 4
D_K = D_MODEL // NUM_HEADS
NUM_LAYERS = 2
D_FF = 64
MAX_SEQ = 16
BATCH = 2
SEQ = 8
TOKENS = BATCH * SEQ
LN_EPS = 1e-5
OUT_LANES = 128                      # lane-dense padded logits width

# dot_general dims: contract last dim of lhs with last dim of rhs ("rhs^T")
TRANS_B = (((1,), (1,)), ((), ()))


# ----------------------- fused whole-model Pallas kernel --------------------
def transformer_kernel(x_ref, mask_ref, wqkv_ref, wbig_ref, vec_ref, fc_ref,
                       out_ref):
    x = x_ref[...]                     # (16, 32) activations, live in vregs
    mask = mask_ref[...]               # (16, 16) additive mask
    ones_col = jnp.ones((TOKENS, 1), jnp.float32)   # hoisted out of the loop

    for li in range(NUM_LAYERS):                    # static, unrolled
        # ---- QKV projection in TRANSPOSED layout ---------------------------
        # wqkv_ref[li] is (96, 33): cols 0..31 = [Wq|Wk|Wv]^T (scale folded
        # into Wq), col 32 = bias.  Appending a ones column to x folds the
        # bias add into the matmul.  Result qkvT[r, t] = (x@Wqkv + b)[t, r],
        # so per-head slices land on sublane-aligned 8-row bands.
        x_aug = jnp.concatenate([x, ones_col], axis=1)            # (16, 33)
        qkvT = lax.dot_general(wqkv_ref[li], x_aug, TRANS_B,
                               preferred_element_type=jnp.float32)  # (96, 16)

        # ---- multi-head attention, batched over the batch dim --------------
        headsT = []
        for h in range(NUM_HEADS):
            qT = qkvT[h * D_K:(h + 1) * D_K, :]                           # (8,16)
            kT = qkvT[D_MODEL + h * D_K:D_MODEL + (h + 1) * D_K, :]       # (8,16)
            vT = qkvT[2 * D_MODEL + h * D_K:2 * D_MODEL + (h + 1) * D_K, :]
            # One (16,8)@(8,16) score matmul per head covering BOTH batches;
            # the block-diagonal mask removes cross-batch terms.
            # NOTE: we ADD -1e9 (reference SETS masked scores to -1e9); both
            # give ~0 probability after max-subtraction — do not "fix".
            s = jnp.dot(qT.T, kT, preferred_element_type=jnp.float32) + mask
            m = jnp.max(s, axis=-1, keepdims=True)
            e = jnp.exp(s - m)
            p = e / jnp.sum(e, axis=-1, keepdims=True)   # exact division
            # Head output kept transposed (8,16) so heads combine on sublanes.
            headsT.append(lax.dot_general(vT, p, TRANS_B,
                                          preferred_element_type=jnp.float32))
        attn = jnp.concatenate(headsT, axis=0).T                  # (16, 32)

        # ---- unpack per-layer packed weights --------------------------------
        wbig = wbig_ref[li]                                       # (128, 64)
        w1 = wbig[0:D_MODEL, :]                                   # (32, 64)
        w2 = wbig[D_MODEL:D_MODEL + D_FF, 0:D_MODEL]              # (64, 32)
        wo = wbig[D_MODEL + D_FF:, 0:D_MODEL]                     # (32, 32)
        vec = vec_ref[li]                                         # (8, 64)
        bo = vec[0:1, 0:D_MODEL]
        g1 = vec[1:2, 0:D_MODEL]
        be1 = vec[2:3, 0:D_MODEL]
        b1 = vec[3:4, :]
        b2 = vec[4:5, 0:D_MODEL]
        g2 = vec[5:6, 0:D_MODEL]
        be2 = vec[6:7, 0:D_MODEL]

        # ---- output projection + residual + LayerNorm 1 ---------------------
        a = jnp.dot(attn, wo, preferred_element_type=jnp.float32) + bo
        h1 = x + a
        mu1 = jnp.mean(h1, axis=-1, keepdims=True)
        var1 = jnp.mean((h1 - mu1) ** 2, axis=-1, keepdims=True)
        h1 = (h1 - mu1) * lax.rsqrt(var1 + LN_EPS) * g1 + be1

        # ---- position-wise feed-forward -------------------------------------
        f = jnp.dot(h1, w1, preferred_element_type=jnp.float32) + b1
        f = jnp.maximum(f, 0.0)
        f = jnp.dot(f, w2, preferred_element_type=jnp.float32) + b2

        # ---- residual + LayerNorm 2 ------------------------------------------
        h2 = h1 + f
        mu2 = jnp.mean(h2, axis=-1, keepdims=True)
        var2 = jnp.mean((h2 - mu2) ** 2, axis=-1, keepdims=True)
        x = (h2 - mu2) * lax.rsqrt(var2 + LN_EPS) * g2 + be2

    # ---- FC head on ALL 16 rows, lane-dense 128-wide output ------------------
    # fc_ref is (33, 128): rows 0..31 = padded FC weight, row 32 = padded bias;
    # the ones column folds the bias in.  Wrapper picks rows {0,8}, lanes [:10].
    x_aug = jnp.concatenate([x, ones_col], axis=1)                # (16, 33)
    out_ref[...] = jnp.dot(x_aug, fc_ref[...],
                           preferred_element_type=jnp.float32)    # (16, 128)


# ----------------------------- parameter init --------------------------------
def make_params(key):
    keys = jax.random.split(key, 4 + NUM_LAYERS)
    params = {}
    # Embedding (padding_idx=0 -> zero row)
    emb = 0.02 * jax.random.normal(keys[0], (SRC_VOCAB, D_MODEL), jnp.float32)
    emb = emb.at[0].set(0.0)
    params["emb"] = emb

    # Positional encoding buffer
    pos = np.arange(MAX_SEQ, dtype=np.float32)[:, None]
    div = np.exp(np.arange(0, D_MODEL, 2, dtype=np.float32)
                 * -(math.log(10000.0) / D_MODEL))
    pe = np.zeros((MAX_SEQ, D_MODEL), dtype=np.float32)
    pe[:, 0::2] = np.sin(pos * div)
    pe[:, 1::2] = np.cos(pos * div)
    params["pe"] = jnp.asarray(pe)

    def linear(k, fan_in, fan_out):
        kw, kb = jax.random.split(k)
        w = jax.random.normal(kw, (fan_in, fan_out), jnp.float32) / math.sqrt(fan_in)
        b = 0.01 * jax.random.normal(kb, (1, fan_out), jnp.float32)
        return w, b

    layers = []
    for li in range(NUM_LAYERS):
        lk = jax.random.split(keys[1 + li], 8)
        wq, bq = linear(lk[0], D_MODEL, D_MODEL)
        wk, bk = linear(lk[1], D_MODEL, D_MODEL)
        wv, bv = linear(lk[2], D_MODEL, D_MODEL)
        wo, bo = linear(lk[3], D_MODEL, D_MODEL)
        w1, b1 = linear(lk[4], D_MODEL, D_FF)
        w2, b2 = linear(lk[5], D_FF, D_MODEL)
        layers.append(dict(
            wq=wq, bq=bq, wk=wk, bk=bk, wv=wv, bv=bv, wo=wo, bo=bo,
            g1=jnp.ones((1, D_MODEL), jnp.float32),
            be1=jnp.zeros((1, D_MODEL), jnp.float32),
            w1=w1, b1=b1, w2=w2, b2=b2,
            g2=jnp.ones((1, D_MODEL), jnp.float32),
            be2=jnp.zeros((1, D_MODEL), jnp.float32),
        ))
    params["layers"] = layers

    wf, bf = linear(keys[-1], D_MODEL, TGT_VOCAB)
    params["fc_w"], params["fc_b"] = wf, bf
    return params


# -------------------- one-time host-side weight packing ----------------------
def pack_params(params):
    """Pack all per-layer weights into a few VMEM-friendly blobs (done once)."""
    inv = 1.0 / math.sqrt(D_K)
    wqkv_l, wbig_l, vec_l = [], [], []
    for lp in params["layers"]:
        # Fold 1/sqrt(d_k) into the Q projection (exactly equivalent math).
        wq = lp["wq"] * inv
        bq = lp["bq"] * inv
        wqkvT = jnp.concatenate([wq.T, lp["wk"].T, lp["wv"].T], axis=0)      # (96,32)
        bqkvT = jnp.concatenate([bq, lp["bk"], lp["bv"]], axis=1).T          # (96,1)
        wqkv_l.append(jnp.concatenate([wqkvT, bqkvT], axis=1))               # (96,33)

        w2_pad = jnp.pad(lp["w2"], ((0, 0), (0, D_FF - D_MODEL)))            # (64,64)
        wo_pad = jnp.pad(lp["wo"], ((0, 0), (0, D_FF - D_MODEL)))            # (32,64)
        wbig_l.append(jnp.concatenate([lp["w1"], w2_pad, wo_pad], axis=0))   # (128,64)

        def pad_row(v):
            return jnp.pad(v, ((0, 0), (0, D_FF - v.shape[1])))
        vec_l.append(jnp.concatenate(
            [pad_row(lp["bo"]), pad_row(lp["g1"]), pad_row(lp["be1"]),
             lp["b1"], pad_row(lp["b2"]), pad_row(lp["g2"]), pad_row(lp["be2"]),
             jnp.zeros((1, D_FF), jnp.float32)], axis=0))                    # (8,64)

    fcw_pad = jnp.pad(params["fc_w"], ((0, 0), (0, OUT_LANES - TGT_VOCAB)))  # (32,128)
    fcb_pad = jnp.pad(params["fc_b"], ((0, 0), (0, OUT_LANES - TGT_VOCAB)))  # (1,128)
    return dict(emb=params["emb"], pe=params["pe"],
                wqkv=jnp.stack(wqkv_l),                  # (L, 96, 33)
                wbig=jnp.stack(wbig_l),                  # (L, 128, 64)
                vecs=jnp.stack(vec_l),                   # (L, 8, 64)
                fc=jnp.concatenate([fcw_pad, fcb_pad], axis=0))   # (33, 128)


# ----------------------------- jitted forward ---------------------------------
@jax.jit
def transformer_forward(packed, src):
    # Embedding gather + positional encoding (dropout = identity at inference).
    x = packed["emb"][src] + packed["pe"][None, :SEQ, :]          # (B, S, D)
    x2d = x.reshape(TOKENS, D_MODEL).astype(jnp.float32)

    # Additive mask over flattened tokens: block-diagonal across batches plus
    # -1e9 at padded (src == 0) key positions.
    keyok = (src != 0).reshape(-1)                                # (B*S,)
    bid = lax.broadcasted_iota(jnp.int32, (BATCH, SEQ), 0).reshape(-1)
    allowed = (bid[:, None] == bid[None, :]) & keyok[None, :]
    mask16 = jnp.where(allowed, 0.0, -1e9).astype(jnp.float32)    # (B*S, B*S)

    logits_full = pl.pallas_call(
        transformer_kernel,
        out_shape=jax.ShapeDtypeStruct((TOKENS, OUT_LANES), jnp.float32),
    )(x2d, mask16, packed["wqkv"], packed["wbig"], packed["vecs"], packed["fc"])

    # CLS rows are 0 and SEQ; real logits are the first TGT_VOCAB lanes.
    return logits_full[::SEQ, :TGT_VOCAB]                         # (B, TGT_VOCAB)


# ----------------------------- pure-JAX reference ------------------------------
def transformer_ref(params, src):
    x = params["emb"][src] + params["pe"][None, :src.shape[1], :]
    mask = (src != 0)[:, None, None, :]                           # (B,1,1,S)
    for lp in params["layers"]:
        q = x @ lp["wq"] + lp["bq"]
        k = x @ lp["wk"] + lp["bk"]
        v = x @ lp["wv"] + lp["bv"]
        B, S, D = x.shape

        def split(t):
            return t.reshape(B, S, NUM_HEADS, D_K).transpose(0, 2, 1, 3)
        qh, kh, vh = split(q), split(k), split(v)
        sc = (qh @ kh.transpose(0, 1, 3, 2)) / math.sqrt(D_K)
        sc = jnp.where(mask, sc, -1e9)
        p = jax.nn.softmax(sc, axis=-1)
        a = (p @ vh).transpose(0, 2, 1, 3).reshape(B, S, D)
        a = a @ lp["wo"] + lp["bo"]
        h1 = x + a
        h1 = (h1 - h1.mean(-1, keepdims=True)) / jnp.sqrt(
            h1.var(-1, keepdims=True) + LN_EPS) * lp["g1"] + lp["be1"]
        f = jnp.maximum(h1 @ lp["w1"] + lp["b1"], 0.0) @ lp["w2"] + lp["b2"]
        h2 = h1 + f
        x = (h2 - h2.mean(-1, keepdims=True)) / jnp.sqrt(
            h2.var(-1, keepdims=True) + LN_EPS) * lp["g2"] + lp["be2"]
    return x[:, 0, :] @ params["fc_w"] + params["fc_b"]


# --------------------------------- main ----------------------------------------
if __name__ == "__main__":
    key = jax.random.PRNGKey(0)
    kp, kd = jax.random.split(key)
    params = make_params(kp)
    packed = pack_params(params)          # one-time packing, outside the jit path

    # Tokens in [0, SRC_VOCAB); some zeros so the padding mask is exercised.
    src = jax.random.randint(kd, (BATCH, SEQ), 0, SRC_VOCAB, dtype=jnp.int32)
    src = src.at[0, -2:].set(0)
    src = src.at[1, -3:].set(0)

    out = transformer_forward(packed, src)
    out = jax.block_until_ready(out)

    ref = transformer_ref(params, src)
    assert out.shape == (BATCH, TGT_VOCAB)
    assert bool(jnp.all(jnp.isfinite(out)))
    np.testing.assert_allclose(np.asarray(out), np.asarray(ref),
                               rtol=2e-3, atol=2e-3)
    print("KERNEL_OK")
</pallas_src>

<mosaic_0001>
module attributes {stable_mosaic.version = 11 : i64} {
  func.func @transformer_kernel(%arg0: memref<16x32xf32, #tpu.memory_space<vmem>>, %arg1: memref<16x16xf32, #tpu.memory_space<vmem>>, %arg2: memref<2x96x33xf32, #tpu.memory_space<vmem>>, %arg3: memref<2x128x64xf32, #tpu.memory_space<vmem>>, %arg4: memref<2x8x64xf32, #tpu.memory_space<vmem>>, %arg5: memref<33x128xf32, #tpu.memory_space<vmem>>, %arg6: memref<16x128xf32, #tpu.memory_space<vmem>>) attributes {dimension_semantics = [], scalar_prefetch = 0 : i64, scratch_operands = 0 : i64, tpu.core_type = #tpu.core_type<tc>} {
    %c0 = arith.constant 0 : index
    %c0_0 = arith.constant 0 : index
    %0 = vector.load %arg0[%c0, %c0_0] : memref<16x32xf32, #tpu.memory_space<vmem>>, vector<16x32xf32>
    %c0_1 = arith.constant 0 : index
    %c0_2 = arith.constant 0 : index
    %1 = vector.load %arg1[%c0_1, %c0_2] : memref<16x16xf32, #tpu.memory_space<vmem>>, vector<16x16xf32>
    %cst = arith.constant 1.000000e+00 : f32
    %2 = vector.broadcast %cst : f32 to vector<16x1xf32>
    %3 = tpu.concatenate %0, %2 in 1 : vector<16x32xf32>, vector<16x1xf32> -> vector<16x33xf32>
    %c0_3 = arith.constant 0 : index
    %c0_4 = arith.constant 0 : index
    %c0_5 = arith.constant 0 : index
    %4 = vector.load %arg2[%c0_3, %c0_4, %c0_5] : memref<2x96x33xf32, #tpu.memory_space<vmem>>, vector<1x96x33xf32>
    %5 = vector.shape_cast %4 : vector<1x96x33xf32> to vector<96x33xf32>
    %cst_6 = arith.constant dense<0.000000e+00> : vector<96x16xf32>
    %6 = tpu.matmul %5, %3, %cst_6 {dimension_numbers = #tpu.dot_dimension_numbers<[1], [1], [0], [0], [0, 0, 1, 0], [], []>} : vector<96x33xf32>, vector<16x33xf32>, vector<96x16xf32> -> vector<96x16xf32>
    %7 = vector.extract_strided_slice %6 {offsets = [0, 0], sizes = [8, 16], strides = [1, 1]} : vector<96x16xf32> to vector<8x16xf32>
    %8 = vector.extract_strided_slice %6 {offsets = [32, 0], sizes = [8, 16], strides = [1, 1]} : vector<96x16xf32> to vector<8x16xf32>
    %9 = vector.extract_strided_slice %6 {offsets = [64, 0], sizes = [8, 16], strides = [1, 1]} : vector<96x16xf32> to vector<8x16xf32>
    %10 = tpu.transpose %7, [1, 0] : vector<8x16xf32> -> vector<16x8xf32>
    %cst_7 = arith.constant dense<0.000000e+00> : vector<16x16xf32>
    %11 = tpu.matmul %10, %8, %cst_7 {dimension_numbers = #tpu.dot_dimension_numbers<[1], [0], [0], [1], [0, 0, 1, 1], [], []>} : vector<16x8xf32>, vector<8x16xf32>, vector<16x16xf32> -> vector<16x16xf32>
    %12 = arith.addf %11, %1 : vector<16x16xf32>
    %cst_8 = arith.constant dense<0xFF800000> : vector<16xf32>
    %13 = vector.multi_reduction <maximumf>, %12, %cst_8 [1] : vector<16x16xf32> to vector<16xf32>
    %14 = vector.shape_cast %13 : vector<16xf32> to vector<16x1xf32>
    %15 = vector.broadcast %14 : vector<16x1xf32> to vector<16x16xf32>
    %16 = arith.subf %12, %15 : vector<16x16xf32>
    %17 = math.exp %16 : vector<16x16xf32>
    %cst_9 = arith.constant dense<0.000000e+00> : vector<16xf32>
    %18 = vector.multi_reduction <add>, %17, %cst_9 [1] : vector<16x16xf32> to vector<16xf32>
    %19 = vector.shape_cast %18 : vector<16xf32> to vector<16x1xf32>
    %20 = vector.broadcast %19 : vector<16x1xf32> to vector<16x16xf32>
    %21 = arith.divf %17, %20 : vector<16x16xf32>
    %cst_10 = arith.constant dense<0.000000e+00> : vector<8x16xf32>
    %22 = tpu.matmul %9, %21, %cst_10 {dimension_numbers = #tpu.dot_dimension_numbers<[1], [1], [0], [0], [0, 0, 1, 0], [], []>} : vector<8x16xf32>, vector<16x16xf32>, vector<8x16xf32> -> vector<8x16xf32>
    %23 = vector.extract_strided_slice %6 {offsets = [8, 0], sizes = [8, 16], strides = [1, 1]} : vector<96x16xf32> to vector<8x16xf32>
    %24 = vector.extract_strided_slice %6 {offsets = [40, 0], sizes = [8, 16], strides = [1, 1]} : vector<96x16xf32> to vector<8x16xf32>
    %25 = vector.extract_strided_slice %6 {offsets = [72, 0], sizes = [8, 16], strides = [1, 1]} : vector<96x16xf32> to vector<8x16xf32>
    %26 = tpu.transpose %23, [1, 0] : vector<8x16xf32> -> vector<16x8xf32>
    %cst_11 = arith.constant dense<0.000000e+00> : vector<16x16xf32>
    %27 = tpu.matmul %26, %24, %cst_11 {dimension_numbers = #tpu.dot_dimension_numbers<[1], [0], [0], [1], [0, 0, 1, 1], [], []>} : vector<16x8xf32>, vector<8x16xf32>, vector<16x16xf32> -> vector<16x16xf32>
    %28 = arith.addf %27, %1 : vector<16x16xf32>
    %cst_12 = arith.constant dense<0xFF800000> : vector<16xf32>
    %29 = vector.multi_reduction <maximumf>, %28, %cst_12 [1] : vector<16x16xf32> to vector<16xf32>
    %30 = vector.shape_cast %29 : vector<16xf32> to vector<16x1xf32>
    %31 = vector.broadcast %30 : vector<16x1xf32> to vector<16x16xf32>
    %32 = arith.subf %28, %31 : vector<16x16xf32>
    %33 = math.exp %32 : vector<16x16xf32>
    %cst_13 = arith.constant dense<0.000000e+00> : vector<16xf32>
    %34 = vector.multi_reduction <add>, %33, %cst_13 [1] : vector<16x16xf32> to vector<16xf32>
    %35 = vector.shape_cast %34 : vector<16xf32> to vector<16x1xf32>
    %36 = vector.broadcast %35 : vector<16x1xf32> to vector<16x16xf32>
    %37 = arith.divf %33, %36 : vector<16x16xf32>
    %cst_14 = arith.constant dense<0.000000e+00> : vector<8x16xf32>
    %38 = tpu.matmul %25, %37, %cst_14 {dimension_numbers = #tpu.dot_dimension_numbers<[1], [1], [0], [0], [0, 0, 1, 0], [], []>} : vector<8x16xf32>, vector<16x16xf32>, vector<8x16xf32> -> vector<8x16xf32>
    %39 = vector.extract_strided_slice %6 {offsets = [16, 0], sizes = [8, 16], strides = [1, 1]} : vector<96x16xf32> to vector<8x16xf32>
    %40 = vector.extract_strided_slice %6 {offsets = [48, 0], sizes = [8, 16], strides = [1, 1]} : vector<96x16xf32> to vector<8x16xf32>
    %41 = vector.extract_strided_slice %6 {offsets = [80, 0], sizes = [8, 16], strides = [1, 1]} : vector<96x16xf32> to vector<8x16xf32>
    %42 = tpu.transpose %39, [1, 0] : vector<8x16xf32> -> vector<16x8xf32>
    %cst_15 = arith.constant dense<0.000000e+00> : vector<16x16xf32>
    %43 = tpu.matmul %42, %40, %cst_15 {dimension_numbers = #tpu.dot_dimension_numbers<[1], [0], [0], [1], [0, 0, 1, 1], [], []>} : vector<16x8xf32>, vector<8x16xf32>, vector<16x16xf32> -> vector<16x16xf32>
    %44 = arith.addf %43, %1 : vector<16x16xf32>
    %cst_16 = arith.constant dense<0xFF800000> : vector<16xf32>
    %45 = vector.multi_reduction <maximumf>, %44, %cst_16 [1] : vector<16x16xf32> to vector<16xf32>
    %46 = vector.shape_cast %45 : vector<16xf32> to vector<16x1xf32>
    %47 = vector.broadcast %46 : vector<16x1xf32> to vector<16x16xf32>
    %48 = arith.subf %44, %47 : vector<16x16xf32>
    %49 = math.exp %48 : vector<16x16xf32>
    %cst_17 = arith.constant dense<0.000000e+00> : vector<16xf32>
    %50 = vector.multi_reduction <add>, %49, %cst_17 [1] : vector<16x16xf32> to vector<16xf32>
    %51 = vector.shape_cast %50 : vector<16xf32> to vector<16x1xf32>
    %52 = vector.broadcast %51 : vector<16x1xf32> to vector<16x16xf32>
    %53 = arith.divf %49, %52 : vector<16x16xf32>
    %cst_18 = arith.constant dense<0.000000e+00> : vector<8x16xf32>
    %54 = tpu.matmul %41, %53, %cst_18 {dimension_numbers = #tpu.dot_dimension_numbers<[1], [1], [0], [0], [0, 0, 1, 0], [], []>} : vector<8x16xf32>, vector<16x16xf32>, vector<8x16xf32> -> vector<8x16xf32>
    %55 = vector.extract_strided_slice %6 {offsets = [24, 0], sizes = [8, 16], strides = [1, 1]} : vector<96x16xf32> to vector<8x16xf32>
    %56 = vector.extract_strided_slice %6 {offsets = [56, 0], sizes = [8, 16], strides = [1, 1]} : vector<96x16xf32> to vector<8x16xf32>
    %57 = vector.extract_strided_slice %6 {offsets = [88, 0], sizes = [8, 16], strides = [1, 1]} : vector<96x16xf32> to vector<8x16xf32>
    %58 = tpu.transpose %55, [1, 0] : vector<8x16xf32> -> vector<16x8xf32>
    %cst_19 = arith.constant dense<0.000000e+00> : vector<16x16xf32>
    %59 = tpu.matmul %58, %56, %cst_19 {dimension_numbers = #tpu.dot_dimension_numbers<[1], [0], [0], [1], [0, 0, 1, 1], [], []>} : vector<16x8xf32>, vector<8x16xf32>, vector<16x16xf32> -> vector<16x16xf32>
    %60 = arith.addf %59, %1 : vector<16x16xf32>
    %cst_20 = arith.constant dense<0xFF800000> : vector<16xf32>
    %61 = vector.multi_reduction <maximumf>, %60, %cst_20 [1] : vector<16x16xf32> to vector<16xf32>
    %62 = vector.shape_cast %61 : vector<16xf32> to vector<16x1xf32>
    %63 = vector.broadcast %62 : vector<16x1xf32> to vector<16x16xf32>
    %64 = arith.subf %60, %63 : vector<16x16xf32>
    %65 = math.exp %64 : vector<16x16xf32>
    %cst_21 = arith.constant dense<0.000000e+00> : vector<16xf32>
    %66 = vector.multi_reduction <add>, %65, %cst_21 [1] : vector<16x16xf32> to vector<16xf32>
    %67 = vector.shape_cast %66 : vector<16xf32> to vector<16x1xf32>
    %68 = vector.broadcast %67 : vector<16x1xf32> to vector<16x16xf32>
    %69 = arith.divf %65, %68 : vector<16x16xf32>
    %cst_22 = arith.constant dense<0.000000e+00> : vector<8x16xf32>
    %70 = tpu.matmul %57, %69, %cst_22 {dimension_numbers = #tpu.dot_dimension_numbers<[1], [1], [0], [0], [0, 0, 1, 0], [], []>} : vector<8x16xf32>, vector<16x16xf32>, vector<8x16xf32> -> vector<8x16xf32>
    %71 = tpu.concatenate %22, %38, %54, %70 in 0 : vector<8x16xf32>, vector<8x16xf32>, vector<8x16xf32>, vector<8x16xf32> -> vector<32x16xf32>
    %72 = tpu.transpose %71, [1, 0] : vector<32x16xf32> -> vector<16x32xf32>
    %c0_23 = arith.constant 0 : index
    %c0_24 = arith.constant 0 : index
    %c0_25 = arith.constant 0 : index
    %73 = vector.load %arg3[%c0_23, %c0_24, %c0_25] : memref<2x128x64xf32, #tpu.memory_space<vmem>>, vector<1x128x64xf32>
    %74 = vector.shape_cast %73 : vector<1x128x64xf32> to vector<128x64xf32>
    %75 = vector.extract_strided_slice %74 {offsets = [0, 0], sizes = [32, 64], strides = [1, 1]} : vector<128x64xf32> to vector<32x64xf32>
    %76 = vector.extract_strided_slice %74 {offsets = [32, 0], sizes = [64, 32], strides = [1, 1]} : vector<128x64xf32> to vector<64x32xf32>
    %77 = vector.extract_strided_slice %74 {offsets = [96, 0], sizes = [32, 32], strides = [1, 1]} : vector<128x64xf32> to vector<32x32xf32>
    %c0_26 = arith.constant 0 : index
    %c0_27 = arith.constant 0 : index
    %c0_28 = arith.constant 0 : index
    %78 = vector.load %arg4[%c0_26, %c0_27, %c0_28] : memref<2x8x64xf32, #tpu.memory_space<vmem>>, vector<1x8x64xf32>
    %79 = vector.shape_cast %78 : vector<1x8x64xf32> to vector<8x64xf32>
    %80 = vector.extract_strided_slice %79 {offsets = [0, 0], sizes = [1, 32], strides = [1, 1]} : vector<8x64xf32> to vector<1x32xf32>
    %81 = vector.extract_strided_slice %79 {offsets = [1, 0], sizes = [1, 32], strides = [1, 1]} : vector<8x64xf32> to vector<1x32xf32>
    %82 = vector.extract_strided_slice %79 {offsets = [2, 0], sizes = [1, 32], strides = [1, 1]} : vector<8x64xf32> to vector<1x32xf32>
    %83 = vector.extract_strided_slice %79 {offsets = [3, 0], sizes = [1, 64], strides = [1, 1]} : vector<8x64xf32> to vector<1x64xf32>
    %84 = vector.extract_strided_slice %79 {offsets = [4, 0], sizes = [1, 32], strides = [1, 1]} : vector<8x64xf32> to vector<1x32xf32>
    %85 = vector.extract_strided_slice %79 {offsets = [5, 0], sizes = [1, 32], strides = [1, 1]} : vector<8x64xf32> to vector<1x32xf32>
    %86 = vector.extract_strided_slice %79 {offsets = [6, 0], sizes = [1, 32], strides = [1, 1]} : vector<8x64xf32> to vector<1x32xf32>
    %cst_29 = arith.constant dense<0.000000e+00> : vector<16x32xf32>
    %87 = tpu.matmul %72, %77, %cst_29 {dimension_numbers = #tpu.dot_dimension_numbers<[1], [0], [0], [1], [0, 0, 1, 1], [], []>} : vector<16x32xf32>, vector<32x32xf32>, vector<16x32xf32> -> vector<16x32xf32>
    %88 = vector.broadcast %80 : vector<1x32xf32> to vector<16x32xf32>
    %89 = arith.addf %87, %88 : vector<16x32xf32>
    %90 = arith.addf %0, %89 : vector<16x32xf32>
    %cst_30 = arith.constant dense<0.000000e+00> : vector<16xf32>
    %91 = vector.multi_reduction <add>, %90, %cst_30 [1] : vector<16x32xf32> to vector<16xf32>
    %92 = vector.shape_cast %91 : vector<16xf32> to vector<16x1xf32>
    %cst_31 = arith.constant 3.200000e+01 : f32
    %93 = vector.broadcast %cst_31 : f32 to vector<16x1xf32>
    %94 = arith.divf %92, %93 : vector<16x1xf32>
    %95 = vector.broadcast %94 : vector<16x1xf32> to vector<16x32xf32>
    %96 = arith.subf %90, %95 : vector<16x32xf32>
    %97 = arith.mulf %96, %96 : vector<16x32xf32>
    %cst_32 = arith.constant dense<0.000000e+00> : vector<16xf32>
    %98 = vector.multi_reduction <add>, %97, %cst_32 [1] : vector<16x32xf32> to vector<16xf32>
    %99 = vector.shape_cast %98 : vector<16xf32> to vector<16x1xf32>
    %cst_33 = arith.constant 3.200000e+01 : f32
    %100 = vector.broadcast %cst_33 : f32 to vector<16x1xf32>
    %101 = arith.divf %99, %100 : vector<16x1xf32>
    %102 = vector.broadcast %94 : vector<16x1xf32> to vector<16x32xf32>
    %103 = arith.subf %90, %102 : vector<16x32xf32>
    %cst_34 = arith.constant 9.99999974E-6 : f32
    %104 = vector.broadcast %cst_34 : f32 to vector<16x1xf32>
    %105 = arith.addf %101, %104 : vector<16x1xf32>
    %106 = math.rsqrt %105 : vector<16x1xf32>
    %107 = vector.broadcast %106 : vector<16x1xf32> to vector<16x32xf32>
    %108 = arith.mulf %103, %107 : vector<16x32xf32>
    %109 = vector.broadcast %81 : vector<1x32xf32> to vector<16x32xf32>
    %110 = arith.mulf %108, %109 : vector<16x32xf32>
    %111 = vector.broadcast %82 : vector<1x32xf32> to vector<16x32xf32>
    %112 = arith.addf %110, %111 : vector<16x32xf32>
    %cst_35 = arith.constant dense<0.000000e+00> : vector<16x64xf32>
    %113 = tpu.matmul %112, %75, %cst_35 {dimension_numbers = #tpu.dot_dimension_numbers<[1], [0], [0], [1], [0, 0, 1, 1], [], []>} : vector<16x32xf32>, vector<32x64xf32>, vector<16x64xf32> -> vector<16x64xf32>
    %114 = vector.broadcast %83 : vector<1x64xf32> to vector<16x64xf32>
    %115 = arith.addf %113, %114 : vector<16x64xf32>
    %cst_36 = arith.constant 0.000000e+00 : f32
    %116 = vector.broadcast %cst_36 : f32 to vector<16x64xf32>
    %117 = arith.maximumf %115, %116 : vector<16x64xf32>
    %cst_37 = arith.constant dense<0.000000e+00> : vector<16x32xf32>
    %118 = tpu.matmul %117, %76, %cst_37 {dimension_numbers = #tpu.dot_dimension_numbers<[1], [0], [0], [1], [0, 0, 1, 1], [], []>} : vector<16x64xf32>, vector<64x32xf32>, vector<16x32xf32> -> vector<16x32xf32>
    %119 = vector.broadcast %84 : vector<1x32xf32> to vector<16x32xf32>
    %120 = arith.addf %118, %119 : vector<16x32xf32>
    %121 = arith.addf %112, %120 : vector<16x32xf32>
    %cst_38 = arith.constant dense<0.000000e+00> : vector<16xf32>
    %122 = vector.multi_reduction <add>, %121, %cst_38 [1] : vector<16x32xf32> to vector<16xf32>
    %123 = vector.shape_cast %122 : vector<16xf32> to vector<16x1xf32>
    %cst_39 = arith.constant 3.200000e+01 : f32
    %124 = vector.broadcast %cst_39 : f32 to vector<16x1xf32>
    %125 = arith.divf %123, %124 : vector<16x1xf32>
    %126 = vector.broadcast %125 : vector<16x1xf32> to vector<16x32xf32>
    %127 = arith.subf %121, %126 : vector<16x32xf32>
    %128 = arith.mulf %127, %127 : vector<16x32xf32>
    %cst_40 = arith.constant dense<0.000000e+00> : vector<16xf32>
    %129 = vector.multi_reduction <add>, %128, %cst_40 [1] : vector<16x32xf32> to vector<16xf32>
    %130 = vector.shape_cast %129 : vector<16xf32> to vector<16x1xf32>
    %cst_41 = arith.constant 3.200000e+01 : f32
    %131 = vector.broadcast %cst_41 : f32 to vector<16x1xf32>
    %132 = arith.divf %130, %131 : vector<16x1xf32>
    %133 = vector.broadcast %125 : vector<16x1xf32> to vector<16x32xf32>
    %134 = arith.subf %121, %133 : vector<16x32xf32>
    %cst_42 = arith.constant 9.99999974E-6 : f32
    %135 = vector.broadcast %cst_42 : f32 to vector<16x1xf32>
    %136 = arith.addf %132, %135 : vector<16x1xf32>
    %137 = math.rsqrt %136 : vector<16x1xf32>
    %138 = vector.broadcast %137 : vector<16x1xf32> to vector<16x32xf32>
    %139 = arith.mulf %134, %138 : vector<16x32xf32>
    %140 = vector.broadcast %85 : vector<1x32xf32> to vector<16x32xf32>
    %141 = arith.mulf %139, %140 : vector<16x32xf32>
    %142 = vector.broadcast %86 : vector<1x32xf32> to vector<16x32xf32>
    %143 = arith.addf %141, %142 : vector<16x32xf32>
    %144 = tpu.concatenate %143, %2 in 1 : vector<16x32xf32>, vector<16x1xf32> -> vector<16x33xf32>
    %c1 = arith.constant 1 : index
    %c0_43 = arith.constant 0 : index
    %c0_44 = arith.constant 0 : index
    %145 = vector.load %arg2[%c1, %c0_43, %c0_44] : memref<2x96x33xf32, #tpu.memory_space<vmem>>, vector<1x96x33xf32>
    %146 = vector.shape_cast %145 : vector<1x96x33xf32> to vector<96x33xf32>
    %cst_45 = arith.constant dense<0.000000e+00> : vector<96x16xf32>
    %147 = tpu.matmul %146, %144, %cst_45 {dimension_numbers = #tpu.dot_dimension_numbers<[1], [1], [0], [0], [0, 0, 1, 0], [], []>} : vector<96x33xf32>, vector<16x33xf32>, vector<96x16xf32> -> vector<96x16xf32>
    %148 = vector.extract_strided_slice %147 {offsets = [0, 0], sizes = [8, 16], strides = [1, 1]} : vector<96x16xf32> to vector<8x16xf32>
    %149 = vector.extract_strided_slice %147 {offsets = [32, 0], sizes = [8, 16], strides = [1, 1]} : vector<96x16xf32> to vector<8x16xf32>
    %150 = vector.extract_strided_slice %147 {offsets = [64, 0], sizes = [8, 16], strides = [1, 1]} : vector<96x16xf32> to vector<8x16xf32>
    %151 = tpu.transpose %148, [1, 0] : vector<8x16xf32> -> vector<16x8xf32>
    %cst_46 = arith.constant dense<0.000000e+00> : vector<16x16xf32>
    %152 = tpu.matmul %151, %149, %cst_46 {dimension_numbers = #tpu.dot_dimension_numbers<[1], [0], [0], [1], [0, 0, 1, 1], [], []>} : vector<16x8xf32>, vector<8x16xf32>, vector<16x16xf32> -> vector<16x16xf32>
    %153 = arith.addf %152, %1 : vector<16x16xf32>
    %cst_47 = arith.constant dense<0xFF800000> : vector<16xf32>
    %154 = vector.multi_reduction <maximumf>, %153, %cst_47 [1] : vector<16x16xf32> to vector<16xf32>
    %155 = vector.shape_cast %154 : vector<16xf32> to vector<16x1xf32>
    %156 = vector.broadcast %155 : vector<16x1xf32> to vector<16x16xf32>
    %157 = arith.subf %153, %156 : vector<16x16xf32>
    %158 = math.exp %157 : vector<16x16xf32>
    %cst_48 = arith.constant dense<0.000000e+00> : vector<16xf32>
    %159 = vector.multi_reduction <add>, %158, %cst_48 [1] : vector<16x16xf32> to vector<16xf32>
    %160 = vector.shape_cast %159 : vector<16xf32> to vector<16x1xf32>
    %161 = vector.broadcast %160 : vector<16x1xf32> to vector<16x16xf32>
    %162 = arith.divf %158, %161 : vector<16x16xf32>
    %cst_49 = arith.constant dense<0.000000e+00> : vector<8x16xf32>
    %163 = tpu.matmul %150, %162, %cst_49 {dimension_numbers = #tpu.dot_dimension_numbers<[1], [1], [0], [0], [0, 0, 1, 0], [], []>} : vector<8x16xf32>, vector<16x16xf32>, vector<8x16xf32> -> vector<8x16xf32>
    %164 = vector.extract_strided_slice %147 {offsets = [8, 0], sizes = [8, 16], strides = [1, 1]} : vector<96x16xf32> to vector<8x16xf32>
    %165 = vector.extract_strided_slice %147 {offsets = [40, 0], sizes = [8, 16], strides = [1, 1]} : vector<96x16xf32> to vector<8x16xf32>
    %166 = vector.extract_strided_slice %147 {offsets = [72, 0], sizes = [8, 16], strides = [1, 1]} : vector<96x16xf32> to vector<8x16xf32>
    %167 = tpu.transpose %164, [1, 0] : vector<8x16xf32> -> vector<16x8xf32>
    %cst_50 = arith.constant dense<0.000000e+00> : vector<16x16xf32>
    %168 = tpu.matmul %167, %165, %cst_50 {dimension_numbers = #tpu.dot_dimension_numbers<[1], [0], [0], [1], [0, 0, 1, 1], [], []>} : vector<16x8xf32>, vector<8x16xf32>, vector<16x16xf32> -> vector<16x16xf32>
    %169 = arith.addf %168, %1 : vector<16x16xf32>
    %cst_51 = arith.constant dense<0xFF800000> : vector<16xf32>
    %170 = vector.multi_reduction <maximumf>, %169, %cst_51 [1] : vector<16x16xf32> to vector<16xf32>
    %171 = vector.shape_cast %170 : vector<16xf32> to vector<16x1xf32>
    %172 = vector.broadcast %171 : vector<16x1xf32> to vector<16x16xf32>
    %173 = arith.subf %169, %172 : vector<16x16xf32>
    %174 = math.exp %173 : vector<16x16xf32>
    %cst_52 = arith.constant dense<0.000000e+00> : vector<16xf32>
    %175 = vector.multi_reduction <add>, %174, %cst_52 [1] : vector<16x16xf32> to vector<16xf32>
    %176 = vector.shape_cast %175 : vector<16xf32> to vector<16x1xf32>
    %177 = vector.broadcast %176 : vector<16x1xf32> to vector<16x16xf32>
    %178 = arith.divf %174, %177 : vector<16x16xf32>
    %cst_53 = arith.constant dense<0.000000e+00> : vector<8x16xf32>
    %179 = tpu.matmul %166, %178, %cst_53 {dimension_numbers = #tpu.dot_dimension_numbers<[1], [1], [0], [0], [0, 0, 1, 0], [], []>} : vector<8x16xf32>, vector<16x16xf32>, vector<8x16xf32> -> vector<8x16xf32>
    %180 = vector.extract_strided_slice %147 {offsets = [16, 0], sizes = [8, 16], strides = [1, 1]} : vector<96x16xf32> to vector<8x16xf32>
    %181 = vector.extract_strided_slice %147 {offsets = [48, 0], sizes = [8, 16], strides = [1, 1]} : vector<96x16xf32> to vector<8x16xf32>
    %182 = vector.extract_strided_slice %147 {offsets = [80, 0], sizes = [8, 16], strides = [1, 1]} : vector<96x16xf32> to vector<8x16xf32>
    %183 = tpu.transpose %180, [1, 0] : vector<8x16xf32> -> vector<16x8xf32>
    %cst_54 = arith.constant dense<0.000000e+00> : vector<16x16xf32>
    %184 = tpu.matmul %183, %181, %cst_54 {dimension_numbers = #tpu.dot_dimension_numbers<[1], [0], [0], [1], [0, 0, 1, 1], [], []>} : vector<16x8xf32>, vector<8x16xf32>, vector<16x16xf32> -> vector<16x16xf32>
    %185 = arith.addf %184, %1 : vector<16x16xf32>
    %cst_55 = arith.constant dense<0xFF800000> : vector<16xf32>
    %186 = vector.multi_reduction <maximumf>, %185, %cst_55 [1] : vector<16x16xf32> to vector<16xf32>
    %187 = vector.shape_cast %186 : vector<16xf32> to vector<16x1xf32>
    %188 = vector.broadcast %187 : vector<16x1xf32> to vector<16x16xf32>
    %189 = arith.subf %185, %188 : vector<16x16xf32>
    %190 = math.exp %189 : vector<16x16xf32>
    %cst_56 = arith.constant dense<0.000000e+00> : vector<16xf32>
    %191 = vector.multi_reduction <add>, %190, %cst_56 [1] : vector<16x16xf32> to vector<16xf32>
    %192 = vector.shape_cast %191 : vector<16xf32> to vector<16x1xf32>
    %193 = vector.broadcast %192 : vector<16x1xf32> to vector<16x16xf32>
    %194 = arith.divf %190, %193 : vector<16x16xf32>
    %cst_57 = arith.constant dense<0.000000e+00> : vector<8x16xf32>
    %195 = tpu.matmul %182, %194, %cst_57 {dimension_numbers = #tpu.dot_dimension_numbers<[1], [1], [0], [0], [0, 0, 1, 0], [], []>} : vector<8x16xf32>, vector<16x16xf32>, vector<8x16xf32> -> vector<8x16xf32>
    %196 = vector.extract_strided_slice %147 {offsets = [24, 0], sizes = [8, 16], strides = [1, 1]} : vector<96x16xf32> to vector<8x16xf32>
    %197 = vector.extract_strided_slice %147 {offsets = [56, 0], sizes = [8, 16], strides = [1, 1]} : vector<96x16xf32> to vector<8x16xf32>
    %198 = vector.extract_strided_slice %147 {offsets = [88, 0], sizes = [8, 16], strides = [1, 1]} : vector<96x16xf32> to vector<8x16xf32>
    %199 = tpu.transpose %196, [1, 0] : vector<8x16xf32> -> vector<16x8xf32>
    %cst_58 = arith.constant dense<0.000000e+00> : vector<16x16xf32>
    %200 = tpu.matmul %199, %197, %cst_58 {dimension_numbers = #tpu.dot_dimension_numbers<[1], [0], [0], [1], [0, 0, 1, 1], [], []>} : vector<16x8xf32>, vector<8x16xf32>, vector<16x16xf32> -> vector<16x16xf32>
    %201 = arith.addf %200, %1 : vector<16x16xf32>
    %cst_59 = arith.constant dense<0xFF800000> : vector<16xf32>
    %202 = vector.multi_reduction <maximumf>, %201, %cst_59 [1] : vector<16x16xf32> to vector<16xf32>
    %203 = vector.shape_cast %202 : vector<16xf32> to vector<16x1xf32>
    %204 = vector.broadcast %203 : vector<16x1xf32> to vector<16x16xf32>
    %205 = arith.subf %201, %204 : vector<16x16xf32>
    %206 = math.exp %205 : vector<16x16xf32>
    %cst_60 = arith.constant dense<0.000000e+00> : vector<16xf32>
    %207 = vector.multi_reduction <add>, %206, %cst_60 [1] : vector<16x16xf32> to vector<16xf32>
    %208 = vector.shape_cast %207 : vector<16xf32> to vector<16x1xf32>
    %209 = vector.broadcast %208 : vector<16x1xf32> to vector<16x16xf32>
    %210 = arith.divf %206, %209 : vector<16x16xf32>
    %cst_61 = arith.constant dense<0.000000e+00> : vector<8x16xf32>
    %211 = tpu.matmul %198, %210, %cst_61 {dimension_numbers = #tpu.dot_dimension_numbers<[1], [1], [0], [0], [0, 0, 1, 0], [], []>} : vector<8x16xf32>, vector<16x16xf32>, vector<8x16xf32> -> vector<8x16xf32>
    %212 = tpu.concatenate %163, %179, %195, %211 in 0 : vector<8x16xf32>, vector<8x16xf32>, vector<8x16xf32>, vector<8x16xf32> -> vector<32x16xf32>
    %213 = tpu.transpose %212, [1, 0] : vector<32x16xf32> -> vector<16x32xf32>
    %c1_62 = arith.constant 1 : index
    %c0_63 = arith.constant 0 : index
    %c0_64 = arith.constant 0 : index
    %214 = vector.load %arg3[%c1_62, %c0_63, %c0_64] : memref<2x128x64xf32, #tpu.memory_space<vmem>>, vector<1x128x64xf32>
    %215 = vector.shape_cast %214 : vector<1x128x64xf32> to vector<128x64xf32>
    %216 = vector.extract_strided_slice %215 {offsets = [0, 0], sizes = [32, 64], strides = [1, 1]} : vector<128x64xf32> to vector<32x64xf32>
    %217 = vector.extract_strided_slice %215 {offsets = [32, 0], sizes = [64, 32], strides = [1, 1]} : vector<128x64xf32> to vector<64x32xf32>
    %218 = vector.extract_strided_slice %215 {offsets = [96, 0], sizes = [32, 32], strides = [1, 1]} : vector<128x64xf32> to vector<32x32xf32>
    %c1_65 = arith.constant 1 : index
    %c0_66 = arith.constant 0 : index
    %c0_67 = arith.constant 0 : index
    %219 = vector.load %arg4[%c1_65, %c0_66, %c0_67] : memref<2x8x64xf32, #tpu.memory_space<vmem>>, vector<1x8x64xf32>
    %220 = vector.shape_cast %219 : vector<1x8x64xf32> to vector<8x64xf32>
    %221 = vector.extract_strided_slice %220 {offsets = [0, 0], sizes = [1, 32], strides = [1, 1]} : vector<8x64xf32> to vector<1x32xf32>
    %222 = vector.extract_strided_slice %220 {offsets = [1, 0], sizes = [1, 32], strides = [1, 1]} : vector<8x64xf32> to vector<1x32xf32>
    %223 = vector.extract_strided_slice %220 {offsets = [2, 0], sizes = [1, 32], strides = [1, 1]} : vector<8x64xf32> to vector<1x32xf32>
    %224 = vector.extract_strided_slice %220 {offsets = [3, 0], sizes = [1, 64], strides = [1, 1]} : vector<8x64xf32> to vector<1x64xf32>
    %225 = vector.extract_strided_slice %220 {offsets = [4, 0], sizes = [1, 32], strides = [1, 1]} : vector<8x64xf32> to vector<1x32xf32>
    %226 = vector.extract_strided_slice %220 {offsets = [5, 0], sizes = [1, 32], strides = [1, 1]} : vector<8x64xf32> to vector<1x32xf32>
    %227 = vector.extract_strided_slice %220 {offsets = [6, 0], sizes = [1, 32], strides = [1, 1]} : vector<8x64xf32> to vector<1x32xf32>
    %cst_68 = arith.constant dense<0.000000e+00> : vector<16x32xf32>
    %228 = tpu.matmul %213, %218, %cst_68 {dimension_numbers = #tpu.dot_dimension_numbers<[1], [0], [0], [1], [0, 0, 1, 1], [], []>} : vector<16x32xf32>, vector<32x32xf32>, vector<16x32xf32> -> vector<16x32xf32>
    %229 = vector.broadcast %221 : vector<1x32xf32> to vector<16x32xf32>
    %230 = arith.addf %228, %229 : vector<16x32xf32>
    %231 = arith.addf %143, %230 : vector<16x32xf32>
    %cst_69 = arith.constant dense<0.000000e+00> : vector<16xf32>
    %232 = vector.multi_reduction <add>, %231, %cst_69 [1] : vector<16x32xf32> to vector<16xf32>
    %233 = vector.shape_cast %232 : vector<16xf32> to vector<16x1xf32>
    %cst_70 = arith.constant 3.200000e+01 : f32
    %234 = vector.broadcast %cst_70 : f32 to vector<16x1xf32>
    %235 = arith.divf %233, %234 : vector<16x1xf32>
    %236 = vector.broadcast %235 : vector<16x1xf32> to vector<16x32xf32>
    %237 = arith.subf %231, %236 : vector<16x32xf32>
    %238 = arith.mulf %237, %237 : vector<16x32xf32>
    %cst_71 = arith.constant dense<0.000000e+00> : vector<16xf32>
    %239 = vector.multi_reduction <add>, %238, %cst_71 [1] : vector<16x32xf32> to vector<16xf32>
    %240 = vector.shape_cast %239 : vector<16xf32> to vector<16x1xf32>
    %cst_72 = arith.constant 3.200000e+01 : f32
    %241 = vector.broadcast %cst_72 : f32 to vector<16x1xf32>
    %242 = arith.divf %240, %241 : vector<16x1xf32>
    %243 = vector.broadcast %235 : vector<16x1xf32> to vector<16x32xf32>
    %244 = arith.subf %231, %243 : vector<16x32xf32>
    %cst_73 = arith.constant 9.99999974E-6 : f32
    %245 = vector.broadcast %cst_73 : f32 to vector<16x1xf32>
    %246 = arith.addf %242, %245 : vector<16x1xf32>
    %247 = math.rsqrt %246 : vector<16x1xf32>
    %248 = vector.broadcast %247 : vector<16x1xf32> to vector<16x32xf32>
    %249 = arith.mulf %244, %248 : vector<16x32xf32>
    %250 = vector.broadcast %222 : vector<1x32xf32> to vector<16x32xf32>
    %251 = arith.mulf %249, %250 : vector<16x32xf32>
    %252 = vector.broadcast %223 : vector<1x32xf32> to vector<16x32xf32>
    %253 = arith.addf %251, %252 : vector<16x32xf32>
    %cst_74 = arith.constant dense<0.000000e+00> : vector<16x64xf32>
    %254 = tpu.matmul %253, %216, %cst_74 {dimension_numbers = #tpu.dot_dimension_numbers<[1], [0], [0], [1], [0, 0, 1, 1], [], []>} : vector<16x32xf32>, vector<32x64xf32>, vector<16x64xf32> -> vector<16x64xf32>
    %255 = vector.broadcast %224 : vector<1x64xf32> to vector<16x64xf32>
    %256 = arith.addf %254, %255 : vector<16x64xf32>
    %cst_75 = arith.constant 0.000000e+00 : f32
    %257 = vector.broadcast %cst_75 : f32 to vector<16x64xf32>
    %258 = arith.maximumf %256, %257 : vector<16x64xf32>
    %cst_76 = arith.constant dense<0.000000e+00> : vector<16x32xf32>
    %259 = tpu.matmul %258, %217, %cst_76 {dimension_numbers = #tpu.dot_dimension_numbers<[1], [0], [0], [1], [0, 0, 1, 1], [], []>} : vector<16x64xf32>, vector<64x32xf32>, vector<16x32xf32> -> vector<16x32xf32>
    %260 = vector.broadcast %225 : vector<1x32xf32> to vector<16x32xf32>
    %261 = arith.addf %259, %260 : vector<16x32xf32>
    %262 = arith.addf %253, %261 : vector<16x32xf32>
    %cst_77 = arith.constant dense<0.000000e+00> : vector<16xf32>
    %263 = vector.multi_reduction <add>, %262, %cst_77 [1] : vector<16x32xf32> to vector<16xf32>
    %264 = vector.shape_cast %263 : vector<16xf32> to vector<16x1xf32>
    %cst_78 = arith.constant 3.200000e+01 : f32
    %265 = vector.broadcast %cst_78 : f32 to vector<16x1xf32>
    %266 = arith.divf %264, %265 : vector<16x1xf32>
    %267 = vector.broadcast %266 : vector<16x1xf32> to vector<16x32xf32>
    %268 = arith.subf %262, %267 : vector<16x32xf32>
    %269 = arith.mulf %268, %268 : vector<16x32xf32>
    %cst_79 = arith.constant dense<0.000000e+00> : vector<16xf32>
    %270 = vector.multi_reduction <add>, %269, %cst_79 [1] : vector<16x32xf32> to vector<16xf32>
    %271 = vector.shape_cast %270 : vector<16xf32> to vector<16x1xf32>
    %cst_80 = arith.constant 3.200000e+01 : f32
    %272 = vector.broadcast %cst_80 : f32 to vector<16x1xf32>
    %273 = arith.divf %271, %272 : vector<16x1xf32>
    %274 = vector.broadcast %266 : vector<16x1xf32> to vector<16x32xf32>
    %275 = arith.subf %262, %274 : vector<16x32xf32>
    %cst_81 = arith.constant 9.99999974E-6 : f32
    %276 = vector.broadcast %cst_81 : f32 to vector<16x1xf32>
    %277 = arith.addf %273, %276 : vector<16x1xf32>
    %278 = math.rsqrt %277 : vector<16x1xf32>
    %279 = vector.broadcast %278 : vector<16x1xf32> to vector<16x32xf32>
    %280 = arith.mulf %275, %279 : vector<16x32xf32>
    %281 = vector.broadcast %226 : vector<1x32xf32> to vector<16x32xf32>
    %282 = arith.mulf %280, %281 : vector<16x32xf32>
    %283 = vector.broadcast %227 : vector<1x32xf32> to vector<16x32xf32>
    %284 = arith.addf %282, %283 : vector<16x32xf32>
    %285 = tpu.concatenate %284, %2 in 1 : vector<16x32xf32>, vector<16x1xf32> -> vector<16x33xf32>
    %c0_82 = arith.constant 0 : index
    %c0_83 = arith.constant 0 : index
    %286 = vector.load %arg5[%c0_82, %c0_83] : memref<33x128xf32, #tpu.memory_space<vmem>>, vector<33x128xf32>
    %cst_84 = arith.constant dense<0.000000e+00> : vector<16x128xf32>
    %287 = tpu.matmul %285, %286, %cst_84 {dimension_numbers = #tpu.dot_dimension_numbers<[1], [0], [0], [1], [0, 0, 1, 1], [], []>} : vector<16x33xf32>, vector<33x128xf32>, vector<16x128xf32> -> vector<16x128xf32>
    %c0_85 = arith.constant 0 : index
    %c0_86 = arith.constant 0 : index
    %288 = vector.load %arg6[%c0_85, %c0_86] : memref<16x128xf32, #tpu.memory_space<vmem>>, vector<16x128xf32>
    tpu.vector_store %arg6[%c0_85, %c0_86], %287 {strides = array<i32>} : memref<16x128xf32, #tpu.memory_space<vmem>>, vector<16x128xf32>,
    return
  }
}

</mosaic_0001>

<llo_original>
// kernel: transformer_forward.1
$region0: #{transformer_forward.1}
  #allocation0 [shape = 'u32[]', space=smem, size = 0x4, offset = 0x4, fixed_abs, tag = 'smem constant byte address 0x4 - core index']
  #allocation1 [shape = 'u32[144,128]{1,0:T(1,128)}', space=vmem, size = 0x12000, scoped, tag = 'internal scratch']
  %s0 = inlined_call_operand.vmem [shape: f32[16,32], index: 0, kind: input, shape index: {}]
  %s1 = inlined_call_operand.vmem [shape: f32[16,16], index: 1, kind: input, shape index: {}]
  %s2 = inlined_call_operand.vmem [shape: f32[2,96,33], index: 2, kind: input, shape index: {}]
  %s3 = inlined_call_operand.vmem [shape: f32[2,128,64], index: 3, kind: input, shape index: {}]
  %s4 = inlined_call_operand.vmem [shape: f32[2,8,64], index: 4, kind: input, shape index: {}]
  %s5 = inlined_call_operand.vmem [shape: f32[33,128], index: 5, kind: input, shape index: {}]
  %s6 = inlined_call_operand.vmem [shape: f32[16,128], index: 6, kind: output, shape index: {}]
  %s7 = sld [smem:[#allocation0]]
  $region34: #{transformer_forward.1} parent=0
    _
  %s9 = ssub.s32 1, %s7
  %s10 = scalar_select 0, %s9, %s7
  // Predicated region
  $region2: #{transformer_forward.1} parent=0 // pred_check
    _
  $region3: #{transformer_forward.1} parent=0 // pred_check_branch
    %12 = sbr.rel (0) target = $region5
  $region4: #{transformer_forward.1} parent=0 // pred_region
    _
  $region5: #{transformer_forward.1} parent=0 // pred_fallthru
    _
  // Predicated region
  $region6: #{transformer_forward.1} parent=0 // pred_check
    _
  $region7: #{transformer_forward.1} parent=0 // pred_check_branch
    %14 = sbr.rel (0) target = $region9
  $region8: #{transformer_forward.1} parent=0 // pred_region
    _
  $region9: #{transformer_forward.1} parent=0 // pred_fallthru
    _
  // Predicated region
  $region10: #{transformer_forward.1} parent=0 // pred_check
    _
  $region11: #{transformer_forward.1} parent=0 // pred_check_branch
    %16 = sbr.rel (0) target = $region13
  $region12: #{transformer_forward.1} parent=0 // pred_region
    _
  $region13: #{transformer_forward.1} parent=0 // pred_fallthru
    _
  // Predicated region
  $region14: #{transformer_forward.1} parent=0 // pred_check
    _
  $region15: #{transformer_forward.1} parent=0 // pred_check_branch
    %18 = sbr.rel (0) target = $region17
  $region16: #{transformer_forward.1} parent=0 // pred_region
    _
  $region17: #{transformer_forward.1} parent=0 // pred_fallthru
    _
  // Predicated region
  $region18: #{transformer_forward.1} parent=0 // pred_check
    _
  $region19: #{transformer_forward.1} parent=0 // pred_check_branch
    %20 = sbr.rel (0) target = $region21
  $region20: #{transformer_forward.1} parent=0 // pred_region
    _
  $region21: #{transformer_forward.1} parent=0 // pred_fallthru
    _
  // Predicated region
  $region22: #{transformer_forward.1} parent=0 // pred_check
    _
  $region23: #{transformer_forward.1} parent=0 // pred_check_branch
    %22 = sbr.rel (0) target = $region25
  $region24: #{transformer_forward.1} parent=0 // pred_region
    _
  $region25: #{transformer_forward.1} parent=0 // pred_fallthru
    _
  %v23 = vld [vmem:[%s0] sm:$0xff]
  %v24 = vld [vmem:[%s0 + $0x8] sm:$0xff]
  %v25 = vld [vmem:[%s1] sm:$0xff]
  %v26 = vld [vmem:[%s1 + $0x8] sm:$0xff]
  %vm27 = vcmask 261120
  %v28 = vsel %vm27, %v23, 1.0
  %v29 = vsel %vm27, %v24, 1.0
  %v30 = vld [vmem:[%s2] sm:$0xff]
  %v31 = vld [vmem:[%s2 + $0x8] sm:$0xff]
  %v32 = vld [vmem:[%s2 + $0x10] sm:$0xff]
  %v33 = vld [vmem:[%s2 + $0x18] sm:$0xff]
  %v34 = vld [vmem:[%s2 + $0x20] sm:$0xff]
  %v35 = vld [vmem:[%s2 + $0x28] sm:$0xff]
  %v36 = vld [vmem:[%s2 + $0x30] sm:$0xff]
  %v37 = vld [vmem:[%s2 + $0x38] sm:$0xff]
  %v38 = vld [vmem:[%s2 + $0x40] sm:$0xff]
  %v39 = vld [vmem:[%s2 + $0x48] sm:$0xff]
  %v40 = vld [vmem:[%s2 + $0x50] sm:$0xff]
  %v41 = vld [vmem:[%s2 + $0x58] sm:$0xff]
  %vm42 = vcmask 269312
  %v44 = vsel %vm42, %v30, 0
  %v47 = vsel %vm42, %v31, 0
  %v50 = vsel %vm42, %v32, 0
  %v53 = vsel %vm42, %v33, 0
  %v56 = vsel %vm42, %v34, 0
  %v59 = vsel %vm42, %v35, 0
  %v62 = vsel %vm42, %v36, 0
  %v65 = vsel %vm42, %v37, 0
  %v68 = vsel %vm42, %v38, 0
  %v71 = vsel %vm42, %v39, 0
  %v74 = vsel %vm42, %v40, 0
  %v77 = vsel %vm42, %v41, 0
  %v80 = vsel %vm42, %v28, 0
  %v83 = vsel %vm42, %v29, 0
  %85 = vmatprep.subr.mxu0 0.0
  %86 = vmatpush1.xpose.msra.mxu0 %v80
  %87 = vmatprep.subr.mxu0 0.0
  %88 = vmatpush1.xpose.msra.mxu0 %v83
  %89 = vmatprep.subr.mxu0 0.0
  %90 = vmatpush1.xpose.msra.mxu0 0.0
  %91 = vmatprep.subr.mxu0 0.0
  %92 = vmatpush1.xpose.msra.mxu0 0.0
  %93 = vmatprep.subr.mxu0 0.0
  %94 = vmatpush1.xpose.msra.mxu0 0.0
  %95 = vmatprep.subr.mxu0 0.0
  %96 = vmatpush1.xpose.msra.mxu0 0.0
  %97 = vmatprep.subr.mxu0 0.0
  %98 = vmatpush1.xpose.msra.mxu0 0.0
  %99 = vmatprep.subr.mxu0 0.0
  %100 = vmatpush1.xpose.msra.mxu0 0.0
  %101 = vmatprep.subr.mxu0 0.0
  %102 = vmatpush1.xpose.msra.mxu0 0.0
  %103 = vmatprep.subr.mxu0 0.0
  %104 = vmatpush1.xpose.msra.mxu0 0.0
  %105 = vmatprep.subr.mxu0 0.0
  %106 = vmatpush1.xpose.msra.mxu0 0.0
  %107 = vmatprep.subr.mxu0 0.0
  %108 = vmatpush1.xpose.msra.mxu0 0.0
  %109 = vmatprep.subr.mxu0 0.0
  %110 = vmatpush1.xpose.msra.mxu0 0.0
  %111 = vmatprep.subr.mxu0 0.0
  %112 = vmatpush1.xpose.msra.mxu0 0.0
  %113 = vmatprep.subr.mxu0 0.0
  %114 = vmatpush1.xpose.msra.mxu0 0.0
  %115 = vmatprep.subr.mxu0 0.0
  %116 = vmatpush1.xpose.msra.mxu0 0.0
  %117 = vmatprep.subr.mxu0 0.0
  %118 = vmatpush1.xpose.msra.mxu0 0.0
  %119 = vmatprep.subr.mxu0 0.0
  %120 = vmatpush1.xpose.msra.mxu0 0.0
  %121 = vmatprep.subr.mxu0 0.0
  %122 = vmatpush1.xpose.msra.mxu0 0.0
  %123 = vmatprep.subr.mxu0 0.0
  %124 = vmatpush1.xpose.msra.mxu0 0.0
  %125 = vmatprep.subr.mxu0 0.0
  %126 = vmatpush1.xpose.msra.mxu0 0.0
  %127 = vmatprep.subr.mxu0 0.0
  %128 = vmatpush1.xpose.msra.mxu0 0.0
  %129 = vmatprep.subr.mxu0 0.0
  %130 = vmatpush1.xpose.msra.mxu0 0.0
  %131 = vmatprep.subr.mxu0 0.0
  %132 = vmatpush1.xpose.msra.mxu0 0.0
  %133 = vmatprep.subr.mxu0 0.0
  %134 = vmatpush1.xpose.msra.mxu0 0.0
  %135 = vmatprep.subr.mxu0 0.0
  %136 = vmatpush1.xpose.msra.mxu0 0.0
  %137 = vmatprep.subr.mxu0 0.0
  %138 = vmatpush1.xpose.msra.mxu0 0.0
  %139 = vmatprep.subr.mxu0 0.0
  %140 = vmatpush1.xpose.msra.mxu0 0.0
  %141 = vmatprep.subr.mxu0 0.0
  %142 = vmatpush1.xpose.msra.mxu0 0.0
  %143 = vmatprep.subr.mxu0 0.0
  %144 = vmatpush1.xpose.msra.mxu0 0.0
  %145 = vmatprep.subr.mxu0 0.0
  %146 = vmatpush1.xpose.msra.mxu0 0.0
  %147 = vmatprep.subr.mxu0 0.0
  %148 = vmatpush1.xpose.msra.mxu0 0.0
  %149 = vmatprep.mubr.f32.mxu0 0.0
  %150 = vmatmul.mubr.f32.gmra.mrb[0].mxu0 %v44
  %v151 = vpop.f32.mrb[0].mxu0
  %v152 = vadd.f32 0.0, %v151
  %v153 = vpop.f32.mrb[0].mxu0
  %154 = vmatprep.mubr.f32.mxu0 0.0
  %155 = vmatmul.mubr.f32.gmra.mrb[0].mxu0 %v47
  %v156 = vpop.f32.mrb[0].mxu0
  %v157 = vadd.f32 0.0, %v156
  %v158 = vpop.f32.mrb[0].mxu0
  %159 = vmatprep.mubr.f32.mxu0 0.0
  %160 = vmatmul.mubr.f32.gmra.mrb[0].mxu0 %v50
  %v161 = vpop.f32.mrb[0].mxu0
  %v162 = vadd.f32 0.0, %v161
  %v163 = vpop.f32.mrb[0].mxu0
  %164 = vmatprep.mubr.f32.mxu0 0.0
  %165 = vmatmul.mubr.f32.gmra.mrb[0].mxu0 %v53
  %v166 = vpop.f32.mrb[0].mxu0
  %v167 = vadd.f32 0.0, %v166
  %v168 = vpop.f32.mrb[0].mxu0
  %169 = vmatprep.mubr.f32.mxu0 0.0
  %170 = vmatmul.mubr.f32.gmra.mrb[0].mxu0 %v56
  %v171 = vpop.f32.mrb[0].mxu0
  %v172 = vadd.f32 0.0, %v171
  %v173 = vpop.f32.mrb[0].mxu0
  %174 = vmatprep.mubr.f32.mxu0 0.0
  %175 = vmatmul.mubr.f32.gmra.mrb[0].mxu0 %v59
  %v176 = vpop.f32.mrb[0].mxu0
  %v177 = vadd.f32 0.0, %v176
  %v178 = vpop.f32.mrb[0].mxu0
  %179 = vmatprep.mubr.f32.mxu0 0.0
  %180 = vmatmul.mubr.f32.gmra.mrb[0].mxu0 %v62
  %v181 = vpop.f32.mrb[0].mxu0
  %v182 = vadd.f32 0.0, %v181
  %v183 = vpop.f32.mrb[0].mxu0
  %184 = vmatprep.mubr.f32.mxu0 0.0
  %185 = vmatmul.mubr.f32.gmra.mrb[0].mxu0 %v65
  %v186 = vpop.f32.mrb[0].mxu0
  %v187 = vadd.f32 0.0, %v186
  %v188 = vpop.f32.mrb[0].mxu0
  %189 = vmatprep.mubr.f32.mxu0 0.0
  %190 = vmatmul.mubr.f32.gmra.mrb[0].mxu0 %v68
  %v191 = vpop.f32.mrb[0].mxu0
  %v192 = vadd.f32 0.0, %v191
  %v193 = vpop.f32.mrb[0].mxu0
  %194 = vmatprep.mubr.f32.mxu0 0.0
  %195 = vmatmul.mubr.f32.gmra.mrb[0].mxu0 %v71
  %v196 = vpop.f32.mrb[0].mxu0
  %v197 = vadd.f32 0.0, %v196
  %v198 = vpop.f32.mrb[0].mxu0
  %199 = vmatprep.mubr.f32.mxu0 0.0
  %200 = vmatmul.mubr.f32.gmra.mrb[0].mxu0 %v74
  %v201 = vpop.f32.mrb[0].mxu0
  %v202 = vadd.f32 0.0, %v201
  %v203 = vpop.f32.mrb[0].mxu0
  %204 = vmatprep.mubr.f32.mxu0 0.0
  %205 = vmatmul.mubr.f32.gmra.mrb[0].mxu0 %v77
  %v206 = vpop.f32.mrb[0].mxu0
  %v207 = vadd.f32 0.0, %v206
  %v208 = vpop.f32.mrb[0].mxu0
  %209 = vdwg.mxu0
  %210 = vxpose.xlu0.b32.start [1/16] %v152, 128
  %211 = vxpose.xlu0.b32.cont [2/16] 0.0, 128
  %212 = vxpose.xlu0.b32.cont [3/16] 0.0, 128
  %213 = vxpose.xlu0.b32.cont [4/16] 0.0, 128
  %214 = vxpose.xlu0.b32.cont [5/16] 0.0, 128
  %215 = vxpose.xlu0.b32.cont [6/16] 0.0, 128
  %216 = vxpose.xlu0.b32.cont [7/16] 0.0, 128
  %217 = vxpose.xlu0.b32.cont [8/16] 0.0, 128
  %218 = vxpose.xlu0.b32.cont [9/16] 0.0, 128
  %219 = vxpose.xlu0.b32.cont [10/16] 0.0, 128
  %220 = vxpose.xlu0.b32.cont [11/16] 0.0, 128
  %221 = vxpose.xlu0.b32.cont [12/16] 0.0, 128
  %222 = vxpose.xlu0.b32.cont [13/16] 0.0, 128
  %223 = vxpose.xlu0.b32.cont [14/16] 0.0, 128
  %224 = vxpose.xlu0.b32.cont [15/16] 0.0, 128
  %225 = vxpose.xlu0.b32.end [16/16] 0.0, 128
  %v226 = vpop.trf.xlu0
  %v227 = vpop.trf.xlu0
  %v228 = vpop.trf.xlu0
  %v229 = vpop.trf.xlu0
  %v230 = vpop.trf.xlu0
  %v231 = vpop.trf.xlu0
  %v232 = vpop.trf.xlu0
  %v233 = vpop.trf.xlu0
  %v234 = vpop.trf.xlu0
  %v235 = vpop.trf.xlu0
  %v236 = vpop.trf.xlu0
  %v237 = vpop.trf.xlu0
  %v238 = vpop.trf.xlu0
  %v239 = vpop.trf.xlu0
  %v240 = vpop.trf.xlu0
  %v241 = vpop.trf.xlu0
  %vm242 = vcmask 64512
  %v244 = vsel %vm242, %v226, 0
  %v247 = vsel %vm242, %v227, 0
  %249 = vmatprep.subr.mxu0 0.0
  %250 = vmatpush1.msra.mxu0 %v172
  %251 = vmatprep.subr.mxu0 0.0
  %252 = vmatpush1.msra.mxu0 0.0
  %253 = vmatprep.subr.mxu0 0.0
  %254 = vmatpush1.msra.mxu0 0.0
  %255 = vmatprep.subr.mxu0 0.0
  %256 = vmatpush1.msra.mxu0 0.0
  %257 = vmatprep.subr.mxu0 0.0
  %258 = vmatpush1.msra.mxu0 0.0
  %259 = vmatprep.subr.mxu0 0.0
  %260 = vmatpush1.msra.mxu0 0.0
  %261 = vmatprep.subr.mxu0 0.0
  %262 = vmatpush1.msra.mxu0 0.0
  %263 = vmatprep.subr.mxu0 0.0
  %264 = vmatpush1.msra.mxu0 0.0
  %265 = vmatprep.subr.mxu0 0.0
  %266 = vmatpush1.msra.mxu0 0.0
  %267 = vmatprep.subr.mxu0 0.0
  %268 = vmatpush1.msra.mxu0 0.0
  %269 = vmatprep.subr.mxu0 0.0
  %270 = vmatpush1.msra.mxu0 0.0
  %271 = vmatprep.subr.mxu0 0.0
  %272 = vmatpush1.msra.mxu0 0.0
  %273 = vmatprep.subr.mxu0 0.0
  %274 = vmatpush1.msra.mxu0 0.0
  %275 = vmatprep.subr.mxu0 0.0
  %276 = vmatpush1.msra.mxu0 0.0
  %277 = vmatprep.subr.mxu0 0.0
  %278 = vmatpush1.msra.mxu0 0.0
  %279 = vmatprep.subr.mxu0 0.0
  %280 = vmatpush1.msra.mxu0 0.0
  %281 = vmatprep.subr.mxu0 0.0
  %282 = vmatpush1.msra.mxu0 0.0
  %283 = vmatprep.subr.mxu0 0.0
  %284 = vmatpush1.msra.mxu0 0.0
  %285 = vmatprep.subr.mxu0 0.0
  %286 = vmatpush1.msra.mxu0 0.0
  %287 = vmatprep.subr.mxu0 0.0
  %288 = vmatpush1.msra.mxu0 0.0
  %289 = vmatprep.subr.mxu0 0.0
  %290 = vmatpush1.msra.mxu0 0.0
  %291 = vmatprep.subr.mxu0 0.0
  %292 = vmatpush1.msra.mxu0 0.0
  %293 = vmatprep.subr.mxu0 0.0
  %294 = vmatpush1.msra.mxu0 0.0
  %295 = vmatprep.subr.mxu0 0.0
  %296 = vmatpush1.msra.mxu0 0.0
  %297 = vmatprep.subr.mxu0 0.0
  %298 = vmatpush1.msra.mxu0 0.0
  %299 = vmatprep.subr.mxu0 0.0
  %300 = vmatpush1.msra.mxu0 0.0
  %301 = vmatprep.subr.mxu0 0.0
  %302 = vmatpush1.msra.mxu0 0.0
  %303 = vmatprep.subr.mxu0 0.0
  %304 = vmatpush1.msra.mxu0 0.0
  %305 = vmatprep.subr.mxu0 0.0
  %306 = vmatpush1.msra.mxu0 0.0
  %307 = vmatprep.subr.mxu0 0.0
  %308 = vmatpush1.msra.mxu0 0.0
  %309 = vmatprep.subr.mxu0 0.0
  %310 = vmatpush1.msra.mxu0 0.0
  %311 = vmatprep.subr.mxu0 0.0
  %312 = vmatpush1.msra.mxu0 0.0
  %313 = vmatprep.mubr.f32.mxu0 0.0
  %314 = vmatmul.mubr.f32.gmra.mrb[0].mxu0 %v244
  %v315 = vpop.f32.mrb[0].mxu0
  %v316 = vadd.f32 %v25, %v315
  %v317 = vpop.f32.mrb[0].mxu0
  %318 = vmatprep.mubr.f32.mxu0 0.0
  %319 = vmatmul.mubr.f32.gmra.mrb[0].mxu0 %v247
  %v320 = vpop.f32.mrb[0].mxu0
  %v321 = vadd.f32 %v26, %v320
  %v322 = vpop.f32.mrb[0].mxu0
  %323 = vdwg.mxu0
  %vm324 = vcmask 130048
  %v325 = vsel %vm324, %v316, -inf
  %326 = vmax.xlane.f32.xlu0 %v325
  %v327 = vpop.xlane.xlu0 %326
  %v328 = vsel %vm324, %v321, -inf
  %329 = vmax.xlane.f32.xlu0 %v328
  %v330 = vpop.xlane.xlu0 %329
  %v331 = vsub.f32 %v316, %v327
  %v332 = vsub.f32 %v321, %v330
  %v333 = vmul.f32 %v331, 1.442695
  %v334 = vpow.pop %v333
  %v335 = vmul.f32 %v332, 1.442695
  %v336 = vpow.pop %v335
  %v337 = vsel %vm324, %v334, 0.0
  %338 = vadd.xlane.f32.xlu0 %v337
  %v339 = vpop.xlane.xlu0 %338
  %v340 = vsel %vm324, %v336, 0.0
  %341 = vadd.xlane.f32.xlu0 %v340
  %v342 = vpop.xlane.xlu0 %341
  %v343 = vrcp.pop %v339
  %v344 = vmul.f32 %v334, %v343
  %v345 = vrcp.pop %v342
  %v346 = vmul.f32 %v336, %v345
  %v348 = vsel %vm324, %v192, 0
  %v351 = vsel %vm324, %v344, 0
  %v354 = vsel %vm324, %v346, 0
  %356 = vmatprep.subr.mxu0 0.0
  %357 = vmatpush1.xpose.msra.mxu0 %v351
  %358 = vmatprep.subr.mxu0 0.0
  %359 = vmatpush1.xpose.msra.mxu0 %v354
  %360 = vmatprep.subr.mxu0 0.0
  %361 = vmatpush1.xpose.msra.mxu0 0.0
  %362 = vmatprep.subr.mxu0 0.0
  %363 = vmatpush1.xpose.msra.mxu0 0.0
  %364 = vmatprep.subr.mxu0 0.0
  %365 = vmatpush1.xpose.msra.mxu0 0.0
  %366 = vmatprep.subr.mxu0 0.0
  %367 = vmatpush1.xpose.msra.mxu0 0.0
  %368 = vmatprep.subr.mxu0 0.0
  %369 = vmatpush1.xpose.msra.mxu0 0.0
  %370 = vmatprep.subr.mxu0 0.0
  %371 = vmatpush1.xpose.msra.mxu0 0.0
  %372 = vmatprep.subr.mxu0 0.0
  %373 = vmatpush1.xpose.msra.mxu0 0.0
  %374 = vmatprep.subr.mxu0 0.0
  %375 = vmatpush1.xpose.msra.mxu0 0.0
  %376 = vmatprep.subr.mxu0 0.0
  %377 = vmatpush1.xpose.msra.mxu0 0.0
  %378 = vmatprep.subr.mxu0 0.0
  %379 = vmatpush1.xpose.msra.mxu0 0.0
  %380 = vmatprep.subr.mxu0 0.0
  %381 = vmatpush1.xpose.msra.mxu0 0.0
  %382 = vmatprep.subr.mxu0 0.0
  %383 = vmatpush1.xpose.msra.mxu0 0.0
  %384 = vmatprep.subr.mxu0 0.0
  %385 = vmatpush1.xpose.msra.mxu0 0.0
  %386 = vmatprep.subr.mxu0 0.0
  %387 = vmatpush1.xpose.msra.mxu0 0.0
  %388 = vmatprep.subr.mxu0 0.0
  %389 = vmatpush1.xpose.msra.mxu0 0.0
  %390 = vmatprep.subr.mxu0 0.0
  %391 = vmatpush1.xpose.msra.mxu0 0.0
  %392 = vmatprep.subr.mxu0 0.0
  %393 = vmatpush1.xpose.msra.mxu0 0.0
  %394 = vmatprep.subr.mxu0 0.0
  %395 = vmatpush1.xpose.msra.mxu0 0.0
  %396 = vmatprep.subr.mxu0 0.0
  %397 = vmatpush1.xpose.msra.mxu0 0.0
  %398 = vmatprep.subr.mxu0 0.0
  %399 = vmatpush1.xpose.msra.mxu0 0.0
  %400 = vmatprep.subr.mxu0 0.0
  %401 = vmatpush1.xpose.msra.mxu0 0.0
  %402 = vmatprep.subr.mxu0 0.0
  %403 = vmatpush1.xpose.msra.mxu0 0.0
  %404 = vmatprep.subr.mxu0 0.0
  %405 = vmatpush1.xpose.msra.mxu0 0.0
  %406 = vmatprep.subr.mxu0 0.0
  %407 = vmatpush1.xpose.msra.mxu0 0.0
  %408 = vmatprep.subr.mxu0 0.0
  %409 = vmatpush1.xpose.msra.mxu0 0.0
  %410 = vmatprep.subr.mxu0 0.0
  %411 = vmatpush1.xpose.msra.mxu0 0.0
  %412 = vmatprep.subr.mxu0 0.0
  %413 = vmatpush1.xpose.msra.mxu0 0.0
  %414 = vmatprep.subr.mxu0 0.0
  %415 = vmatpush1.xpose.msra.mxu0 0.0
  %416 = vmatprep.subr.mxu0 0.0
  %417 = vmatpush1.xpose.msra.mxu0 0.0
  %418 = vmatprep.subr.mxu0 0.0
  %419 = vmatpush1.xpose.msra.mxu0 0.0
  %420 = vmatprep.mubr.f32.mxu0 0.0
  %421 = vmatmul.mubr.f32.gmra.mrb[0].mxu0 %v348
  %v422 = vpop.f32.mrb[0].mxu0
  %v423 = vadd.f32 0.0, %v422
  %v424 = vpop.f32.mrb[0].mxu0
  %425 = vdwg.mxu0
  %426 = vxpose.xlu0.b32.start [1/16] %v157, 128
  %427 = vxpose.xlu0.b32.cont [2/16] 0.0, 128
  %428 = vxpose.xlu0.b32.cont [3/16] 0.0, 128
  %429 = vxpose.xlu0.b32.cont [4/16] 0.0, 128
  %430 = vxpose.xlu0.b32.cont [5/16] 0.0, 128
  %431 = vxpose.xlu0.b32.cont [6/16] 0.0, 128
  %432 = vxpose.xlu0.b32.cont [7/16] 0.0, 128
  %433 = vxpose.xlu0.b32.cont [8/16] 0.0, 128
  %434 = vxpose.xlu0.b32.cont [9/16] 0.0, 128
  %435 = vxpose.xlu0.b32.cont [10/16] 0.0, 128
  %436 = vxpose.xlu0.b32.cont [11/16] 0.0, 128
  %437 = vxpose.xlu0.b32.cont [12/16] 0.0, 128
  %438 = vxpose.xlu0.b32.cont [13/16] 0.0, 128
  %439 = vxpose.xlu0.b32.cont [14/16] 0.0, 128
  %440 = vxpose.xlu0.b32.cont [15/16] 0.0, 128
  %441 = vxpose.xlu0.b32.end [16/16] 0.0, 128
  %v442 = vpop.trf.xlu0
  %v443 = vpop.trf.xlu0
  %v444 = vpop.trf.xlu0
  %v445 = vpop.trf.xlu0
  %v446 = vpop.trf.xlu0
  %v447 = vpop.trf.xlu0
  %v448 = vpop.trf.xlu0
  %v449 = vpop.trf.xlu0
  %v450 = vpop.trf.xlu0
  %v451 = vpop.trf.xlu0
  %v452 = vpop.trf.xlu0
  %v453 = vpop.trf.xlu0
  %v454 = vpop.trf.xlu0
  %v455 = vpop.trf.xlu0
  %v456 = vpop.trf.xlu0
  %v457 = vpop.trf.xlu0
  %v459 = vsel %vm242, %v442, 0
  %v462 = vsel %vm242, %v443, 0
  %464 = vmatprep.subr.mxu0 0.0
  %465 = vmatpush1.msra.mxu0 %v177
  %466 = vmatprep.subr.mxu0 0.0
  %467 = vmatpush1.msra.mxu0 0.0
  %468 = vmatprep.subr.mxu0 0.0
  %469 = vmatpush1.msra.mxu0 0.0
  %470 = vmatprep.subr.mxu0 0.0
  %471 = vmatpush1.msra.mxu0 0.0
  %472 = vmatprep.subr.mxu0 0.0
  %473 = vmatpush1.msra.mxu0 0.0
  %474 = vmatprep.subr.mxu0 0.0
  %475 = vmatpush1.msra.mxu0 0.0
  %476 = vmatprep.subr.mxu0 0.0
  %477 = vmatpush1.msra.mxu0 0.0
  %478 = vmatprep.subr.mxu0 0.0
  %479 = vmatpush1.msra.mxu0 0.0
  %480 = vmatprep.subr.mxu0 0.0
  %481 = vmatpush1.msra.mxu0 0.0
  %482 = vmatprep.subr.mxu0 0.0
  %483 = vmatpush1.msra.mxu0 0.0
  %484 = vmatprep.subr.mxu0 0.0
  %485 = vmatpush1.msra.mxu0 0.0
  %486 = vmatprep.subr.mxu0 0.0
  %487 = vmatpush1.msra.mxu0 0.0
  %488 = vmatprep.subr.mxu0 0.0
  %489 = vmatpush1.msra.mxu0 0.0
  %490 = vmatprep.subr.mxu0 0.0
  %491 = vmatpush1.msra.mxu0 0.0
  %492 = vmatprep.subr.mxu0 0.0
  %493 = vmatpush1.msra.mxu0 0.0
  %494 = vmatprep.subr.mxu0 0.0
  %495 = vmatpush1.msra.mxu0 0.0
  %496 = vmatprep.subr.mxu0 0.0
  %497 = vmatpush1.msra.mxu0 0.0
  %498 = vmatprep.subr.mxu0 0.0
  %499 = vmatpush1.msra.mxu0 0.0
  %500 = vmatprep.subr.mxu0 0.0
  %501 = vmatpush1.msra.mxu0 0.0
  %502 = vmatprep.subr.mxu0 0.0
  %503 = vmatpush1.msra.mxu0 0.0
  %504 = vmatprep.subr.mxu0 0.0
  %505 = vmatpush1.msra.mxu0 0.0
  %506 = vmatprep.subr.mxu0 0.0
  %507 = vmatpush1.msra.mxu0 0.0
  %508 = vmatprep.subr.mxu0 0.0
  %509 = vmatpush1.msra.mxu0 0.0
  %510 = vmatprep.subr.mxu0 0.0
  %511 = vmatpush1.msra.mxu0 0.0
  %512 = vmatprep.subr.mxu0 0.0
  %513 = vmatpush1.msra.mxu0 0.0
  %514 = vmatprep.subr.mxu0 0.0
  %515 = vmatpush1.msra.mxu0 0.0
  %516 = vmatprep.subr.mxu0 0.0
  %517 = vmatpush1.msra.mxu0 0.0
  %518 = vmatprep.subr.mxu0 0.0
  %519 = vmatpush1.msra.mxu0 0.0
  %520 = vmatprep.subr.mxu0 0.0
  %521 = vmatpush1.msra.mxu0 0.0
  %522 = vmatprep.subr.mxu0 0.0
  %523 = vmatpush1.msra.mxu0 0.0
  %524 = vmatprep.subr.mxu0 0.0
  %525 = vmatpush1.msra.mxu0 0.0
  %526 = vmatprep.subr.mxu0 0.0
  %527 = vmatpush1.msra.mxu0 0.0
  %528 = vmatprep.mubr.f32.mxu0 0.0
  %529 = vmatmul.mubr.f32.gmra.mrb[0].mxu0 %v459
  %v530 = vpop.f32.mrb[0].mxu0
  %v531 = vadd.f32 %v25, %v530
  %v532 = vpop.f32.mrb[0].mxu0
  %533 = vmatprep.mubr.f32.mxu0 0.0
  %534 = vmatmul.mubr.f32.gmra.mrb[0].mxu0 %v462
  %v535 = vpop.f32.mrb[0].mxu0
  %v536 = vadd.f32 %v26, %v535
  %v537 = vpop.f32.mrb[0].mxu0
  %538 = vdwg.mxu0
  %v539 = vsel %vm324, %v531, -inf
  %540 = vmax.xlane.f32.xlu0 %v539
  %v541 = vpop.xlane.xlu0 %540
  %v542 = vsel %vm324, %v536, -inf
  %543 = vmax.xlane.f32.xlu0 %v542
  %v544 = vpop.xlane.xlu0 %543
  %v545 = vsub.f32 %v531, %v541
  %v546 = vsub.f32 %v536, %v544
  %v547 = vmul.f32 %v545, 1.442695
  %v548 = vpow.pop %v547
  %v549 = vmul.f32 %v546, 1.442695
  %v550 = vpow.pop %v549
  %v551 = vsel %vm324, %v548, 0.0
  %552 = vadd.xlane.f32.xlu0 %v551
  %v553 = vpop.xlane.xlu0 %552
  %v554 = vsel %vm324, %v550, 0.0
  %555 = vadd.xlane.f32.xlu0 %v554
  %v556 = vpop.xlane.xlu0 %555
  %v557 = vrcp.pop %v553
  %v558 = vmul.f32 %v548, %v557
  %v559 = vrcp.pop %v556
  %v560 = vmul.f32 %v550, %v559
  %v562 = vsel %vm324, %v197, 0
  %v565 = vsel %vm324, %v558, 0
  %v568 = vsel %vm324, %v560, 0
  %570 = vmatprep.subr.mxu0 0.0
  %571 = vmatpush1.xpose.msra.mxu0 %v565
  %572 = vmatprep.subr.mxu0 0.0
  %573 = vmatpush1.xpose.msra.mxu0 %v568
  %574 = vmatprep.subr.mxu0 0.0
  %575 = vmatpush1.xpose.msra.mxu0 0.0
  %576 = vmatprep.subr.mxu0 0.0
  %577 = vmatpush1.xpose.msra.mxu0 0.0
  %578 = vmatprep.subr.mxu0 0.0
  %579 = vmatpush1.xpose.msra.mxu0 0.0
  %580 = vmatprep.subr.mxu0 0.0
  %581 = vmatpush1.xpose.msra.mxu0 0.0
  %582 = vmatprep.subr.mxu0 0.0
  %583 = vmatpush1.xpose.msra.mxu0 0.0
  %584 = vmatprep.subr.mxu0 0.0
  %585 = vmatpush1.xpose.msra.mxu0 0.0
  %586 = vmatprep.subr.mxu0 0.0
  %587 = vmatpush1.xpose.msra.mxu0 0.0
  %588 = vmatprep.subr.mxu0 0.0
  %589 = vmatpush1.xpose.msra.mxu0 0.0
  %590 = vmatprep.subr.mxu0 0.0
  %591 = vmatpush1.xpose.msra.mxu0 0.0
  %592 = vmatprep.subr.mxu0 0.0
  %593 = vmatpush1.xpose.msra.mxu0 0.0
  %594 = vmatprep.subr.mxu0 0.0
  %595 = vmatpush1.xpose.msra.mxu0 0.0
  %596 = vmatprep.subr.mxu0 0.0
  %597 = vmatpush1.xpose.msra.mxu0 0.0
  %598 = vmatprep.subr.mxu0 0.0
  %599 = vmatpush1.xpose.msra.mxu0 0.0
  %600 = vmatprep.subr.mxu0 0.0
  %601 = vmatpush1.xpose.msra.mxu0 0.0
  %602 = vmatprep.subr.mxu0 0.0
  %603 = vmatpush1.xpose.msra.mxu0 0.0
  %604 = vmatprep.subr.mxu0 0.0
  %605 = vmatpush1.xpose.msra.mxu0 0.0
  %606 = vmatprep.subr.mxu0 0.0
  %607 = vmatpush1.xpose.msra.mxu0 0.0
  %608 = vmatprep.subr.mxu0 0.0
  %609 = vmatpush1.xpose.msra.mxu0 0.0
  %610 = vmatprep.subr.mxu0 0.0
  %611 = vmatpush1.xpose.msra.mxu0 0.0
  %612 = vmatprep.subr.mxu0 0.0
  %613 = vmatpush1.xpose.msra.mxu0 0.0
  %614 = vmatprep.subr.mxu0 0.0
  %615 = vmatpush1.xpose.msra.mxu0 0.0
  %616 = vmatprep.subr.mxu0 0.0
  %617 = vmatpush1.xpose.msra.mxu0 0.0
  %618 = vmatprep.subr.mxu0 0.0
  %619 = vmatpush1.xpose.msra.mxu0 0.0
  %620 = vmatprep.subr.mxu0 0.0
  %621 = vmatpush1.xpose.msra.mxu0 0.0
  %622 = vmatprep.subr.mxu0 0.0
  %623 = vmatpush1.xpose.msra.mxu0 0.0
  %624 = vmatprep.subr.mxu0 0.0
  %625 = vmatpush1.xpose.msra.mxu0 0.0
  %626 = vmatprep.subr.mxu0 0.0
  %627 = vmatpush1.xpose.msra.mxu0 0.0
  %628 = vmatprep.subr.mxu0 0.0
  %629 = vmatpush1.xpose.msra.mxu0 0.0
  %630 = vmatprep.subr.mxu0 0.0
  %631 = vmatpush1.xpose.msra.mxu0 0.0
  %632 = vmatprep.subr.mxu0 0.0
  %633 = vmatpush1.xpose.msra.mxu0 0.0
  %634 = vmatprep.mubr.f32.mxu0 0.0
  %635 = vmatmul.mubr.f32.gmra.mrb[0].mxu0 %v562
  %v636 = vpop.f32.mrb[0].mxu0
  %v637 = vadd.f32 0.0, %v636
  %v638 = vpop.f32.mrb[0].mxu0
  %639 = vdwg.mxu0
  %640 = vxpose.xlu0.b32.start [1/16] %v162, 128
  %641 = vxpose.xlu0.b32.cont [2/16] 0.0, 128
  %642 = vxpose.xlu0.b32.cont [3/16] 0.0, 128
  %643 = vxpose.xlu0.b32.cont [4/16] 0.0, 128
  %644 = vxpose.xlu0.b32.cont [5/16] 0.0, 128
  %645 = vxpose.xlu0.b32.cont [6/16] 0.0, 128
  %646 = vxpose.xlu0.b32.cont [7/16] 0.0, 128
  %647 = vxpose.xlu0.b32.cont [8/16] 0.0, 128
  %648 = vxpose.xlu0.b32.cont [9/16] 0.0, 128
  %649 = vxpose.xlu0.b32.cont [10/16] 0.0, 128
  %650 = vxpose.xlu0.b32.cont [11/16] 0.0, 128
  %651 = vxpose.xlu0.b32.cont [12/16] 0.0, 128
  %652 = vxpose.xlu0.b32.cont [13/16] 0.0, 128
  %653 = vxpose.xlu0.b32.cont [14/16] 0.0, 128
  %654 = vxpose.xlu0.b32.cont [15/16] 0.0, 128
  %655 = vxpose.xlu0.b32.end [16/16] 0.0, 128
  %v656 = vpop.trf.xlu0
  %v657 = vpop.trf.xlu0
  %v658 = vpop.trf.xlu0
  %v659 = vpop.trf.xlu0
  %v660 = vpop.trf.xlu0
  %v661 = vpop.trf.xlu0
  %v662 = vpop.trf.xlu0
  %v663 = vpop.trf.xlu0
  %v664 = vpop.trf.xlu0
  %v665 = vpop.trf.xlu0
  %v666 = vpop.trf.xlu0
  %v667 = vpop.trf.xlu0
  %v668 = vpop.trf.xlu0
  %v669 = vpop.trf.xlu0
  %v670 = vpop.trf.xlu0
  %v671 = vpop.trf.xlu0
  %v673 = vsel %vm242, %v656, 0
  %v676 = vsel %vm242, %v657, 0
  %678 = vmatprep.subr.mxu0 0.0
  %679 = vmatpush1.msra.mxu0 %v182
  %680 = vmatprep.subr.mxu0 0.0
  %681 = vmatpush1.msra.mxu0 0.0
  %682 = vmatprep.subr.mxu0 0.0
  %683 = vmatpush1.msra.mxu0 0.0
  %684 = vmatprep.subr.mxu0 0.0
  %685 = vmatpush1.msra.mxu0 0.0
  %686 = vmatprep.subr.mxu0 0.0
  %687 = vmatpush1.msra.mxu0 0.0
  %688 = vmatprep.subr.mxu0 0.0
  %689 = vmatpush1.msra.mxu0 0.0
  %690 = vmatprep.subr.mxu0 0.0
  %691 = vmatpush1.msra.mxu0 0.0
  %692 = vmatprep.subr.mxu0 0.0
  %693 = vmatpush1.msra.mxu0 0.0
  %694 = vmatprep.subr.mxu0 0.0
  %695 = vmatpush1.msra.mxu0 0.0
  %696 = vmatprep.subr.mxu0 0.0
  %697 = vmatpush1.msra.mxu0 0.0
  %698 = vmatprep.subr.mxu0 0.0
  %699 = vmatpush1.msra.mxu0 0.0
  %700 = vmatprep.subr.mxu0 0.0
  %701 = vmatpush1.msra.mxu0 0.0
  %702 = vmatprep.subr.mxu0 0.0
  %703 = vmatpush1.msra.mxu0 0.0
  %704 = vmatprep.subr.mxu0 0.0
  %705 = vmatpush1.msra.mxu0 0.0
  %706 = vmatprep.subr.mxu0 0.0
  %707 = vmatpush1.msra.mxu0 0.0
  %708 = vmatprep.subr.mxu0 0.0
  %709 = vmatpush1.msra.mxu0 0.0
  %710 = vmatprep.subr.mxu0 0.0
  %711 = vmatpush1.msra.mxu0 0.0
  %712 = vmatprep.subr.mxu0 0.0
  %713 = vmatpush1.msra.mxu0 0.0
  %714 = vmatprep.subr.mxu0 0.0
  %715 = vmatpush1.msra.mxu0 0.0
  %716 = vmatprep.subr.mxu0 0.0
  %717 = vmatpush1.msra.mxu0 0.0
  %718 = vmatprep.subr.mxu0 0.0
  %719 = vmatpush1.msra.mxu0 0.0
  %720 = vmatprep.subr.mxu0 0.0
  %721 = vmatpush1.msra.mxu0 0.0
  %722 = vmatprep.subr.mxu0 0.0
  %723 = vmatpush1.msra.mxu0 0.0
  %724 = vmatprep.subr.mxu0 0.0
  %725 = vmatpush1.msra.mxu0 0.0
  %726 = vmatprep.subr.mxu0 0.0
  %727 = vmatpush1.msra.mxu0 0.0
  %728 = vmatprep.subr.mxu0 0.0
  %729 = vmatpush1.msra.mxu0 0.0
  %730 = vmatprep.subr.mxu0 0.0
  %731 = vmatpush1.msra.mxu0 0.0
  %732 = vmatprep.subr.mxu0 0.0
  %733 = vmatpush1.msra.mxu0 0.0
  %734 = vmatprep.subr.mxu0 0.0
  %735 = vmatpush1.msra.mxu0 0.0
  %736 = vmatprep.subr.mxu0 0.0
  %737 = vmatpush1.msra.mxu0 0.0
  %738 = vmatprep.subr.mxu0 0.0
  %739 = vmatpush1.msra.mxu0 0.0
  %740 = vmatprep.subr.mxu0 0.0
  %741 = vmatpush1.msra.mxu0 0.0
  %742 = vmatprep.mubr.f32.mxu0 0.0
  %743 = vmatmul.mubr.f32.gmra.mrb[0].mxu0 %v673
  %v744 = vpop.f32.mrb[0].mxu0
  %v745 = vadd.f32 %v25, %v744
  %v746 = vpop.f32.mrb[0].mxu0
  %747 = vmatprep.mubr.f32.mxu0 0.0
  %748 = vmatmul.mubr.f32.gmra.mrb[0].mxu0 %v676
  %v749 = vpop.f32.mrb[0].mxu0
  %v750 = vadd.f32 %v26, %v749
  %v751 = vpop.f32.mrb[0].mxu0
  %752 = vdwg.mxu0
  %v753 = vsel %vm324, %v745, -inf
  %754 = vmax.xlane.f32.xlu0 %v753
  %v755 = vpop.xlane.xlu0 %754
  %v756 = vsel %vm324, %v750, -inf
  %757 = vmax.xlane.f32.xlu0 %v756
  %v758 = vpop.xlane.xlu0 %757
  %v759 = vsub.f32 %v745, %v755
  %v760 = vsub.f32 %v750, %v758
  %v761 = vmul.f32 %v759, 1.442695
  %v762 = vpow.pop %v761
  %v763 = vmul.f32 %v760, 1.442695
  %v764 = vpow.pop %v763
  %v765 = vsel %vm324, %v762, 0.0
  %766 = vadd.xlane.f32.xlu0 %v765
  %v767 = vpop.xlane.xlu0 %766
  %v768 = vsel %vm324, %v764, 0.0
  %769 = vadd.xlane.f32.xlu0 %v768
  %v770 = vpop.xlane.xlu0 %769
  %v771 = vrcp.pop %v767
  %v772 = vmul.f32 %v762, %v771
  %v773 = vrcp.pop %v770
  %v774 = vmul.f32 %v764, %v773
  %v776 = vsel %vm324, %v202, 0
  %v779 = vsel %vm324, %v772, 0
  %v782 = vsel %vm324, %v774, 0
  %784 = vmatprep.subr.mxu0 0.0
  %785 = vmatpush1.xpose.msra.mxu0 %v779
  %786 = vmatprep.subr.mxu0 0.0
  %787 = vmatpush1.xpose.msra.mxu0 %v782
  %788 = vmatprep.subr.mxu0 0.0
  %789 = vmatpush1.xpose.msra.mxu0 0.0
  %790 = vmatprep.subr.mxu0 0.0
  %791 = vmatpush1.xpose.msra.mxu0 0.0
  %792 = vmatprep.subr.mxu0 0.0
  %793 = vmatpush1.xpose.msra.mxu0 0.0
  %794 = vmatprep.subr.mxu0 0.0
  %795 = vmatpush1.xpose.msra.mxu0 0.0
  %796 = vmatprep.subr.mxu0 0.0
  %797 = vmatpush1.xpose.msra.mxu0 0.0
  %798 = vmatprep.subr.mxu0 0.0
  %799 = vmatpush1.xpose.msra.mxu0 0.0
  %800 = vmatprep.subr.mxu0 0.0
  %801 = vmatpush1.xpose.msra.mxu0 0.0
  %802 = vmatprep.subr.mxu0 0.0
  %803 = vmatpush1.xpose.msra.mxu0 0.0
  %804 = vmatprep.subr.mxu0 0.0
  %805 = vmatpush1.xpose.msra.mxu0 0.0
  %806 = vmatprep.subr.mxu0 0.0
  %807 = vmatpush1.xpose.msra.mxu0 0.0
  %808 = vmatprep.subr.mxu0 0.0
  %809 = vmatpush1.xpose.msra.mxu0 0.0
  %810 = vmatprep.subr.mxu0 0.0
  %811 = vmatpush1.xpose.msra.mxu0 0.0
  %812 = vmatprep.subr.mxu0 0.0
  %813 = vmatpush1.xpose.msra.mxu0 0.0
  %814 = vmatprep.subr.mxu0 0.0
  %815 = vmatpush1.xpose.msra.mxu0 0.0
  %816 = vmatprep.subr.mxu0 0.0
  %817 = vmatpush1.xpose.msra.mxu0 0.0
  %818 = vmatprep.subr.mxu0 0.0
  %819 = vmatpush1.xpose.msra.mxu0 0.0
  %820 = vmatprep.subr.mxu0 0.0
  %821 = vmatpush1.xpose.msra.mxu0 0.0
  %822 = vmatprep.subr.mxu0 0.0
  %823 = vmatpush1.xpose.msra.mxu0 0.0
  %824 = vmatprep.subr.mxu0 0.0
  %825 = vmatpush1.xpose.msra.mxu0 0.0
  %826 = vmatprep.subr.mxu0 0.0
  %827 = vmatpush1.xpose.msra.mxu0 0.0
  %828 = vmatprep.subr.mxu0 0.0
  %829 = vmatpush1.xpose.msra.mxu0 0.0
  %830 = vmatprep.subr.mxu0 0.0
  %831 = vmatpush1.xpose.msra.mxu0 0.0
  %832 = vmatprep.subr.mxu0 0.0
  %833 = vmatpush1.xpose.msra.mxu0 0.0
  %834 = vmatprep.subr.mxu0 0.0
  %835 = vmatpush1.xpose.msra.mxu0 0.0
  %836 = vmatprep.subr.mxu0 0.0
  %837 = vmatpush1.xpose.msra.mxu0 0.0
  %838 = vmatprep.subr.mxu0 0.0
  %839 = vmatpush1.xpose.msra.mxu0 0.0
  %840 = vmatprep.subr.mxu0 0.0
  %841 = vmatpush1.xpose.msra.mxu0 0.0
  %842 = vmatprep.subr.mxu0 0.0
  %843 = vmatpush1.xpose.msra.mxu0 0.0
  %844 = vmatprep.subr.mxu0 0.0
  %845 = vmatpush1.xpose.msra.mxu0 0.0
  %846 = vmatprep.subr.mxu0 0.0
  %847 = vmatpush1.xpose.msra.mxu0 0.0
  %848 = vmatprep.mubr.f32.mxu0 0.0
  %849 = vmatmul.mubr.f32.gmra.mrb[0].mxu0 %v776
  %v850 = vpop.f32.mrb[0].mxu0
  %v851 = vadd.f32 0.0, %v850
  %v852 = vpop.f32.mrb[0].mxu0
  %853 = vdwg.mxu0
  %854 = vxpose.xlu0.b32.start [1/16] %v167, 128
  %855 = vxpose.xlu0.b32.cont [2/16] 0.0, 128
  %856 = vxpose.xlu0.b32.cont [3/16] 0.0, 128
  %857 = vxpose.xlu0.b32.cont [4/16] 0.0, 128
  %858 = vxpose.xlu0.b32.cont [5/16] 0.0, 128
  %859 = vxpose.xlu0.b32.cont [6/16] 0.0, 128
  %860 = vxpose.xlu0.b32.cont [7/16] 0.0, 128
  %861 = vxpose.xlu0.b32.cont [8/16] 0.0, 128
  %862 = vxpose.xlu0.b32.cont [9/16] 0.0, 128
  %863 = vxpose.xlu0.b32.cont [10/16] 0.0, 128
  %864 = vxpose.xlu0.b32.cont [11/16] 0.0, 128
  %865 = vxpose.xlu0.b32.cont [12/16] 0.0, 128
  %866 = vxpose.xlu0.b32.cont [13/16] 0.0, 128
  %867 = vxpose.xlu0.b32.cont [14/16] 0.0, 128
  %868 = vxpose.xlu0.b32.cont [15/16] 0.0, 128
  %869 = vxpose.xlu0.b32.end [16/16] 0.0, 128
  %v870 = vpop.trf.xlu0
  %v871 = vpop.trf.xlu0
  %v872 = vpop.trf.xlu0
  %v873 = vpop.trf.xlu0
  %v874 = vpop.trf.xlu0
  %v875 = vpop.trf.xlu0
  %v876 = vpop.trf.xlu0
  %v877 = vpop.trf.xlu0
  %v878 = vpop.trf.xlu0
  %v879 = vpop.trf.xlu0
  %v880 = vpop.trf.xlu0
  %v881 = vpop.trf.xlu0
  %v882 = vpop.trf.xlu0
  %v883 = vpop.trf.xlu0
  %v884 = vpop.trf.xlu0
  %v885 = vpop.trf.xlu0
  %v887 = vsel %vm242, %v870, 0
  %v890 = vsel %vm242, %v871, 0
  %892 = vmatprep.subr.mxu0 0.0
  %893 = vmatpush1.msra.mxu0 %v187
  %894 = vmatprep.subr.mxu0 0.0
  %895 = vmatpush1.msra.mxu0 0.0
  %896 = vmatprep.subr.mxu0 0.0
  %897 = vmatpush1.msra.mxu0 0.0
  %898 = vmatprep.subr.mxu0 0.0
  %899 = vmatpush1.msra.mxu0 0.0
  %900 = vmatprep.subr.mxu0 0.0
  %901 = vmatpush1.msra.mxu0 0.0
  %902 = vmatprep.subr.mxu0 0.0
  %903 = vmatpush1.msra.mxu0 0.0
  %904 = vmatprep.subr.mxu0 0.0
  %905 = vmatpush1.msra.mxu0 0.0
  %906 = vmatprep.subr.mxu0 0.0
  %907 = vmatpush1.msra.mxu0 0.0
  %908 = vmatprep.subr.mxu0 0.0
  %909 = vmatpush1.msra.mxu0 0.0
  %910 = vmatprep.subr.mxu0 0.0
  %911 = vmatpush1.msra.mxu0 0.0
  %912 = vmatprep.subr.mxu0 0.0
  %913 = vmatpush1.msra.mxu0 0.0
  %914 = vmatprep.subr.mxu0 0.0
  %915 = vmatpush1.msra.mxu0 0.0
  %916 = vmatprep.subr.mxu0 0.0
  %917 = vmatpush1.msra.mxu0 0.0
  %918 = vmatprep.subr.mxu0 0.0
  %919 = vmatpush1.msra.mxu0 0.0
  %920 = vmatprep.subr.mxu0 0.0
  %921 = vmatpush1.msra.mxu0 0.0
  %922 = vmatprep.subr.mxu0 0.0
  %923 = vmatpush1.msra.mxu0 0.0
  %924 = vmatprep.subr.mxu0 0.0
  %925 = vmatpush1.msra.mxu0 0.0
  %926 = vmatprep.subr.mxu0 0.0
  %927 = vmatpush1.msra.mxu0 0.0
  %928 = vmatprep.subr.mxu0 0.0
  %929 = vmatpush1.msra.mxu0 0.0
  %930 = vmatprep.subr.mxu0 0.0
  %931 = vmatpush1.msra.mxu0 0.0
  %932 = vmatprep.subr.mxu0 0.0
  %933 = vmatpush1.msra.mxu0 0.0
  %934 = vmatprep.subr.mxu0 0.0
  %935 = vmatpush1.msra.mxu0 0.0
  %936 = vmatprep.subr.mxu0 0.0
  %937 = vmatpush1.msra.mxu0 0.0
  %938 = vmatprep.subr.mxu0 0.0
  %939 = vmatpush1.msra.mxu0 0.0
  %940 = vmatprep.subr.mxu0 0.0
  %941 = vmatpush1.msra.mxu0 0.0
  %942 = vmatprep.subr.mxu0 0.0
  %943 = vmatpush1.msra.mxu0 0.0
  %944 = vmatprep.subr.mxu0 0.0
  %945 = vmatpush1.msra.mxu0 0.0
  %946 = vmatprep.subr.mxu0 0.0
  %947 = vmatpush1.msra.mxu0 0.0
  %948 = vmatprep.subr.mxu0 0.0
  %949 = vmatpush1.msra.mxu0 0.0
  %950 = vmatprep.subr.mxu0 0.0
  %951 = vmatpush1.msra.mxu0 0.0
  %952 = vmatprep.subr.mxu0 0.0
  %953 = vmatpush1.msra.mxu0 0.0
  %954 = vmatprep.subr.mxu0 0.0
  %955 = vmatpush1.msra.mxu0 0.0
  %956 = vmatprep.mubr.f32.mxu0 0.0
  %957 = vmatmul.mubr.f32.gmra.mrb[0].mxu0 %v887
  %v958 = vpop.f32.mrb[0].mxu0
  %v959 = vadd.f32 %v25, %v958
  %v960 = vpop.f32.mrb[0].mxu0
  %961 = vmatprep.mubr.f32.mxu0 0.0
  %962 = vmatmul.mubr.f32.gmra.mrb[0].mxu0 %v890
  %v963 = vpop.f32.mrb[0].mxu0
  %v964 = vadd.f32 %v26, %v963
  %v965 = vpop.f32.mrb[0].mxu0
  %966 = vdwg.mxu0
  %v967 = vsel %vm324, %v959, -inf
  %968 = vmax.xlane.f32.xlu0 %v967
  %v969 = vpop.xlane.xlu0 %968
  %v970 = vsel %vm324, %v964, -inf
  %971 = vmax.xlane.f32.xlu0 %v970
  %v972 = vpop.xlane.xlu0 %971
  %v973 = vsub.f32 %v959, %v969
  %v974 = vsub.f32 %v964, %v972
  %v975 = vmul.f32 %v973, 1.442695
  %v976 = vpow.pop %v975
  %v977 = vmul.f32 %v974, 1.442695
  %v978 = vpow.pop %v977
  %v979 = vsel %vm324, %v976, 0.0
  %980 = vadd.xlane.f32.xlu0 %v979
  %v981 = vpop.xlane.xlu0 %980
  %v982 = vsel %vm324, %v978, 0.0
  %983 = vadd.xlane.f32.xlu0 %v982
  %v984 = vpop.xlane.xlu0 %983
  %v985 = vrcp.pop %v981
  %v986 = vmul.f32 %v976, %v985
  %v987 = vrcp.pop %v984
  %v988 = vmul.f32 %v978, %v987
  %v990 = vsel %vm324, %v207, 0
  %v993 = vsel %vm324, %v986, 0
  %v996 = vsel %vm324, %v988, 0
  %998 = vmatprep.subr.mxu0 0.0
  %999 = vmatpush1.xpose.msra.mxu0 %v993
  %1000 = vmatprep.subr.mxu0 0.0
  %1001 = vmatpush1.xpose.msra.mxu0 %v996
  %1002 = vmatprep.subr.mxu0 0.0
  %1003 = vmatpush1.xpose.msra.mxu0 0.0
  %1004 = vmatprep.subr.mxu0 0.0
  %1005 = vmatpush1.xpose.msra.mxu0 0.0
  %1006 = vmatprep.subr.mxu0 0.0
  %1007 = vmatpush1.xpose.msra.mxu0 0.0
  %1008 = vmatprep.subr.mxu0 0.0
  %1009 = vmatpush1.xpose.msra.mxu0 0.0
  %1010 = vmatprep.subr.mxu0 0.0
  %1011 = vmatpush1.xpose.msra.mxu0 0.0
  %1012 = vmatprep.subr.mxu0 0.0
  %1013 = vmatpush1.xpose.msra.mxu0 0.0
  %1014 = vmatprep.subr.mxu0 0.0
  %1015 = vmatpush1.xpose.msra.mxu0 0.0
  %1016 = vmatprep.subr.mxu0 0.0
  %1017 = vmatpush1.xpose.msra.mxu0 0.0
  %1018 = vmatprep.subr.mxu0 0.0
  %1019 = vmatpush1.xpose.msra.mxu0 0.0
  %1020 = vmatprep.subr.mxu0 0.0
  %1021 = vmatpush1.xpose.msra.mxu0 0.0
  %1022 = vmatprep.subr.mxu0 0.0
  %1023 = vmatpush1.xpose.msra.mxu0 0.0
  %1024 = vmatprep.subr.mxu0 0.0
  %1025 = vmatpush1.xpose.msra.mxu0 0.0
  %1026 = vmatprep.subr.mxu0 0.0
  %1027 = vmatpush1.xpose.msra.mxu0 0.0
  %1028 = vmatprep.subr.mxu0 0.0
  %1029 = vmatpush1.xpose.msra.mxu0 0.0
  %1030 = vmatprep.subr.mxu0 0.0
  %1031 = vmatpush1.xpose.msra.mxu0 0.0
  %1032 = vmatprep.subr.mxu0 0.0
  %1033 = vmatpush1.xpose.msra.mxu0 0.0
  %1034 = vmatprep.subr.mxu0 0.0
  %1035 = vmatpush1.xpose.msra.mxu0 0.0
  %1036 = vmatprep.subr.mxu0 0.0
  %1037 = vmatpush1.xpose.msra.mxu0 0.0
  %1038 = vmatprep.subr.mxu0 0.0
  %1039 = vmatpush1.xpose.msra.mxu0 0.0
  %1040 = vmatprep.subr.mxu0 0.0
  %1041 = vmatpush1.xpose.msra.mxu0 0.0
  %1042 = vmatprep.subr.mxu0 0.0
  %1043 = vmatpush1.xpose.msra.mxu0 0.0
  %1044 = vmatprep.subr.mxu0 0.0
  %1045 = vmatpush1.xpose.msra.mxu0 0.0
  %1046 = vmatprep.subr.mxu0 0.0
  %1047 = vmatpush1.xpose.msra.mxu0 0.0
  %1048 = vmatprep.subr.mxu0 0.0
  %1049 = vmatpush1.xpose.msra.mxu0 0.0
  %1050 = vmatprep.subr.mxu0 0.0
  %1051 = vmatpush1.xpose.msra.mxu0 0.0
  %1052 = vmatprep.subr.mxu0 0.0
  %1053 = vmatpush1.xpose.msra.mxu0 0.0
  %1054 = vmatprep.subr.mxu0 0.0
  %1055 = vmatpush1.xpose.msra.mxu0 0.0
  %1056 = vmatprep.subr.mxu0 0.0
  %1057 = vmatpush1.xpose.msra.mxu0 0.0
  %1058 = vmatprep.subr.mxu0 0.0
  %1059 = vmatpush1.xpose.msra.mxu0 0.0
  %1060 = vmatprep.subr.mxu0 0.0
  %1061 = vmatpush1.xpose.msra.mxu0 0.0
  %1062 = vmatprep.mubr.f32.mxu0 0.0
  %1063 = vmatmul.mubr.f32.gmra.mrb[0].mxu0 %v990
  %v1064 = vpop.f32.mrb[0].mxu0
  %v1065 = vadd.f32 0.0, %v1064
  %v1066 = vpop.f32.mrb[0].mxu0
  %1067 = vdwg.mxu0
  %1068 = vxpose.xlu0.b32.start [1/16] %v423, 128
  %1069 = vxpose.xlu0.b32.cont [2/16] %v637, 128
  %1070 = vxpose.xlu0.b32.cont [3/16] %v851, 128
  %1071 = vxpose.xlu0.b32.cont [4/16] %v1065, 128
  %1072 = vxpose.xlu0.b32.cont [5/16] 0.0, 128
  %1073 = vxpose.xlu0.b32.cont [6/16] 0.0, 128
  %1074 = vxpose.xlu0.b32.cont [7/16] 0.0, 128
  %1075 = vxpose.xlu0.b32.cont [8/16] 0.0, 128
  %1076 = vxpose.xlu0.b32.cont [9/16] 0.0, 128
  %1077 = vxpose.xlu0.b32.cont [10/16] 0.0, 128
  %1078 = vxpose.xlu0.b32.cont [11/16] 0.0, 128
  %1079 = vxpose.xlu0.b32.cont [12/16] 0.0, 128
  %1080 = vxpose.xlu0.b32.cont [13/16] 0.0, 128
  %1081 = vxpose.xlu0.b32.cont [14/16] 0.0, 128
  %1082 = vxpose.xlu0.b32.cont [15/16] 0.0, 128
  %1083 = vxpose.xlu0.b32.end [16/16] 0.0, 128
  %v1084 = vpop.trf.xlu0
  %v1085 = vpop.trf.xlu0
  %v1086 = vpop.trf.xlu0
  %v1087 = vpop.trf.xlu0
  %v1088 = vpop.trf.xlu0
  %v1089 = vpop.trf.xlu0
  %v1090 = vpop.trf.xlu0
  %v1091 = vpop.trf.xlu0
  %v1092 = vpop.trf.xlu0
  %v1093 = vpop.trf.xlu0
  %v1094 = vpop.trf.xlu0
  %v1095 = vpop.trf.xlu0
  %v1096 = vpop.trf.xlu0
  %v1097 = vpop.trf.xlu0
  %v1098 = vpop.trf.xlu0
  %v1099 = vpop.trf.xlu0
  %v1100 = vld [vmem:[%s3] sm:$0xff]
  %v1101 = vld [vmem:[%s3 + $0x8] sm:$0xff]
  %v1102 = vld [vmem:[%s3 + $0x10] sm:$0xff]
  %v1103 = vld [vmem:[%s3 + $0x18] sm:$0xff]
  %v1104 = vld [vmem:[%s3 + $0x20] sm:$0xff]
  %v1105 = vld [vmem:[%s3 + $0x28] sm:$0xff]
  %v1106 = vld [vmem:[%s3 + $0x30] sm:$0xff]
  %v1107 = vld [vmem:[%s3 + $0x38] sm:$0xff]
  %v1108 = vld [vmem:[%s3 + $0x40] sm:$0xff]
  %v1109 = vld [vmem:[%s3 + $0x48] sm:$0xff]
  %v1110 = vld [vmem:[%s3 + $0x50] sm:$0xff]
  %v1111 = vld [vmem:[%s3 + $0x58] sm:$0xff]
  %v1112 = vld [vmem:[%s3 + $0x60] sm:$0xff]
  %v1113 = vld [vmem:[%s3 + $0x68] sm:$0xff]
  %v1114 = vld [vmem:[%s3 + $0x70] sm:$0xff]
  %v1115 = vld [vmem:[%s3 + $0x78] sm:$0xff]
  %v1116 = vld [vmem:[%s4] sm:$0xff]
  %v1117 = vlaneseq
  %v1118 = vshrl.u32 %v1117, 7
  %v1119 = vsub.s32 0, %v1118
  %v1120 = vrot.slane %v1116, %v1119
  %v1122 = vsel %vm27, %v1084, 0
  %v1125 = vsel %vm27, %v1085, 0
  %1127 = vmatprep.subr.mxu0 0.0
  %1128 = vmatpush1.msra.mxu0 %v1112
  %1129 = vmatprep.subr.mxu0 0.0
  %1130 = vmatpush1.msra.mxu0 %v1113
  %1131 = vmatprep.subr.mxu0 0.0
  %1132 = vmatpush1.msra.mxu0 %v1114
  %1133 = vmatprep.subr.mxu0 0.0
  %1134 = vmatpush1.msra.mxu0 %v1115
  %1135 = vmatprep.subr.mxu0 0.0
  %1136 = vmatpush1.msra.mxu0 0.0
  %1137 = vmatprep.subr.mxu0 0.0
  %1138 = vmatpush1.msra.mxu0 0.0
  %1139 = vmatprep.subr.mxu0 0.0
  %1140 = vmatpush1.msra.mxu0 0.0
  %1141 = vmatprep.subr.mxu0 0.0
  %1142 = vmatpush1.msra.mxu0 0.0
  %1143 = vmatprep.subr.mxu0 0.0
  %1144 = vmatpush1.msra.mxu0 0.0
  %1145 = vmatprep.subr.mxu0 0.0
  %1146 = vmatpush1.msra.mxu0 0.0
  %1147 = vmatprep.subr.mxu0 0.0
  %1148 = vmatpush1.msra.mxu0 0.0
  %1149 = vmatprep.subr.mxu0 0.0
  %1150 = vmatpush1.msra.mxu0 0.0
  %1151 = vmatprep.subr.mxu0 0.0
  %1152 = vmatpush1.msra.mxu0 0.0
  %1153 = vmatprep.subr.mxu0 0.0
  %1154 = vmatpush1.msra.mxu0 0.0
  %1155 = vmatprep.subr.mxu0 0.0
  %1156 = vmatpush1.msra.mxu0 0.0
  %1157 = vmatprep.subr.mxu0 0.0
  %1158 = vmatpush1.msra.mxu0 0.0
  %1159 = vmatprep.subr.mxu0 0.0
  %1160 = vmatpush1.msra.mxu0 0.0
  %1161 = vmatprep.subr.mxu0 0.0
  %1162 = vmatpush1.msra.mxu0 0.0
  %1163 = vmatprep.subr.mxu0 0.0
  %1164 = vmatpush1.msra.mxu0 0.0
  %1165 = vmatprep.subr.mxu0 0.0
  %1166 = vmatpush1.msra.mxu0 0.0
  %1167 = vmatprep.subr.mxu0 0.0
  %1168 = vmatpush1.msra.mxu0 0.0
  %1169 = vmatprep.subr.mxu0 0.0
  %1170 = vmatpush1.msra.mxu0 0.0
  %1171 = vmatprep.subr.mxu0 0.0
  %1172 = vmatpush1.msra.mxu0 0.0
  %1173 = vmatprep.subr.mxu0 0.0
  %1174 = vmatpush1.msra.mxu0 0.0
  %1175 = vmatprep.subr.mxu0 0.0
  %1176 = vmatpush1.msra.mxu0 0.0
  %1177 = vmatprep.subr.mxu0 0.0
  %1178 = vmatpush1.msra.mxu0 0.0
  %1179 = vmatprep.subr.mxu0 0.0
  %1180 = vmatpush1.msra.mxu0 0.0
  %1181 = vmatprep.subr.mxu0 0.0
  %1182 = vmatpush1.msra.mxu0 0.0
  %1183 = vmatprep.subr.mxu0 0.0
  %1184 = vmatpush1.msra.mxu0 0.0
  %1185 = vmatprep.subr.mxu0 0.0
  %1186 = vmatpush1.msra.mxu0 0.0
  %1187 = vmatprep.subr.mxu0 0.0
  %1188 = vmatpush1.msra.mxu0 0.0
  %1189 = vmatprep.subr.mxu0 0.0
  %1190 = vmatpush1.msra.mxu0 0.0
  %1191 = vmatprep.mubr.f32.mxu0 0.0
  %1192 = vmatmul.mubr.f32.gmra.mrb[0].mxu0 %v1122
  %v1193 = vpop.f32.mrb[0].mxu0
  %v1194 = vadd.f32 %v1120, %v1193
  %v1195 = vpop.f32.mrb[0].mxu0
  %1196 = vmatprep.mubr.f32.mxu0 0.0
  %1197 = vmatmul.mubr.f32.gmra.mrb[0].mxu0 %v1125
  %v1198 = vpop.f32.mrb[0].mxu0
  %v1199 = vadd.f32 %v1120, %v1198
  %v1200 = vpop.f32.mrb[0].mxu0
  %1201 = vdwg.mxu0
  %v1202 = vadd.f32 %v23, %v1194
  %v1203 = vadd.f32 %v24, %v1199
  %v1204 = vsel %vm27, %v1202, 0.0
  %1205 = vadd.xlane.f32.xlu0 %v1204
  %v1206 = vpop.xlane.xlu0 %1205
  %v1207 = vsel %vm27, %v1203, 0.0
  %1208 = vadd.xlane.f32.xlu0 %v1207
  %v1209 = vpop.xlane.xlu0 %1208
  %v1210 = vrcp.pop 32.0
  %v1211 = vmul.f32 %v1206, %v1210
  %v1212 = vmul.f32 %v1209, %v1210
  %v1213 = vsub.f32 %v1202, %v1211
  %v1214 = vsub.f32 %v1203, %v1212
  %v1215 = vmul.f32 %v1213, %v1213
  %v1216 = vmul.f32 %v1214, %v1214
  %v1217 = vsel %vm27, %v1215, 0.0
  %1218 = vadd.xlane.f32.xlu0 %v1217
  %v1219 = vpop.xlane.xlu0 %1218
  %v1220 = vsel %vm27, %v1216, 0.0
  %1221 = vadd.xlane.f32.xlu0 %v1220
  %v1222 = vpop.xlane.xlu0 %1221
  %v1223 = vmul.f32 %v1219, %v1210
  %v1224 = vmul.f32 %v1222, %v1210
  %v1225 = vadd.f32 %v1223, 1e-05
  %v1226 = vadd.f32 %v1224, 1e-05
  %v1227 = vrsqrt.pop %v1225
  %v1228 = vrsqrt.pop %v1226
  %v1229 = vmul.f32 %v1213, %v1227
  %v1230 = vmul.f32 %v1214, %v1228
  %v1231 = vlaneseq
  %v1232 = vshrl.u32 %v1231, 7
  %v1233 = vsub.s32 1, %v1232
  %v1234 = vrot.slane %v1116, %v1233
  %v1235 = vmul.f32 %v1229, %v1234
  %v1236 = vmul.f32 %v1230, %v1234
  %v1237 = vlaneseq
  %v1238 = vshrl.u32 %v1237, 7
  %v1239 = vsub.s32 2, %v1238
  %v1240 = vrot.slane %v1116, %v1239
  %v1241 = vadd.f32 %v1235, %v1240
  %v1242 = vadd.f32 %v1236, %v1240
  %v1243 = vlaneseq
  %v1244 = vshrl.u32 %v1243, 7
  %v1245 = vsub.s32 3, %v1244
  %v1246 = vrot.slane %v1116, %v1245
  %v1248 = vsel %vm27, %v1241, 0
  %v1251 = vsel %vm27, %v1242, 0
  %1253 = vmatprep.subr.mxu0 0.0
  %1254 = vmatpush1.msra.mxu0 %v1100
  %1255 = vmatprep.subr.mxu0 0.0
  %1256 = vmatpush1.msra.mxu0 %v1101
  %1257 = vmatprep.subr.mxu0 0.0
  %1258 = vmatpush1.msra.mxu0 %v1102
  %1259 = vmatprep.subr.mxu0 0.0
  %1260 = vmatpush1.msra.mxu0 %v1103
  %1261 = vmatprep.subr.mxu0 0.0
  %1262 = vmatpush1.msra.mxu0 0.0
  %1263 = vmatprep.subr.mxu0 0.0
  %1264 = vmatpush1.msra.mxu0 0.0
  %1265 = vmatprep.subr.mxu0 0.0
  %1266 = vmatpush1.msra.mxu0 0.0
  %1267 = vmatprep.subr.mxu0 0.0
  %1268 = vmatpush1.msra.mxu0 0.0
  %1269 = vmatprep.subr.mxu0 0.0
  %1270 = vmatpush1.msra.mxu0 0.0
  %1271 = vmatprep.subr.mxu0 0.0
  %1272 = vmatpush1.msra.mxu0 0.0
  %1273 = vmatprep.subr.mxu0 0.0
  %1274 = vmatpush1.msra.mxu0 0.0
  %1275 = vmatprep.subr.mxu0 0.0
  %1276 = vmatpush1.msra.mxu0 0.0
  %1277 = vmatprep.subr.mxu0 0.0
  %1278 = vmatpush1.msra.mxu0 0.0
  %1279 = vmatprep.subr.mxu0 0.0
  %1280 = vmatpush1.msra.mxu0 0.0
  %1281 = vmatprep.subr.mxu0 0.0
  %1282 = vmatpush1.msra.mxu0 0.0
  %1283 = vmatprep.subr.mxu0 0.0
  %1284 = vmatpush1.msra.mxu0 0.0
  %1285 = vmatprep.subr.mxu0 0.0
  %1286 = vmatpush1.msra.mxu0 0.0
  %1287 = vmatprep.subr.mxu0 0.0
  %1288 = vmatpush1.msra.mxu0 0.0
  %1289 = vmatprep.subr.mxu0 0.0
  %1290 = vmatpush1.msra.mxu0 0.0
  %1291 = vmatprep.subr.mxu0 0.0
  %1292 = vmatpush1.msra.mxu0 0.0
  %1293 = vmatprep.subr.mxu0 0.0
  %1294 = vmatpush1.msra.mxu0 0.0
  %1295 = vmatprep.subr.mxu0 0.0
  %1296 = vmatpush1.msra.mxu0 0.0
  %1297 = vmatprep.subr.mxu0 0.0
  %1298 = vmatpush1.msra.mxu0 0.0
  %1299 = vmatprep.subr.mxu0 0.0
  %1300 = vmatpush1.msra.mxu0 0.0
  %1301 = vmatprep.subr.mxu0 0.0
  %1302 = vmatpush1.msra.mxu0 0.0
  %1303 = vmatprep.subr.mxu0 0.0
  %1304 = vmatpush1.msra.mxu0 0.0
  %1305 = vmatprep.subr.mxu0 0.0
  %1306 = vmatpush1.msra.mxu0 0.0
  %1307 = vmatprep.subr.mxu0 0.0
  %1308 = vmatpush1.msra.mxu0 0.0
  %1309 = vmatprep.subr.mxu0 0.0
  %1310 = vmatpush1.msra.mxu0 0.0
  %1311 = vmatprep.subr.mxu0 0.0
  %1312 = vmatpush1.msra.mxu0 0.0
  %1313 = vmatprep.subr.mxu0 0.0
  %1314 = vmatpush1.msra.mxu0 0.0
  %1315 = vmatprep.subr.mxu0 0.0
  %1316 = vmatpush1.msra.mxu0 0.0
  %1317 = vmatprep.mubr.f32.mxu0 0.0
  %1318 = vmatmul.mubr.f32.gmra.mrb[0].mxu0 %v1248
  %v1319 = vpop.f32.mrb[0].mxu0
  %v1320 = vadd.f32 %v1246, %v1319
  %v1321 = vpop.f32.mrb[0].mxu0
  %1322 = vmatprep.mubr.f32.mxu0 0.0
  %1323 = vmatmul.mubr.f32.gmra.mrb[0].mxu0 %v1251
  %v1324 = vpop.f32.mrb[0].mxu0
  %v1325 = vadd.f32 %v1246, %v1324
  %v1326 = vpop.f32.mrb[0].mxu0
  %1327 = vdwg.mxu0
  %v1328 = vmax.f32 %v1320, 0.0
  %v1329 = vmax.f32 %v1325, 0.0
  %v1330 = vlaneseq
  %v1331 = vshrl.u32 %v1330, 7
  %v1332 = vsub.s32 4, %v1331
  %v1333 = vrot.slane %v1116, %v1332
  %vm1334 = vcmask 523264
  %v1336 = vsel %vm1334, %v1328, 0
  %v1339 = vsel %vm1334, %v1329, 0
  %1341 = vmatprep.subr.mxu0 0.0
  %1342 = vmatpush1.msra.mxu0 %v1104
  %1343 = vmatprep.subr.mxu0 0.0
  %1344 = vmatpush1.msra.mxu0 %v1105
  %1345 = vmatprep.subr.mxu0 0.0
  %1346 = vmatpush1.msra.mxu0 %v1106
  %1347 = vmatprep.subr.mxu0 0.0
  %1348 = vmatpush1.msra.mxu0 %v1107
  %1349 = vmatprep.subr.mxu0 0.0
  %1350 = vmatpush1.msra.mxu0 %v1108
  %1351 = vmatprep.subr.mxu0 0.0
  %1352 = vmatpush1.msra.mxu0 %v1109
  %1353 = vmatprep.subr.mxu0 0.0
  %1354 = vmatpush1.msra.mxu0 %v1110
  %1355 = vmatprep.subr.mxu0 0.0
  %1356 = vmatpush1.msra.mxu0 %v1111
  %1357 = vmatprep.subr.mxu0 0.0
  %1358 = vmatpush1.msra.mxu0 0.0
  %1359 = vmatprep.subr.mxu0 0.0
  %1360 = vmatpush1.msra.mxu0 0.0
  %1361 = vmatprep.subr.mxu0 0.0
  %1362 = vmatpush1.msra.mxu0 0.0
  %1363 = vmatprep.subr.mxu0 0.0
  %1364 = vmatpush1.msra.mxu0 0.0
  %1365 = vmatprep.subr.mxu0 0.0
  %1366 = vmatpush1.msra.mxu0 0.0
  %1367 = vmatprep.subr.mxu0 0.0
  %1368 = vmatpush1.msra.mxu0 0.0
  %1369 = vmatprep.subr.mxu0 0.0
  %1370 = vmatpush1.msra.mxu0 0.0
  %1371 = vmatprep.subr.mxu0 0.0
  %1372 = vmatpush1.msra.mxu0 0.0
  %1373 = vmatprep.subr.mxu0 0.0
  %1374 = vmatpush1.msra.mxu0 0.0
  %1375 = vmatprep.subr.mxu0 0.0
  %1376 = vmatpush1.msra.mxu0 0.0
  %1377 = vmatprep.subr.mxu0 0.0
  %1378 = vmatpush1.msra.mxu0 0.0
  %1379 = vmatprep.subr.mxu0 0.0
  %1380 = vmatpush1.msra.mxu0 0.0
  %1381 = vmatprep.subr.mxu0 0.0
  %1382 = vmatpush1.msra.mxu0 0.0
  %1383 = vmatprep.subr.mxu0 0.0
  %1384 = vmatpush1.msra.mxu0 0.0
  %1385 = vmatprep.subr.mxu0 0.0
  %1386 = vmatpush1.msra.mxu0 0.0
  %1387 = vmatprep.subr.mxu0 0.0
  %1388 = vmatpush1.msra.mxu0 0.0
  %1389 = vmatprep.subr.mxu0 0.0
  %1390 = vmatpush1.msra.mxu0 0.0
  %1391 = vmatprep.subr.mxu0 0.0
  %1392 = vmatpush1.msra.mxu0 0.0
  %1393 = vmatprep.subr.mxu0 0.0
  %1394 = vmatpush1.msra.mxu0 0.0
  %1395 = vmatprep.subr.mxu0 0.0
  %1396 = vmatpush1.msra.mxu0 0.0
  %1397 = vmatprep.subr.mxu0 0.0
  %1398 = vmatpush1.msra.mxu0 0.0
  %1399 = vmatprep.subr.mxu0 0.0
  %1400 = vmatpush1.msra.mxu0 0.0
  %1401 = vmatprep.subr.mxu0 0.0
  %1402 = vmatpush1.msra.mxu0 0.0
  %1403 = vmatprep.subr.mxu0 0.0
  %1404 = vmatpush1.msra.mxu0 0.0
  %1405 = vmatprep.mubr.f32.mxu0 0.0
  %1406 = vmatmul.mubr.f32.gmra.mrb[0].mxu0 %v1336
  %v1407 = vpop.f32.mrb[0].mxu0
  %v1408 = vadd.f32 %v1333, %v1407
  %v1409 = vpop.f32.mrb[0].mxu0
  %1410 = vmatprep.mubr.f32.mxu0 0.0
  %1411 = vmatmul.mubr.f32.gmra.mrb[0].mxu0 %v1339
  %v1412 = vpop.f32.mrb[0].mxu0
  %v1413 = vadd.f32 %v1333, %v1412
  %v1414 = vpop.f32.mrb[0].mxu0
  %1415 = vdwg.mxu0
  %v1416 = vadd.f32 %v1241, %v1408
  %v1417 = vadd.f32 %v1242, %v1413
  %v1418 = vsel %vm27, %v1416, 0.0
  %1419 = vadd.xlane.f32.xlu0 %v1418
  %v1420 = vpop.xlane.xlu0 %1419
  %v1421 = vsel %vm27, %v1417, 0.0
  %1422 = vadd.xlane.f32.xlu0 %v1421
  %v1423 = vpop.xlane.xlu0 %1422
  %v1424 = vmul.f32 %v1420, %v1210
  %v1425 = vmul.f32 %v1423, %v1210
  %v1426 = vsub.f32 %v1416, %v1424
  %v1427 = vsub.f32 %v1417, %v1425
  %v1428 = vmul.f32 %v1426, %v1426
  %v1429 = vmul.f32 %v1427, %v1427
  %v1430 = vsel %vm27, %v1428, 0.0
  %1431 = vadd.xlane.f32.xlu0 %v1430
  %v1432 = vpop.xlane.xlu0 %1431
  %v1433 = vsel %vm27, %v1429, 0.0
  %1434 = vadd.xlane.f32.xlu0 %v1433
  %v1435 = vpop.xlane.xlu0 %1434
  %v1436 = vmul.f32 %v1432, %v1210
  %v1437 = vmul.f32 %v1435, %v1210
  %v1438 = vadd.f32 %v1436, 1e-05
  %v1439 = vadd.f32 %v1437, 1e-05
  %v1440 = vrsqrt.pop %v1438
  %v1441 = vrsqrt.pop %v1439
  %v1442 = vmul.f32 %v1426, %v1440
  %v1443 = vmul.f32 %v1427, %v1441
  %v1444 = vlaneseq
  %v1445 = vshrl.u32 %v1444, 7
  %v1446 = vsub.s32 5, %v1445
  %v1447 = vrot.slane %v1116, %v1446
  %v1448 = vmul.f32 %v1442, %v1447
  %v1449 = vmul.f32 %v1443, %v1447
  %v1450 = vlaneseq
  %v1451 = vshrl.u32 %v1450, 7
  %v1452 = vsub.s32 6, %v1451
  %v1453 = vrot.slane %v1116, %v1452
  %v1454 = vadd.f32 %v1448, %v1453
  %v1455 = vadd.f32 %v1449, %v1453
  %v1456 = vsel %vm27, %v1454, 1.0
  %v1457 = vsel %vm27, %v1455, 1.0
  %s1458 = scalar_lea.vmem %s2, 96
  %v1459 = vld [vmem:[%s1458] sm:$0xff]
  %v1460 = vld [vmem:[%s1458 + $0x8] sm:$0xff]
  %v1461 = vld [vmem:[%s1458 + $0x10] sm:$0xff]
  %v1462 = vld [vmem:[%s1458 + $0x18] sm:$0xff]
  %v1463 = vld [vmem:[%s1458 + $0x20] sm:$0xff]
  %v1464 = vld [vmem:[%s1458 + $0x28] sm:$0xff]
  %v1465 = vld [vmem:[%s1458 + $0x30] sm:$0xff]
  %v1466 = vld [vmem:[%s1458 + $0x38] sm:$0xff]
  %v1467 = vld [vmem:[%s1458 + $0x40] sm:$0xff]
  %v1468 = vld [vmem:[%s1458 + $0x48] sm:$0xff]
  %v1469 = vld [vmem:[%s1458 + $0x50] sm:$0xff]
  %v1470 = vld [vmem:[%s1458 + $0x58] sm:$0xff]
  %v1472 = vsel %vm42, %v1459, 0
  %v1475 = vsel %vm42, %v1460, 0
  %v1478 = vsel %vm42, %v1461, 0
  %v1481 = vsel %vm42, %v1462, 0
  %v1484 = vsel %vm42, %v1463, 0
  %v1487 = vsel %vm42, %v1464, 0
  %v1490 = vsel %vm42, %v1465, 0
  %v1493 = vsel %vm42, %v1466, 0
  %v1496 = vsel %vm42, %v1467, 0
  %v1499 = vsel %vm42, %v1468, 0
  %v1502 = vsel %vm42, %v1469, 0
  %v1505 = vsel %vm42, %v1470, 0
  %v1508 = vsel %vm42, %v1456, 0
  %v1511 = vsel %vm42, %v1457, 0
  %1513 = vmatprep.subr.mxu0 0.0
  %1514 = vmatpush1.xpose.msra.mxu0 %v1508
  %1515 = vmatprep.subr.mxu0 0.0
  %1516 = vmatpush1.xpose.msra.mxu0 %v1511
  %1517 = vmatprep.subr.mxu0 0.0
  %1518 = vmatpush1.xpose.msra.mxu0 0.0
  %1519 = vmatprep.subr.mxu0 0.0
  %1520 = vmatpush1.xpose.msra.mxu0 0.0
  %1521 = vmatprep.subr.mxu0 0.0
  %1522 = vmatpush1.xpose.msra.mxu0 0.0
  %1523 = vmatprep.subr.mxu0 0.0
  %1524 = vmatpush1.xpose.msra.mxu0 0.0
  %1525 = vmatprep.subr.mxu0 0.0
  %1526 = vmatpush1.xpose.msra.mxu0 0.0
  %1527 = vmatprep.subr.mxu0 0.0
  %1528 = vmatpush1.xpose.msra.mxu0 0.0
  %1529 = vmatprep.subr.mxu0 0.0
  %1530 = vmatpush1.xpose.msra.mxu0 0.0
  %1531 = vmatprep.subr.mxu0 0.0
  %1532 = vmatpush1.xpose.msra.mxu0 0.0
  %1533 = vmatprep.subr.mxu0 0.0
  %1534 = vmatpush1.xpose.msra.mxu0 0.0
  %1535 = vmatprep.subr.mxu0 0.0
  %1536 = vmatpush1.xpose.msra.mxu0 0.0
  %1537 = vmatprep.subr.mxu0 0.0
  %1538 = vmatpush1.xpose.msra.mxu0 0.0
  %1539 = vmatprep.subr.mxu0 0.0
  %1540 = vmatpush1.xpose.msra.mxu0 0.0
  %1541 = vmatprep.subr.mxu0 0.0
  %1542 = vmatpush1.xpose.msra.mxu0 0.0
  %1543 = vmatprep.subr.mxu0 0.0
  %1544 = vmatpush1.xpose.msra.mxu0 0.0
  %1545 = vmatprep.subr.mxu0 0.0
  %1546 = vmatpush1.xpose.msra.mxu0 0.0
  %1547 = vmatprep.subr.mxu0 0.0
  %1548 = vmatpush1.xpose.msra.mxu0 0.0
  %1549 = vmatprep.subr.mxu0 0.0
  %1550 = vmatpush1.xpose.msra.mxu0 0.0
  %1551 = vmatprep.subr.mxu0 0.0
  %1552 = vmatpush1.xpose.msra.mxu0 0.0
  %1553 = vmatprep.subr.mxu0 0.0
  %1554 = vmatpush1.xpose.msra.mxu0 0.0
  %1555 = vmatprep.subr.mxu0 0.0
  %1556 = vmatpush1.xpose.msra.mxu0 0.0
  %1557 = vmatprep.subr.mxu0 0.0
  %1558 = vmatpush1.xpose.msra.mxu0 0.0
  %1559 = vmatprep.subr.mxu0 0.0
  %1560 = vmatpush1.xpose.msra.mxu0 0.0
  %1561 = vmatprep.subr.mxu0 0.0
  %1562 = vmatpush1.xpose.msra.mxu0 0.0
  %1563 = vmatprep.subr.mxu0 0.0
  %1564 = vmatpush1.xpose.msra.mxu0 0.0
  %1565 = vmatprep.subr.mxu0 0.0
  %1566 = vmatpush1.xpose.msra.mxu0 0.0
  %1567 = vmatprep.subr.mxu0 0.0
  %1568 = vmatpush1.xpose.msra.mxu0 0.0
  %1569 = vmatprep.subr.mxu0 0.0
  %1570 = vmatpush1.xpose.msra.mxu0 0.0
  %1571 = vmatprep.subr.mxu0 0.0
  %1572 = vmatpush1.xpose.msra.mxu0 0.0
  %1573 = vmatprep.subr.mxu0 0.0
  %1574 = vmatpush1.xpose.msra.mxu0 0.0
  %1575 = vmatprep.subr.mxu0 0.0
  %1576 = vmatpush1.xpose.msra.mxu0 0.0
  %1577 = vmatprep.mubr.f32.mxu0 0.0
  %1578 = vmatmul.mubr.f32.gmra.mrb[0].mxu0 %v1472
  %v1579 = vpop.f32.mrb[0].mxu0
  %v1580 = vadd.f32 0.0, %v1579
  %v1581 = vpop.f32.mrb[0].mxu0
  %1582 = vmatprep.mubr.f32.mxu0 0.0
  %1583 = vmatmul.mubr.f32.gmra.mrb[0].mxu0 %v1475
  %v1584 = vpop.f32.mrb[0].mxu0
  %v1585 = vadd.f32 0.0, %v1584
  %v1586 = vpop.f32.mrb[0].mxu0
  %1587 = vmatprep.mubr.f32.mxu0 0.0
  %1588 = vmatmul.mubr.f32.gmra.mrb[0].mxu0 %v1478
  %v1589 = vpop.f32.mrb[0].mxu0
  %v1590 = vadd.f32 0.0, %v1589
  %v1591 = vpop.f32.mrb[0].mxu0
  %1592 = vmatprep.mubr.f32.mxu0 0.0
  %1593 = vmatmul.mubr.f32.gmra.mrb[0].mxu0 %v1481
  %v1594 = vpop.f32.mrb[0].mxu0
  %v1595 = vadd.f32 0.0, %v1594
  %v1596 = vpop.f32.mrb[0].mxu0
  %1597 = vmatprep.mubr.f32.mxu0 0.0
  %1598 = vmatmul.mubr.f32.gmra.mrb[0].mxu0 %v1484
  %v1599 = vpop.f32.mrb[0].mxu0
  %v1600 = vadd.f32 0.0, %v1599
  %v1601 = vpop.f32.mrb[0].mxu0
  %1602 = vmatprep.mubr.f32.mxu0 0.0
  %1603 = vmatmul.mubr.f32.gmra.mrb[0].mxu0 %v1487
  %v1604 = vpop.f32.mrb[0].mxu0
  %v1605 = vadd.f32 0.0, %v1604
  %v1606 = vpop.f32.mrb[0].mxu0
  %1607 = vmatprep.mubr.f32.mxu0 0.0
  %1608 = vmatmul.mubr.f32.gmra.mrb[0].mxu0 %v1490
  %v1609 = vpop.f32.mrb[0].mxu0
  %v1610 = vadd.f32 0.0, %v1609
  %v1611 = vpop.f32.mrb[0].mxu0
  %1612 = vmatprep.mubr.f32.mxu0 0.0
  %1613 = vmatmul.mubr.f32.gmra.mrb[0].mxu0 %v1493
  %v1614 = vpop.f32.mrb[0].mxu0
  %v1615 = vadd.f32 0.0, %v1614
  %v1616 = vpop.f32.mrb[0].mxu0
  %1617 = vmatprep.mubr.f32.mxu0 0.0
  %1618 = vmatmul.mubr.f32.gmra.mrb[0].mxu0 %v1496
  %v1619 = vpop.f32.mrb[0].mxu0
  %v1620 = vadd.f32 0.0, %v1619
  %v1621 = vpop.f32.mrb[0].mxu0
  %1622 = vmatprep.mubr.f32.mxu0 0.0
  %1623 = vmatmul.mubr.f32.gmra.mrb[0].mxu0 %v1499
  %v1624 = vpop.f32.mrb[0].mxu0
  %v1625 = vadd.f32 0.0, %v1624
  %v1626 = vpop.f32.mrb[0].mxu0
  %1627 = vmatprep.mubr.f32.mxu0 0.0
  %1628 = vmatmul.mubr.f32.gmra.mrb[0].mxu0 %v1502
  %v1629 = vpop.f32.mrb[0].mxu0
  %v1630 = vadd.f32 0.0, %v1629
  %v1631 = vpop.f32.mrb[0].mxu0
  %1632 = vmatprep.mubr.f32.mxu0 0.0
  %1633 = vmatmul.mubr.f32.gmra.mrb[0].mxu0 %v1505
  %v1634 = vpop.f32.mrb[0].mxu0
  %v1635 = vadd.f32 0.0, %v1634
  %v1636 = vpop.f32.mrb[0].mxu0
  %1637 = vdwg.mxu0
  %1638 = vxpose.xlu0.b32.start [1/16] %v1580, 128
  %1639 = vxpose.xlu0.b32.cont [2/16] 0.0, 128
  %1640 = vxpose.xlu0.b32.cont [3/16] 0.0, 128
  %1641 = vxpose.xlu0.b32.cont [4/16] 0.0, 128
  %1642 = vxpose.xlu0.b32.cont [5/16] 0.0, 128
  %1643 = vxpose.xlu0.b32.cont [6/16] 0.0, 128
  %1644 = vxpose.xlu0.b32.cont [7/16] 0.0, 128
  %1645 = vxpose.xlu0.b32.cont [8/16] 0.0, 128
  %1646 = vxpose.xlu0.b32.cont [9/16] 0.0, 128
  %1647 = vxpose.xlu0.b32.cont [10/16] 0.0, 128
  %1648 = vxpose.xlu0.b32.cont [11/16] 0.0, 128
  %1649 = vxpose.xlu0.b32.cont [12/16] 0.0, 128
  %1650 = vxpose.xlu0.b32.cont [13/16] 0.0, 128
  %1651 = vxpose.xlu0.b32.cont [14/16] 0.0, 128
  %1652 = vxpose.xlu0.b32.cont [15/16] 0.0, 128
  %1653 = vxpose.xlu0.b32.end [16/16] 0.0, 128
  %v1654 = vpop.trf.xlu0
  %v1655 = vpop.trf.xlu0
  %v1656 = vpop.trf.xlu0
  %v1657 = vpop.trf.xlu0
  %v1658 = vpop.trf.xlu0
  %v1659 = vpop.trf.xlu0
  %v1660 = vpop.trf.xlu0
  %v1661 = vpop.trf.xlu0
  %v1662 = vpop.trf.xlu0
  %v1663 = vpop.trf.xlu0
  %v1664 = vpop.trf.xlu0
  %v1665 = vpop.trf.xlu0
  %v1666 = vpop.trf.xlu0
  %v1667 = vpop.trf.xlu0
  %v1668 = vpop.trf.xlu0
  %v1669 = vpop.trf.xlu0
  %v1671 = vsel %vm242, %v1654, 0
  %v1674 = vsel %vm242, %v1655, 0
  %1676 = vmatprep.subr.mxu0 0.0
  %1677 = vmatpush1.msra.mxu0 %v1600
  %1678 = vmatprep.subr.mxu0 0.0
  %1679 = vmatpush1.msra.mxu0 0.0
  %1680 = vmatprep.subr.mxu0 0.0
  %1681 = vmatpush1.msra.mxu0 0.0
  %1682 = vmatprep.subr.mxu0 0.0
  %1683 = vmatpush1.msra.mxu0 0.0
  %1684 = vmatprep.subr.mxu0 0.0
  %1685 = vmatpush1.msra.mxu0 0.0
  %1686 = vmatprep.subr.mxu0 0.0
  %1687 = vmatpush1.msra.mxu0 0.0
  %1688 = vmatprep.subr.mxu0 0.0
  %1689 = vmatpush1.msra.mxu0 0.0
  %1690 = vmatprep.subr.mxu0 0.0
  %1691 = vmatpush1.msra.mxu0 0.0
  %1692 = vmatprep.subr.mxu0 0.0
  %1693 = vmatpush1.msra.mxu0 0.0
  %1694 = vmatprep.subr.mxu0 0.0
  %1695 = vmatpush1.msra.mxu0 0.0
  %1696 = vmatprep.subr.mxu0 0.0
  %1697 = vmatpush1.msra.mxu0 0.0
  %1698 = vmatprep.subr.mxu0 0.0
  %1699 = vmatpush1.msra.mxu0 0.0
  %1700 = vmatprep.subr.mxu0 0.0
  %1701 = vmatpush1.msra.mxu0 0.0
  %1702 = vmatprep.subr.mxu0 0.0
  %1703 = vmatpush1.msra.mxu0 0.0
  %1704 = vmatprep.subr.mxu0 0.0
  %1705 = vmatpush1.msra.mxu0 0.0
  %1706 = vmatprep.subr.mxu0 0.0
  %1707 = vmatpush1.msra.mxu0 0.0
  %1708 = vmatprep.subr.mxu0 0.0
  %1709 = vmatpush1.msra.mxu0 0.0
  %1710 = vmatprep.subr.mxu0 0.0
  %1711 = vmatpush1.msra.mxu0 0.0
  %1712 = vmatprep.subr.mxu0 0.0
  %1713 = vmatpush1.msra.mxu0 0.0
  %1714 = vmatprep.subr.mxu0 0.0
  %1715 = vmatpush1.msra.mxu0 0.0
  %1716 = vmatprep.subr.mxu0 0.0
  %1717 = vmatpush1.msra.mxu0 0.0
  %1718 = vmatprep.subr.mxu0 0.0
  %1719 = vmatpush1.msra.mxu0 0.0
  %1720 = vmatprep.subr.mxu0 0.0
  %1721 = vmatpush1.msra.mxu0 0.0
  %1722 = vmatprep.subr.mxu0 0.0
  %1723 = vmatpush1.msra.mxu0 0.0
  %1724 = vmatprep.subr.mxu0 0.0
  %1725 = vmatpush1.msra.mxu0 0.0
  %1726 = vmatprep.subr.mxu0 0.0
  %1727 = vmatpush1.msra.mxu0 0.0
  %1728 = vmatprep.subr.mxu0 0.0
  %1729 = vmatpush1.msra.mxu0 0.0
  %1730 = vmatprep.subr.mxu0 0.0
  %1731 = vmatpush1.msra.mxu0 0.0
  %1732 = vmatprep.subr.mxu0 0.0
  %1733 = vmatpush1.msra.mxu0 0.0
  %1734 = vmatprep.subr.mxu0 0.0
  %1735 = vmatpush1.msra.mxu0 0.0
  %1736 = vmatprep.subr.mxu0 0.0
  %1737 = vmatpush1.msra.mxu0 0.0
  %1738 = vmatprep.subr.mxu0 0.0
  %1739 = vmatpush1.msra.mxu0 0.0
  %1740 = vmatprep.mubr.f32.mxu0 0.0
  %1741 = vmatmul.mubr.f32.gmra.mrb[0].mxu0 %v1671
  %v1742 = vpop.f32.mrb[0].mxu0
  %v1743 = vadd.f32 %v25, %v1742
  %v1744 = vpop.f32.mrb[0].mxu0
  %1745 = vmatprep.mubr.f32.mxu0 0.0
  %1746 = vmatmul.mubr.f32.gmra.mrb[0].mxu0 %v1674
  %v1747 = vpop.f32.mrb[0].mxu0
  %v1748 = vadd.f32 %v26, %v1747
  %v1749 = vpop.f32.mrb[0].mxu0
  %1750 = vdwg.mxu0
  %v1751 = vsel %vm324, %v1743, -inf
  %1752 = vmax.xlane.f32.xlu0 %v1751
  %v1753 = vpop.xlane.xlu0 %1752
  %v1754 = vsel %vm324, %v1748, -inf
  %1755 = vmax.xlane.f32.xlu0 %v1754
  %v1756 = vpop.xlane.xlu0 %1755
  %v1757 = vsub.f32 %v1743, %v1753
  %v1758 = vsub.f32 %v1748, %v1756
  %v1759 = vmul.f32 %v1757, 1.442695
  %v1760 = vpow.pop %v1759
  %v1761 = vmul.f32 %v1758, 1.442695
  %v1762 = vpow.pop %v1761
  %v1763 = vsel %vm324, %v1760, 0.0
  %1764 = vadd.xlane.f32.xlu0 %v1763
  %v1765 = vpop.xlane.xlu0 %1764
  %v1766 = vsel %vm324, %v1762, 0.0
  %1767 = vadd.xlane.f32.xlu0 %v1766
  %v1768 = vpop.xlane.xlu0 %1767
  %v1769 = vrcp.pop %v1765
  %v1770 = vmul.f32 %v1760, %v1769
  %v1771 = vrcp.pop %v1768
  %v1772 = vmul.f32 %v1762, %v1771
  %v1774 = vsel %vm324, %v1620, 0
  %v1777 = vsel %vm324, %v1770, 0
  %v1780 = vsel %vm324, %v1772, 0
  %1782 = vmatprep.subr.mxu0 0.0
  %1783 = vmatpush1.xpose.msra.mxu0 %v1777
  %1784 = vmatprep.subr.mxu0 0.0
  %1785 = vmatpush1.xpose.msra.mxu0 %v1780
  %1786 = vmatprep.subr.mxu0 0.0
  %1787 = vmatpush1.xpose.msra.mxu0 0.0
  %1788 = vmatprep.subr.mxu0 0.0
  %1789 = vmatpush1.xpose.msra.mxu0 0.0
  %1790 = vmatprep.subr.mxu0 0.0
  %1791 = vmatpush1.xpose.msra.mxu0 0.0
  %1792 = vmatprep.subr.mxu0 0.0
  %1793 = vmatpush1.xpose.msra.mxu0 0.0
  %1794 = vmatprep.subr.mxu0 0.0
  %1795 = vmatpush1.xpose.msra.mxu0 0.0
  %1796 = vmatprep.subr.mxu0 0.0
  %1797 = vmatpush1.xpose.msra.mxu0 0.0
  %1798 = vmatprep.subr.mxu0 0.0
  %1799 = vmatpush1.xpose.msra.mxu0 0.0
  %1800 = vmatprep.subr.mxu0 0.0
  %1801 = vmatpush1.xpose.msra.mxu0 0.0
  %1802 = vmatprep.subr.mxu0 0.0
  %1803 = vmatpush1.xpose.msra.mxu0 0.0
  %1804 = vmatprep.subr.mxu0 0.0
  %1805 = vmatpush1.xpose.msra.mxu0 0.0
  %1806 = vmatprep.subr.mxu0 0.0
  %1807 = vmatpush1.xpose.msra.mxu0 0.0
  %1808 = vmatprep.subr.mxu0 0.0
  %1809 = vmatpush1.xpose.msra.mxu0 0.0
  %1810 = vmatprep.subr.mxu0 0.0
  %1811 = vmatpush1.xpose.msra.mxu0 0.0
  %1812 = vmatprep.subr.mxu0 0.0
  %1813 = vmatpush1.xpose.msra.mxu0 0.0
  %1814 = vmatprep.subr.mxu0 0.0
  %1815 = vmatpush1.xpose.msra.mxu0 0.0
  %1816 = vmatprep.subr.mxu0 0.0
  %1817 = vmatpush1.xpose.msra.mxu0 0.0
  %1818 = vmatprep.subr.mxu0 0.0
  %1819 = vmatpush1.xpose.msra.mxu0 0.0
  %1820 = vmatprep.subr.mxu0 0.0
  %1821 = vmatpush1.xpose.msra.mxu0 0.0
  %1822 = vmatprep.subr.mxu0 0.0
  %1823 = vmatpush1.xpose.msra.mxu0 0.0
  %1824 = vmatprep.subr.mxu0 0.0
  %1825 = vmatpush1.xpose.msra.mxu0 0.0
  %1826 = vmatprep.subr.mxu0 0.0
  %1827 = vmatpush1.xpose.msra.mxu0 0.0
  %1828 = vmatprep.subr.mxu0 0.0
  %1829 = vmatpush1.xpose.msra.mxu0 0.0
  %1830 = vmatprep.subr.mxu0 0.0
  %1831 = vmatpush1.xpose.msra.mxu0 0.0
  %1832 = vmatprep.subr.mxu0 0.0
  %1833 = vmatpush1.xpose.msra.mxu0 0.0
  %1834 = vmatprep.subr.mxu0 0.0
  %1835 = vmatpush1.xpose.msra.mxu0 0.0
  %1836 = vmatprep.subr.mxu0 0.0
  %1837 = vmatpush1.xpose.msra.mxu0 0.0
  %1838 = vmatprep.subr.mxu0 0.0
  %1839 = vmatpush1.xpose.msra.mxu0 0.0
  %1840 = vmatprep.subr.mxu0 0.0
  %1841 = vmatpush1.xpose.msra.mxu0 0.0
  %1842 = vmatprep.subr.mxu0 0.0
  %1843 = vmatpush1.xpose.msra.mxu0 0.0
  %1844 = vmatprep.subr.mxu0 0.0
  %1845 = vmatpush1.xpose.msra.mxu0 0.0
  %1846 = vmatprep.mubr.f32.mxu0 0.0
  %1847 = vmatmul.mubr.f32.gmra.mrb[0].mxu0 %v1774
  %v1848 = vpop.f32.mrb[0].mxu0
  %v1849 = vadd.f32 0.0, %v1848
  %v1850 = vpop.f32.mrb[0].mxu0
  %1851 = vdwg.mxu0
  %1852 = vxpose.xlu0.b32.start [1/16] %v1585, 128
  %1853 = vxpose.xlu0.b32.cont [2/16] 0.0, 128
  %1854 = vxpose.xlu0.b32.cont [3/16] 0.0, 128
  %1855 = vxpose.xlu0.b32.cont [4/16] 0.0, 128
  %1856 = vxpose.xlu0.b32.cont [5/16] 0.0, 128
  %1857 = vxpose.xlu0.b32.cont [6/16] 0.0, 128
  %1858 = vxpose.xlu0.b32.cont [7/16] 0.0, 128
  %1859 = vxpose.xlu0.b32.cont [8/16] 0.0, 128
  %1860 = vxpose.xlu0.b32.cont [9/16] 0.0, 128
  %1861 = vxpose.xlu0.b32.cont [10/16] 0.0, 128
  %1862 = vxpose.xlu0.b32.cont [11/16] 0.0, 128
  %1863 = vxpose.xlu0.b32.cont [12/16] 0.0, 128
  %1864 = vxpose.xlu0.b32.cont [13/16] 0.0, 128
  %1865 = vxpose.xlu0.b32.cont [14/16] 0.0, 128
  %1866 = vxpose.xlu0.b32.cont [15/16] 0.0, 128
  %1867 = vxpose.xlu0.b32.end [16/16] 0.0, 128
  %v1868 = vpop.trf.xlu0
  %v1869 = vpop.trf.xlu0
  %v1870 = vpop.trf.xlu0
  %v1871 = vpop.trf.xlu0
  %v1872 = vpop.trf.xlu0
  %v1873 = vpop.trf.xlu0
  %v1874 = vpop.trf.xlu0
  %v1875 = vpop.trf.xlu0
  %v1876 = vpop.trf.xlu0
  %v1877 = vpop.trf.xlu0
  %v1878 = vpop.trf.xlu0
  %v1879 = vpop.trf.xlu0
  %v1880 = vpop.trf.xlu0
  %v1881 = vpop.trf.xlu0
  %v1882 = vpop.trf.xlu0
  %v1883 = vpop.trf.xlu0
  %v1885 = vsel %vm242, %v1868, 0
  %v1888 = vsel %vm242, %v1869, 0
  %1890 = vmatprep.subr.mxu0 0.0
  %1891 = vmatpush1.msra.mxu0 %v1605
  %1892 = vmatprep.subr.mxu0 0.0
  %1893 = vmatpush1.msra.mxu0 0.0
  %1894 = vmatprep.subr.mxu0 0.0
  %1895 = vmatpush1.msra.mxu0 0.0
  %1896 = vmatprep.subr.mxu0 0.0
  %1897 = vmatpush1.msra.mxu0 0.0
  %1898 = vmatprep.subr.mxu0 0.0
  %1899 = vmatpush1.msra.mxu0 0.0
  %1900 = vmatprep.subr.mxu0 0.0
  %1901 = vmatpush1.msra.mxu0 0.0
  %1902 = vmatprep.subr.mxu0 0.0
  %1903 = vmatpush1.msra.mxu0 0.0
  %1904 = vmatprep.subr.mxu0 0.0
  %1905 = vmatpush1.msra.mxu0 0.0
  %1906 = vmatprep.subr.mxu0 0.0
  %1907 = vmatpush1.msra.mxu0 0.0
  %1908 = vmatprep.subr.mxu0 0.0
  %1909 = vmatpush1.msra.mxu0 0.0
  %1910 = vmatprep.subr.mxu0 0.0
  %1911 = vmatpush1.msra.mxu0 0.0
  %1912 = vmatprep.subr.mxu0 0.0
  %1913 = vmatpush1.msra.mxu0 0.0
  %1914 = vmatprep.subr.mxu0 0.0
  %1915 = vmatpush1.msra.mxu0 0.0
  %1916 = vmatprep.subr.mxu0 0.0
  %1917 = vmatpush1.msra.mxu0 0.0
  %1918 = vmatprep.subr.mxu0 0.0
  %1919 = vmatpush1.msra.mxu0 0.0
  %1920 = vmatprep.subr.mxu0 0.0
  %1921 = vmatpush1.msra.mxu0 0.0
  %1922 = vmatprep.subr.mxu0 0.0
  %1923 = vmatpush1.msra.mxu0 0.0
  %1924 = vmatprep.subr.mxu0 0.0
  %1925 = vmatpush1.msra.mxu0 0.0
  %1926 = vmatprep.subr.mxu0 0.0
  %1927 = vmatpush1.msra.mxu0 0.0
  %1928 = vmatprep.subr.mxu0 0.0
  %1929 = vmatpush1.msra.mxu0 0.0
  %1930 = vmatprep.subr.mxu0 0.0
  %1931 = vmatpush1.msra.mxu0 0.0
  %1932 = vmatprep.subr.mxu0 0.0
  %1933 = vmatpush1.msra.mxu0 0.0
  %1934 = vmatprep.subr.mxu0 0.0
  %1935 = vmatpush1.msra.mxu0 0.0
  %1936 = vmatprep.subr.mxu0 0.0
  %1937 = vmatpush1.msra.mxu0 0.0
  %1938 = vmatprep.subr.mxu0 0.0
  %1939 = vmatpush1.msra.mxu0 0.0
  %1940 = vmatprep.subr.mxu0 0.0
  %1941 = vmatpush1.msra.mxu0 0.0
  %1942 = vmatprep.subr.mxu0 0.0
  %1943 = vmatpush1.msra.mxu0 0.0
  %1944 = vmatprep.subr.mxu0 0.0
  %1945 = vmatpush1.msra.mxu0 0.0
  %1946 = vmatprep.subr.mxu0 0.0
  %1947 = vmatpush1.msra.mxu0 0.0
  %1948 = vmatprep.subr.mxu0 0.0
  %1949 = vmatpush1.msra.mxu0 0.0
  %1950 = vmatprep.subr.mxu0 0.0
  %1951 = vmatpush1.msra.mxu0 0.0
  %1952 = vmatprep.subr.mxu0 0.0
  %1953 = vmatpush1.msra.mxu0 0.0
  %1954 = vmatprep.mubr.f32.mxu0 0.0
  %1955 = vmatmul.mubr.f32.gmra.mrb[0].mxu0 %v1885
  %v1956 = vpop.f32.mrb[0].mxu0
  %v1957 = vadd.f32 %v25, %v1956
  %v1958 = vpop.f32.mrb[0].mxu0
  %1959 = vmatprep.mubr.f32.mxu0 0.0
  %1960 = vmatmul.mubr.f32.gmra.mrb[0].mxu0 %v1888
  %v1961 = vpop.f32.mrb[0].mxu0
  %v1962 = vadd.f32 %v26, %v1961
  %v1963 = vpop.f32.mrb[0].mxu0
  %1964 = vdwg.mxu0
  %v1965 = vsel %vm324, %v1957, -inf
  %1966 = vmax.xlane.f32.xlu0 %v1965
  %v1967 = vpop.xlane.xlu0 %1966
  %v1968 = vsel %vm324, %v1962, -inf
  %1969 = vmax.xlane.f32.xlu0 %v1968
  %v1970 = vpop.xlane.xlu0 %1969
  %v1971 = vsub.f32 %v1957, %v1967
  %v1972 = vsub.f32 %v1962, %v1970
  %v1973 = vmul.f32 %v1971, 1.442695
  %v1974 = vpow.pop %v1973
  %v1975 = vmul.f32 %v1972, 1.442695
  %v1976 = vpow.pop %v1975
  %v1977 = vsel %vm324, %v1974, 0.0
  %1978 = vadd.xlane.f32.xlu0 %v1977
  %v1979 = vpop.xlane.xlu0 %1978
  %v1980 = vsel %vm324, %v1976, 0.0
  %1981 = vadd.xlane.f32.xlu0 %v1980
  %v1982 = vpop.xlane.xlu0 %1981
  %v1983 = vrcp.pop %v1979
  %v1984 = vmul.f32 %v1974, %v1983
  %v1985 = vrcp.pop %v1982
  %v1986 = vmul.f32 %v1976, %v1985
  %v1988 = vsel %vm324, %v1625, 0
  %v1991 = vsel %vm324, %v1984, 0
  %v1994 = vsel %vm324, %v1986, 0
  %1996 = vmatprep.subr.mxu0 0.0
  %1997 = vmatpush1.xpose.msra.mxu0 %v1991
  %1998 = vmatprep.subr.mxu0 0.0
  %1999 = vmatpush1.xpose.msra.mxu0 %v1994
  %2000 = vmatprep.subr.mxu0 0.0
  %2001 = vmatpush1.xpose.msra.mxu0 0.0
  %2002 = vmatprep.subr.mxu0 0.0
  %2003 = vmatpush1.xpose.msra.mxu0 0.0
  %2004 = vmatprep.subr.mxu0 0.0
  %2005 = vmatpush1.xpose.msra.mxu0 0.0
  %2006 = vmatprep.subr.mxu0 0.0
  %2007 = vmatpush1.xpose.msra.mxu0 0.0
  %2008 = vmatprep.subr.mxu0 0.0
  %2009 = vmatpush1.xpose.msra.mxu0 0.0
  %2010 = vmatprep.subr.mxu0 0.0
  %2011 = vmatpush1.xpose.msra.mxu0 0.0
  %2012 = vmatprep.subr.mxu0 0.0
  %2013 = vmatpush1.xpose.msra.mxu0 0.0
  %2014 = vmatprep.subr.mxu0 0.0
  %2015 = vmatpush1.xpose.msra.mxu0 0.0
  %2016 = vmatprep.subr.mxu0 0.0
  %2017 = vmatpush1.xpose.msra.mxu0 0.0
  %2018 = vmatprep.subr.mxu0 0.0
  %2019 = vmatpush1.xpose.msra.mxu0 0.0
  %2020 = vmatprep.subr.mxu0 0.0
  %2021 = vmatpush1.xpose.msra.mxu0 0.0
  %2022 = vmatprep.subr.mxu0 0.0
  %2023 = vmatpush1.xpose.msra.mxu0 0.0
  %2024 = vmatprep.subr.mxu0 0.0
  %2025 = vmatpush1.xpose.msra.mxu0 0.0
  %2026 = vmatprep.subr.mxu0 0.0
  %2027 = vmatpush1.xpose.msra.mxu0 0.0
  %2028 = vmatprep.subr.mxu0 0.0
  %2029 = vmatpush1.xpose.msra.mxu0 0.0
  %2030 = vmatprep.subr.mxu0 0.0
  %2031 = vmatpush1.xpose.msra.mxu0 0.0
  %2032 = vmatprep.subr.mxu0 0.0
  %2033 = vmatpush1.xpose.msra.mxu0 0.0
  %2034 = vmatprep.subr.mxu0 0.0
  %2035 = vmatpush1.xpose.msra.mxu0 0.0
  %2036 = vmatprep.subr.mxu0 0.0
  %2037 = vmatpush1.xpose.msra.mxu0 0.0
  %2038 = vmatprep.subr.mxu0 0.0
  %2039 = vmatpush1.xpose.msra.mxu0 0.0
  %2040 = vmatprep.subr.mxu0 0.0
  %2041 = vmatpush1.xpose.msra.mxu0 0.0
  %2042 = vmatprep.subr.mxu0 0.0
  %2043 = vmatpush1.xpose.msra.mxu0 0.0
  %2044 = vmatprep.subr.mxu0 0.0
  %2045 = vmatpush1.xpose.msra.mxu0 0.0
  %2046 = vmatprep.subr.mxu0 0.0
  %2047 = vmatpush1.xpose.msra.mxu0 0.0
  %2048 = vmatprep.subr.mxu0 0.0
  %2049 = vmatpush1.xpose.msra.mxu0 0.0
  %2050 = vmatprep.subr.mxu0 0.0
  %2051 = vmatpush1.xpose.msra.mxu0 0.0
  %2052 = vmatprep.subr.mxu0 0.0
  %2053 = vmatpush1.xpose.msra.mxu0 0.0
  %2054 = vmatprep.subr.mxu0 0.0
  %2055 = vmatpush1.xpose.msra.mxu0 0.0
  %2056 = vmatprep.subr.mxu0 0.0
  %2057 = vmatpush1.xpose.msra.mxu0 0.0
  %2058 = vmatprep.subr.mxu0 0.0
  %2059 = vmatpush1.xpose.msra.mxu0 0.0
  %2060 = vmatprep.mubr.f32.mxu0 0.0
  %2061 = vmatmul.mubr.f32.gmra.mrb[0].mxu0 %v1988
  %v2062 = vpop.f32.mrb[0].mxu0
  %v2063 = vadd.f32 0.0, %v2062
  %v2064 = vpop.f32.mrb[0].mxu0
  %2065 = vdwg.mxu0
  %2066 = vxpose.xlu0.b32.start [1/16] %v1590, 128
  %2067 = vxpose.xlu0.b32.cont [2/16] 0.0, 128
  %2068 = vxpose.xlu0.b32.cont [3/16] 0.0, 128
  %2069 = vxpose.xlu0.b32.cont [4/16] 0.0, 128
  %2070 = vxpose.xlu0.b32.cont [5/16] 0.0, 128
  %2071 = vxpose.xlu0.b32.cont [6/16] 0.0, 128
  %2072 = vxpose.xlu0.b32.cont [7/16] 0.0, 128
  %2073 = vxpose.xlu0.b32.cont [8/16] 0.0, 128
  %2074 = vxpose.xlu0.b32.cont [9/16] 0.0, 128
  %2075 = vxpose.xlu0.b32.cont [10/16] 0.0, 128
  %2076 = vxpose.xlu0.b32.cont [11/16] 0.0, 128
  %2077 = vxpose.xlu0.b32.cont [12/16] 0.0, 128
  %2078 = vxpose.xlu0.b32.cont [13/16] 0.0, 128
  %2079 = vxpose.xlu0.b32.cont [14/16] 0.0, 128
  %2080 = vxpose.xlu0.b32.cont [15/16] 0.0, 128
  %2081 = vxpose.xlu0.b32.end [16/16] 0.0, 128
  %v2082 = vpop.trf.xlu0
  %v2083 = vpop.trf.xlu0
  %v2084 = vpop.trf.xlu0
  %v2085 = vpop.trf.xlu0
  %v2086 = vpop.trf.xlu0
  %v2087 = vpop.trf.xlu0
  %v2088 = vpop.trf.xlu0
  %v2089 = vpop.trf.xlu0
  %v2090 = vpop.trf.xlu0
  %v2091 = vpop.trf.xlu0
  %v2092 = vpop.trf.xlu0
  %v2093 = vpop.trf.xlu0
  %v2094 = vpop.trf.xlu0
  %v2095 = vpop.trf.xlu0
  %v2096 = vpop.trf.xlu0
  %v2097 = vpop.trf.xlu0
  %v2099 = vsel %vm242, %v2082, 0
  %v2102 = vsel %vm242, %v2083, 0
  %2104 = vmatprep.subr.mxu0 0.0
  %2105 = vmatpush1.msra.mxu0 %v1610
  %2106 = vmatprep.subr.mxu0 0.0
  %2107 = vmatpush1.msra.mxu0 0.0
  %2108 = vmatprep.subr.mxu0 0.0
  %2109 = vmatpush1.msra.mxu0 0.0
  %2110 = vmatprep.subr.mxu0 0.0
  %2111 = vmatpush1.msra.mxu0 0.0
  %2112 = vmatprep.subr.mxu0 0.0
  %2113 = vmatpush1.msra.mxu0 0.0
  %2114 = vmatprep.subr.mxu0 0.0
  %2115 = vmatpush1.msra.mxu0 0.0
  %2116 = vmatprep.subr.mxu0 0.0
  %2117 = vmatpush1.msra.mxu0 0.0
  %2118 = vmatprep.subr.mxu0 0.0
  %2119 = vmatpush1.msra.mxu0 0.0
  %2120 = vmatprep.subr.mxu0 0.0
  %2121 = vmatpush1.msra.mxu0 0.0
  %2122 = vmatprep.subr.mxu0 0.0
  %2123 = vmatpush1.msra.mxu0 0.0
  %2124 = vmatprep.subr.mxu0 0.0
  %2125 = vmatpush1.msra.mxu0 0.0
  %2126 = vmatprep.subr.mxu0 0.0
  %2127 = vmatpush1.msra.mxu0 0.0
  %2128 = vmatprep.subr.mxu0 0.0
  %2129 = vmatpush1.msra.mxu0 0.0
  %2130 = vmatprep.subr.mxu0 0.0
  %2131 = vmatpush1.msra.mxu0 0.0
  %2132 = vmatprep.subr.mxu0 0.0
  %2133 = vmatpush1.msra.mxu0 0.0
  %2134 = vmatprep.subr.mxu0 0.0
  %2135 = vmatpush1.msra.mxu0 0.0
  %2136 = vmatprep.subr.mxu0 0.0
  %2137 = vmatpush1.msra.mxu0 0.0
  %2138 = vmatprep.subr.mxu0 0.0
  %2139 = vmatpush1.msra.mxu0 0.0
  %2140 = vmatprep.subr.mxu0 0.0
  %2141 = vmatpush1.msra.mxu0 0.0
  %2142 = vmatprep.subr.mxu0 0.0
  %2143 = vmatpush1.msra.mxu0 0.0
  %2144 = vmatprep.subr.mxu0 0.0
  %2145 = vmatpush1.msra.mxu0 0.0
  %2146 = vmatprep.subr.mxu0 0.0
  %2147 = vmatpush1.msra.mxu0 0.0
  %2148 = vmatprep.subr.mxu0 0.0
  %2149 = vmatpush1.msra.mxu0 0.0
  %2150 = vmatprep.subr.mxu0 0.0
  %2151 = vmatpush1.msra.mxu0 0.0
  %2152 = vmatprep.subr.mxu0 0.0
  %2153 = vmatpush1.msra.mxu0 0.0
  %2154 = vmatprep.subr.mxu0 0.0
  %2155 = vmatpush1.msra.mxu0 0.0
  %2156 = vmatprep.subr.mxu0 0.0
  %2157 = vmatpush1.msra.mxu0 0.0
  %2158 = vmatprep.subr.mxu0 0.0
  %2159 = vmatpush1.msra.mxu0 0.0
  %2160 = vmatprep.subr.mxu0 0.0
  %2161 = vmatpush1.msra.mxu0 0.0
  %2162 = vmatprep.subr.mxu0 0.0
  %2163 = vmatpush1.msra.mxu0 0.0
  %2164 = vmatprep.subr.mxu0 0.0
  %2165 = vmatpush1.msra.mxu0 0.0
  %2166 = vmatprep.subr.mxu0 0.0
  %2167 = vmatpush1.msra.mxu0 0.0
  %2168 = vmatprep.mubr.f32.mxu0 0.0
  %2169 = vmatmul.mubr.f32.gmra.mrb[0].mxu0 %v2099
  %v2170 = vpop.f32.mrb[0].mxu0
  %v2171 = vadd.f32 %v25, %v2170
  %v2172 = vpop.f32.mrb[0].mxu0
  %2173 = vmatprep.mubr.f32.mxu0 0.0
  %2174 = vmatmul.mubr.f32.gmra.mrb[0].mxu0 %v2102
  %v2175 = vpop.f32.mrb[0].mxu0
  %v2176 = vadd.f32 %v26, %v2175
  %v2177 = vpop.f32.mrb[0].mxu0
  %2178 = vdwg.mxu0
  %v2179 = vsel %vm324, %v2171, -inf
  %2180 = vmax.xlane.f32.xlu0 %v2179
  %v2181 = vpop.xlane.xlu0 %2180
  %v2182 = vsel %vm324, %v2176, -inf
  %2183 = vmax.xlane.f32.xlu0 %v2182
  %v2184 = vpop.xlane.xlu0 %2183
  %v2185 = vsub.f32 %v2171, %v2181
  %v2186 = vsub.f32 %v2176, %v2184
  %v2187 = vmul.f32 %v2185, 1.442695
  %v2188 = vpow.pop %v2187
  %v2189 = vmul.f32 %v2186, 1.442695
  %v2190 = vpow.pop %v2189
  %v2191 = vsel %vm324, %v2188, 0.0
  %2192 = vadd.xlane.f32.xlu0 %v2191
  %v2193 = vpop.xlane.xlu0 %2192
  %v2194 = vsel %vm324, %v2190, 0.0
  %2195 = vadd.xlane.f32.xlu0 %v2194
  %v2196 = vpop.xlane.xlu0 %2195
  %v2197 = vrcp.pop %v2193
  %v2198 = vmul.f32 %v2188, %v2197
  %v2199 = vrcp.pop %v2196
  %v2200 = vmul.f32 %v2190, %v2199
  %v2202 = vsel %vm324, %v1630, 0
  %v2205 = vsel %vm324, %v2198, 0
  %v2208 = vsel %vm324, %v2200, 0
  %2210 = vmatprep.subr.mxu0 0.0
  %2211 = vmatpush1.xpose.msra.mxu0 %v2205
  %2212 = vmatprep.subr.mxu0 0.0
  %2213 = vmatpush1.xpose.msra.mxu0 %v2208
  %2214 = vmatprep.subr.mxu0 0.0
  %2215 = vmatpush1.xpose.msra.mxu0 0.0
  %2216 = vmatprep.subr.mxu0 0.0
  %2217 = vmatpush1.xpose.msra.mxu0 0.0
  %2218 = vmatprep.subr.mxu0 0.0
  %2219 = vmatpush1.xpose.msra.mxu0 0.0
  %2220 = vmatprep.subr.mxu0 0.0
  %2221 = vmatpush1.xpose.msra.mxu0 0.0
  %2222 = vmatprep.subr.mxu0 0.0
  %2223 = vmatpush1.xpose.msra.mxu0 0.0
  %2224 = vmatprep.subr.mxu0 0.0
  %2225 = vmatpush1.xpose.msra.mxu0 0.0
  %2226 = vmatprep.subr.mxu0 0.0
  %2227 = vmatpush1.xpose.msra.mxu0 0.0
  %2228 = vmatprep.subr.mxu0 0.0
  %2229 = vmatpush1.xpose.msra.mxu0 0.0
  %2230 = vmatprep.subr.mxu0 0.0
  %2231 = vmatpush1.xpose.msra.mxu0 0.0
  %2232 = vmatprep.subr.mxu0 0.0
  %2233 = vmatpush1.xpose.msra.mxu0 0.0
  %2234 = vmatprep.subr.mxu0 0.0
  %2235 = vmatpush1.xpose.msra.mxu0 0.0
  %2236 = vmatprep.subr.mxu0 0.0
  %2237 = vmatpush1.xpose.msra.mxu0 0.0
  %2238 = vmatprep.subr.mxu0 0.0
  %2239 = vmatpush1.xpose.msra.mxu0 0.0
  %2240 = vmatprep.subr.mxu0 0.0
  %2241 = vmatpush1.xpose.msra.mxu0 0.0
  %2242 = vmatprep.subr.mxu0 0.0
  %2243 = vmatpush1.xpose.msra.mxu0 0.0
  %2244 = vmatprep.subr.mxu0 0.0
  %2245 = vmatpush1.xpose.msra.mxu0 0.0
  %2246 = vmatprep.subr.mxu0 0.0
  %2247 = vmatpush1.xpose.msra.mxu0 0.0
  %2248 = vmatprep.subr.mxu0 0.0
  %2249 = vmatpush1.xpose.msra.mxu0 0.0
  %2250 = vmatprep.subr.mxu0 0.0
  %2251 = vmatpush1.xpose.msra.mxu0 0.0
  %2252 = vmatprep.subr.mxu0 0.0
  %2253 = vmatpush1.xpose.msra.mxu0 0.0
  %2254 = vmatprep.subr.mxu0 0.0
  %2255 = vmatpush1.xpose.msra.mxu0 0.0
  %2256 = vmatprep.subr.mxu0 0.0
  %2257 = vmatpush1.xpose.msra.mxu0 0.0
  %2258 = vmatprep.subr.mxu0 0.0
  %2259 = vmatpush1.xpose.msra.mxu0 0.0
  %2260 = vmatprep.subr.mxu0 0.0
  %2261 = vmatpush1.xpose.msra.mxu0 0.0
  %2262 = vmatprep.subr.mxu0 0.0
  %2263 = vmatpush1.xpose.msra.mxu0 0.0
  %2264 = vmatprep.subr.mxu0 0.0
  %2265 = vmatpush1.xpose.msra.mxu0 0.0
  %2266 = vmatprep.subr.mxu0 0.0
  %2267 = vmatpush1.xpose.msra.mxu0 0.0
  %2268 = vmatprep.subr.mxu0 0.0
  %2269 = vmatpush1.xpose.msra.mxu0 0.0
  %2270 = vmatprep.subr.mxu0 0.0
  %2271 = vmatpush1.xpose.msra.mxu0 0.0
  %2272 = vmatprep.subr.mxu0 0.0
  %2273 = vmatpush1.xpose.msra.mxu0 0.0
  %2274 = vmatprep.mubr.f32.mxu0 0.0
  %2275 = vmatmul.mubr.f32.gmra.mrb[0].mxu0 %v2202
  %v2276 = vpop.f32.mrb[0].mxu0
  %v2277 = vadd.f32 0.0, %v2276
  %v2278 = vpop.f32.mrb[0].mxu0
  %2279 = vdwg.mxu0
  %2280 = vxpose.xlu0.b32.start [1/16] %v1595, 128
  %2281 = vxpose.xlu0.b32.cont [2/16] 0.0, 128
  %2282 = vxpose.xlu0.b32.cont [3/16] 0.0, 128
  %2283 = vxpose.xlu0.b32.cont [4/16] 0.0, 128
  %2284 = vxpose.xlu0.b32.cont [5/16] 0.0, 128
  %2285 = vxpose.xlu0.b32.cont [6/16] 0.0, 128
  %2286 = vxpose.xlu0.b32.cont [7/16] 0.0, 128
  %2287 = vxpose.xlu0.b32.cont [8/16] 0.0, 128
  %2288 = vxpose.xlu0.b32.cont [9/16] 0.0, 128
  %2289 = vxpose.xlu0.b32.cont [10/16] 0.0, 128
  %2290 = vxpose.xlu0.b32.cont [11/16] 0.0, 128
  %2291 = vxpose.xlu0.b32.cont [12/16] 0.0, 128
  %2292 = vxpose.xlu0.b32.cont [13/16] 0.0, 128
  %2293 = vxpose.xlu0.b32.cont [14/16] 0.0, 128
  %2294 = vxpose.xlu0.b32.cont [15/16] 0.0, 128
  %2295 = vxpose.xlu0.b32.end [16/16] 0.0, 128
  %v2296 = vpop.trf.xlu0
  %v2297 = vpop.trf.xlu0
  %v2298 = vpop.trf.xlu0
  %v2299 = vpop.trf.xlu0
  %v2300 = vpop.trf.xlu0
  %v2301 = vpop.trf.xlu0
  %v2302 = vpop.trf.xlu0
  %v2303 = vpop.trf.xlu0
  %v2304 = vpop.trf.xlu0
  %v2305 = vpop.trf.xlu0
  %v2306 = vpop.trf.xlu0
  %v2307 = vpop.trf.xlu0
  %v2308 = vpop.trf.xlu0
  %v2309 = vpop.trf.xlu0
  %v2310 = vpop.trf.xlu0
  %v2311 = vpop.trf.xlu0
  %v2313 = vsel %vm242, %v2296, 0
  %v2316 = vsel %vm242, %v2297, 0
  %2318 = vmatprep.subr.mxu0 0.0
  %2319 = vmatpush1.msra.mxu0 %v1615
  %2320 = vmatprep.subr.mxu0 0.0
  %2321 = vmatpush1.msra.mxu0 0.0
  %2322 = vmatprep.subr.mxu0 0.0
  %2323 = vmatpush1.msra.mxu0 0.0
  %2324 = vmatprep.subr.mxu0 0.0
  %2325 = vmatpush1.msra.mxu0 0.0
  %2326 = vmatprep.subr.mxu0 0.0
  %2327 = vmatpush1.msra.mxu0 0.0
  %2328 = vmatprep.subr.mxu0 0.0
  %2329 = vmatpush1.msra.mxu0 0.0
  %2330 = vmatprep.subr.mxu0 0.0
  %2331 = vmatpush1.msra.mxu0 0.0
  %2332 = vmatprep.subr.mxu0 0.0
  %2333 = vmatpush1.msra.mxu0 0.0
  %2334 = vmatprep.subr.mxu0 0.0
  %2335 = vmatpush1.msra.mxu0 0.0
  %2336 = vmatprep.subr.mxu0 0.0
  %2337 = vmatpush1.msra.mxu0 0.0
  %2338 = vmatprep.subr.mxu0 0.0
  %2339 = vmatpush1.msra.mxu0 0.0
  %2340 = vmatprep.subr.mxu0 0.0
  %2341 = vmatpush1.msra.mxu0 0.0
  %2342 = vmatprep.subr.mxu0 0.0
  %2343 = vmatpush1.msra.mxu0 0.0
  %2344 = vmatprep.subr.mxu0 0.0
  %2345 = vmatpush1.msra.mxu0 0.0
  %2346 = vmatprep.subr.mxu0 0.0
  %2347 = vmatpush1.msra.mxu0 0.0
  %2348 = vmatprep.subr.mxu0 0.0
  %2349 = vmatpush1.msra.mxu0 0.0
  %2350 = vmatprep.subr.mxu0 0.0
  %2351 = vmatpush1.msra.mxu0 0.0
  %2352 = vmatprep.subr.mxu0 0.0
  %2353 = vmatpush1.msra.mxu0 0.0
  %2354 = vmatprep.subr.mxu0 0.0
  %2355 = vmatpush1.msra.mxu0 0.0
  %2356 = vmatprep.subr.mxu0 0.0
  %2357 = vmatpush1.msra.mxu0 0.0
  %2358 = vmatprep.subr.mxu0 0.0
  %2359 = vmatpush1.msra.mxu0 0.0
  %2360 = vmatprep.subr.mxu0 0.0
  %2361 = vmatpush1.msra.mxu0 0.0
  %2362 = vmatprep.subr.mxu0 0.0
  %2363 = vmatpush1.msra.mxu0 0.0
  %2364 = vmatprep.subr.mxu0 0.0
  %2365 = vmatpush1.msra.mxu0 0.0
  %2366 = vmatprep.subr.mxu0 0.0
  %2367 = vmatpush1.msra.mxu0 0.0
  %2368 = vmatprep.subr.mxu0 0.0
  %2369 = vmatpush1.msra.mxu0 0.0
  %2370 = vmatprep.subr.mxu0 0.0
  %2371 = vmatpush1.msra.mxu0 0.0
  %2372 = vmatprep.subr.mxu0 0.0
  %2373 = vmatpush1.msra.mxu0 0.0
  %2374 = vmatprep.subr.mxu0 0.0
  %2375 = vmatpush1.msra.mxu0 0.0
  %2376 = vmatprep.subr.mxu0 0.0
  %2377 = vmatpush1.msra.mxu0 0.0
  %2378 = vmatprep.subr.mxu0 0.0
  %2379 = vmatpush1.msra.mxu0 0.0
  %2380 = vmatprep.subr.mxu0 0.0
  %2381 = vmatpush1.msra.mxu0 0.0
  %2382 = vmatprep.mubr.f32.mxu0 0.0
  %2383 = vmatmul.mubr.f32.gmra.mrb[0].mxu0 %v2313
  %v2384 = vpop.f32.mrb[0].mxu0
  %v2385 = vadd.f32 %v25, %v2384
  %v2386 = vpop.f32.mrb[0].mxu0
  %2387 = vmatprep.mubr.f32.mxu0 0.0
  %2388 = vmatmul.mubr.f32.gmra.mrb[0].mxu0 %v2316
  %v2389 = vpop.f32.mrb[0].mxu0
  %v2390 = vadd.f32 %v26, %v2389
  %v2391 = vpop.f32.mrb[0].mxu0
  %2392 = vdwg.mxu0
  %v2393 = vsel %vm324, %v2385, -inf
  %2394 = vmax.xlane.f32.xlu0 %v2393
  %v2395 = vpop.xlane.xlu0 %2394
  %v2396 = vsel %vm324, %v2390, -inf
  %2397 = vmax.xlane.f32.xlu0 %v2396
  %v2398 = vpop.xlane.xlu0 %2397
  %v2399 = vsub.f32 %v2385, %v2395
  %v2400 = vsub.f32 %v2390, %v2398
  %v2401 = vmul.f32 %v2399, 1.442695
  %v2402 = vpow.pop %v2401
  %v2403 = vmul.f32 %v2400, 1.442695
  %v2404 = vpow.pop %v2403
  %v2405 = vsel %vm324, %v2402, 0.0
  %2406 = vadd.xlane.f32.xlu0 %v2405
  %v2407 = vpop.xlane.xlu0 %2406
  %v2408 = vsel %vm324, %v2404, 0.0
  %2409 = vadd.xlane.f32.xlu0 %v2408
  %v2410 = vpop.xlane.xlu0 %2409
  %v2411 = vrcp.pop %v2407
  %v2412 = vmul.f32 %v2402, %v2411
  %v2413 = vrcp.pop %v2410
  %v2414 = vmul.f32 %v2404, %v2413
  %v2416 = vsel %vm324, %v1635, 0
  %v2419 = vsel %vm324, %v2412, 0
  %v2422 = vsel %vm324, %v2414, 0
  %2424 = vmatprep.subr.mxu0 0.0
  %2425 = vmatpush1.xpose.msra.mxu0 %v2419
  %2426 = vmatprep.subr.mxu0 0.0
  %2427 = vmatpush1.xpose.msra.mxu0 %v2422
  %2428 = vmatprep.subr.mxu0 0.0
  %2429 = vmatpush1.xpose.msra.mxu0 0.0
  %2430 = vmatprep.subr.mxu0 0.0
  %2431 = vmatpush1.xpose.msra.mxu0 0.0
  %2432 = vmatprep.subr.mxu0 0.0
  %2433 = vmatpush1.xpose.msra.mxu0 0.0
  %2434 = vmatprep.subr.mxu0 0.0
  %2435 = vmatpush1.xpose.msra.mxu0 0.0
  %2436 = vmatprep.subr.mxu0 0.0
  %2437 = vmatpush1.xpose.msra.mxu0 0.0
  %2438 = vmatprep.subr.mxu0 0.0
  %2439 = vmatpush1.xpose.msra.mxu0 0.0
  %2440 = vmatprep.subr.mxu0 0.0
  %2441 = vmatpush1.xpose.msra.mxu0 0.0
  %2442 = vmatprep.subr.mxu0 0.0
  %2443 = vmatpush1.xpose.msra.mxu0 0.0
  %2444 = vmatprep.subr.mxu0 0.0
  %2445 = vmatpush1.xpose.msra.mxu0 0.0
  %2446 = vmatprep.subr.mxu0 0.0
  %2447 = vmatpush1.xpose.msra.mxu0 0.0
  %2448 = vmatprep.subr.mxu0 0.0
  %2449 = vmatpush1.xpose.msra.mxu0 0.0
  %2450 = vmatprep.subr.mxu0 0.0
  %2451 = vmatpush1.xpose.msra.mxu0 0.0
  %2452 = vmatprep.subr.mxu0 0.0
  %2453 = vmatpush1.xpose.msra.mxu0 0.0
  %2454 = vmatprep.subr.mxu0 0.0
  %2455 = vmatpush1.xpose.msra.mxu0 0.0
  %2456 = vmatprep.subr.mxu0 0.0
  %2457 = vmatpush1.xpose.msra.mxu0 0.0
  %2458 = vmatprep.subr.mxu0 0.0
  %2459 = vmatpush1.xpose.msra.mxu0 0.0
  %2460 = vmatprep.subr.mxu0 0.0
  %2461 = vmatpush1.xpose.msra.mxu0 0.0
  %2462 = vmatprep.subr.mxu0 0.0
  %2463 = vmatpush1.xpose.msra.mxu0 0.0
  %2464 = vmatprep.subr.mxu0 0.0
  %2465 = vmatpush1.xpose.msra.mxu0 0.0
  %2466 = vmatprep.subr.mxu0 0.0
  %2467 = vmatpush1.xpose.msra.mxu0 0.0
  %2468 = vmatprep.subr.mxu0 0.0
  %2469 = vmatpush1.xpose.msra.mxu0 0.0
  %2470 = vmatprep.subr.mxu0 0.0
  %2471 = vmatpush1.xpose.msra.mxu0 0.0
  %2472 = vmatprep.subr.mxu0 0.0
  %2473 = vmatpush1.xpose.msra.mxu0 0.0
  %2474 = vmatprep.subr.mxu0 0.0
  %2475 = vmatpush1.xpose.msra.mxu0 0.0
  %2476 = vmatprep.subr.mxu0 0.0
  %2477 = vmatpush1.xpose.msra.mxu0 0.0
  %2478 = vmatprep.subr.mxu0 0.0
  %2479 = vmatpush1.xpose.msra.mxu0 0.0
  %2480 = vmatprep.subr.mxu0 0.0
  %2481 = vmatpush1.xpose.msra.mxu0 0.0
  %2482 = vmatprep.subr.mxu0 0.0
  %2483 = vmatpush1.xpose.msra.mxu0 0.0
  %2484 = vmatprep.subr.mxu0 0.0
  %2485 = vmatpush1.xpose.msra.mxu0 0.0
  %2486 = vmatprep.subr.mxu0 0.0
  %2487 = vmatpush1.xpose.msra.mxu0 0.0
  %2488 = vmatprep.mubr.f32.mxu0 0.0
  %2489 = vmatmul.mubr.f32.gmra.mrb[0].mxu0 %v2416
  %v2490 = vpop.f32.mrb[0].mxu0
  %v2491 = vadd.f32 0.0, %v2490
  %v2492 = vpop.f32.mrb[0].mxu0
  %2493 = vdwg.mxu0
  %2494 = vxpose.xlu0.b32.start [1/16] %v1849, 128
  %2495 = vxpose.xlu0.b32.cont [2/16] %v2063, 128
  %2496 = vxpose.xlu0.b32.cont [3/16] %v2277, 128
  %2497 = vxpose.xlu0.b32.cont [4/16] %v2491, 128
  %2498 = vxpose.xlu0.b32.cont [5/16] 0.0, 128
  %2499 = vxpose.xlu0.b32.cont [6/16] 0.0, 128
  %2500 = vxpose.xlu0.b32.cont [7/16] 0.0, 128
  %2501 = vxpose.xlu0.b32.cont [8/16] 0.0, 128
  %2502 = vxpose.xlu0.b32.cont [9/16] 0.0, 128
  %2503 = vxpose.xlu0.b32.cont [10/16] 0.0, 128
  %2504 = vxpose.xlu0.b32.cont [11/16] 0.0, 128
  %2505 = vxpose.xlu0.b32.cont [12/16] 0.0, 128
  %2506 = vxpose.xlu0.b32.cont [13/16] 0.0, 128
  %2507 = vxpose.xlu0.b32.cont [14/16] 0.0, 128
  %2508 = vxpose.xlu0.b32.cont [15/16] 0.0, 128
  %2509 = vxpose.xlu0.b32.end [16/16] 0.0, 128
  %v2510 = vpop.trf.xlu0
  %v2511 = vpop.trf.xlu0
  %v2512 = vpop.trf.xlu0
  %v2513 = vpop.trf.xlu0
  %v2514 = vpop.trf.xlu0
  %v2515 = vpop.trf.xlu0
  %v2516 = vpop.trf.xlu0
  %v2517 = vpop.trf.xlu0
  %v2518 = vpop.trf.xlu0
  %v2519 = vpop.trf.xlu0
  %v2520 = vpop.trf.xlu0
  %v2521 = vpop.trf.xlu0
  %v2522 = vpop.trf.xlu0
  %v2523 = vpop.trf.xlu0
  %v2524 = vpop.trf.xlu0
  %v2525 = vpop.trf.xlu0
  %s2526 = scalar_lea.vmem %s3, 128
  %v2527 = vld [vmem:[%s2526] sm:$0xff]
  %v2528 = vld [vmem:[%s2526 + $0x8] sm:$0xff]
  %v2529 = vld [vmem:[%s2526 + $0x10] sm:$0xff]
  %v2530 = vld [vmem:[%s2526 + $0x18] sm:$0xff]
  %v2531 = vld [vmem:[%s2526 + $0x20] sm:$0xff]
  %v2532 = vld [vmem:[%s2526 + $0x28] sm:$0xff]
  %v2533 = vld [vmem:[%s2526 + $0x30] sm:$0xff]
  %v2534 = vld [vmem:[%s2526 + $0x38] sm:$0xff]
  %v2535 = vld [vmem:[%s2526 + $0x40] sm:$0xff]
  %v2536 = vld [vmem:[%s2526 + $0x48] sm:$0xff]
  %v2537 = vld [vmem:[%s2526 + $0x50] sm:$0xff]
  %v2538 = vld [vmem:[%s2526 + $0x58] sm:$0xff]
  %v2539 = vld [vmem:[%s2526 + $0x60] sm:$0xff]
  %v2540 = vld [vmem:[%s2526 + $0x68] sm:$0xff]
  %v2541 = vld [vmem:[%s2526 + $0x70] sm:$0xff]
  %v2542 = vld [vmem:[%s2526 + $0x78] sm:$0xff]
  %s2543 = scalar_lea.vmem %s4, 8
  %v2544 = vld [vmem:[%s2543] sm:$0xff]
  %v2545 = vlaneseq
  %v2546 = vshrl.u32 %v2545, 7
  %v2547 = vsub.s32 0, %v2546
  %v2548 = vrot.slane %v2544, %v2547
  %v2550 = vsel %vm27, %v2510, 0
  %v2553 = vsel %vm27, %v2511, 0
  %2555 = vmatprep.subr.mxu0 0.0
  %2556 = vmatpush1.msra.mxu0 %v2539
  %2557 = vmatprep.subr.mxu0 0.0
  %2558 = vmatpush1.msra.mxu0 %v2540
  %2559 = vmatprep.subr.mxu0 0.0
  %2560 = vmatpush1.msra.mxu0 %v2541
  %2561 = vmatprep.subr.mxu0 0.0
  %2562 = vmatpush1.msra.mxu0 %v2542
  %2563 = vmatprep.subr.mxu0 0.0
  %2564 = vmatpush1.msra.mxu0 0.0
  %2565 = vmatprep.subr.mxu0 0.0
  %2566 = vmatpush1.msra.mxu0 0.0
  %2567 = vmatprep.subr.mxu0 0.0
  %2568 = vmatpush1.msra.mxu0 0.0
  %2569 = vmatprep.subr.mxu0 0.0
  %2570 = vmatpush1.msra.mxu0 0.0
  %2571 = vmatprep.subr.mxu0 0.0
  %2572 = vmatpush1.msra.mxu0 0.0
  %2573 = vmatprep.subr.mxu0 0.0
  %2574 = vmatpush1.msra.mxu0 0.0
  %2575 = vmatprep.subr.mxu0 0.0
  %2576 = vmatpush1.msra.mxu0 0.0
  %2577 = vmatprep.subr.mxu0 0.0
  %2578 = vmatpush1.msra.mxu0 0.0
  %2579 = vmatprep.subr.mxu0 0.0
  %2580 = vmatpush1.msra.mxu0 0.0
  %2581 = vmatprep.subr.mxu0 0.0
  %2582 = vmatpush1.msra.mxu0 0.0
  %2583 = vmatprep.subr.mxu0 0.0
  %2584 = vmatpush1.msra.mxu0 0.0
  %2585 = vmatprep.subr.mxu0 0.0
  %2586 = vmatpush1.msra.mxu0 0.0
  %2587 = vmatprep.subr.mxu0 0.0
  %2588 = vmatpush1.msra.mxu0 0.0
  %2589 = vmatprep.subr.mxu0 0.0
  %2590 = vmatpush1.msra.mxu0 0.0
  %2591 = vmatprep.subr.mxu0 0.0
  %2592 = vmatpush1.msra.mxu0 0.0
  %2593 = vmatprep.subr.mxu0 0.0
  %2594 = vmatpush1.msra.mxu0 0.0
  %2595 = vmatprep.subr.mxu0 0.0
  %2596 = vmatpush1.msra.mxu0 0.0
  %2597 = vmatprep.subr.mxu0 0.0
  %2598 = vmatpush1.msra.mxu0 0.0
  %2599 = vmatprep.subr.mxu0 0.0
  %2600 = vmatpush1.msra.mxu0 0.0
  %2601 = vmatprep.subr.mxu0 0.0
  %2602 = vmatpush1.msra.mxu0 0.0
  %2603 = vmatprep.subr.mxu0 0.0
  %2604 = vmatpush1.msra.mxu0 0.0
  %2605 = vmatprep.subr.mxu0 0.0
  %2606 = vmatpush1.msra.mxu0 0.0
  %2607 = vmatprep.subr.mxu0 0.0
  %2608 = vmatpush1.msra.mxu0 0.0
  %2609 = vmatprep.subr.mxu0 0.0
  %2610 = vmatpush1.msra.mxu0 0.0
  %2611 = vmatprep.subr.mxu0 0.0
  %2612 = vmatpush1.msra.mxu0 0.0
  %2613 = vmatprep.subr.mxu0 0.0
  %2614 = vmatpush1.msra.mxu0 0.0
  %2615 = vmatprep.subr.mxu0 0.0
  %2616 = vmatpush1.msra.mxu0 0.0
  %2617 = vmatprep.subr.mxu0 0.0
  %2618 = vmatpush1.msra.mxu0 0.0
  %2619 = vmatprep.mubr.f32.mxu0 0.0
  %2620 = vmatmul.mubr.f32.gmra.mrb[0].mxu0 %v2550
  %v2621 = vpop.f32.mrb[0].mxu0
  %v2622 = vadd.f32 %v2548, %v2621
  %v2623 = vpop.f32.mrb[0].mxu0
  %2624 = vmatprep.mubr.f32.mxu0 0.0
  %2625 = vmatmul.mubr.f32.gmra.mrb[0].mxu0 %v2553
  %v2626 = vpop.f32.mrb[0].mxu0
  %v2627 = vadd.f32 %v2548, %v2626
  %v2628 = vpop.f32.mrb[0].mxu0
  %2629 = vdwg.mxu0
  %v2630 = vadd.f32 %v1454, %v2622
  %v2631 = vadd.f32 %v1455, %v2627
  %v2632 = vsel %vm27, %v2630, 0.0
  %2633 = vadd.xlane.f32.xlu0 %v2632
  %v2634 = vpop.xlane.xlu0 %2633
  %v2635 = vsel %vm27, %v2631, 0.0
  %2636 = vadd.xlane.f32.xlu0 %v2635
  %v2637 = vpop.xlane.xlu0 %2636
  %v2638 = vmul.f32 %v2634, %v1210
  %v2639 = vmul.f32 %v2637, %v1210
  %v2640 = vsub.f32 %v2630, %v2638
  %v2641 = vsub.f32 %v2631, %v2639
  %v2642 = vmul.f32 %v2640, %v2640
  %v2643 = vmul.f32 %v2641, %v2641
  %v2644 = vsel %vm27, %v2642, 0.0
  %2645 = vadd.xlane.f32.xlu0 %v2644
  %v2646 = vpop.xlane.xlu0 %2645
  %v2647 = vsel %vm27, %v2643, 0.0
  %2648 = vadd.xlane.f32.xlu0 %v2647
  %v2649 = vpop.xlane.xlu0 %2648
  %v2650 = vmul.f32 %v2646, %v1210
  %v2651 = vmul.f32 %v2649, %v1210
  %v2652 = vadd.f32 %v2650, 1e-05
  %v2653 = vadd.f32 %v2651, 1e-05
  %v2654 = vrsqrt.pop %v2652
  %v2655 = vrsqrt.pop %v2653
  %v2656 = vmul.f32 %v2640, %v2654
  %v2657 = vmul.f32 %v2641, %v2655
  %v2658 = vlaneseq
  %v2659 = vshrl.u32 %v2658, 7
  %v2660 = vsub.s32 1, %v2659
  %v2661 = vrot.slane %v2544, %v2660
  %v2662 = vmul.f32 %v2656, %v2661
  %v2663 = vmul.f32 %v2657, %v2661
  %v2664 = vlaneseq
  %v2665 = vshrl.u32 %v2664, 7
  %v2666 = vsub.s32 2, %v2665
  %v2667 = vrot.slane %v2544, %v2666
  %v2668 = vadd.f32 %v2662, %v2667
  %v2669 = vadd.f32 %v2663, %v2667
  %v2670 = vlaneseq
  %v2671 = vshrl.u32 %v2670, 7
  %v2672 = vsub.s32 3, %v2671
  %v2673 = vrot.slane %v2544, %v2672
  %v2675 = vsel %vm27, %v2668, 0
  %v2678 = vsel %vm27, %v2669, 0
  %2680 = vmatprep.subr.mxu0 0.0
  %2681 = vmatpush1.msra.mxu0 %v2527
  %2682 = vmatprep.subr.mxu0 0.0
  %2683 = vmatpush1.msra.mxu0 %v2528
  %2684 = vmatprep.subr.mxu0 0.0
  %2685 = vmatpush1.msra.mxu0 %v2529
  %2686 = vmatprep.subr.mxu0 0.0
  %2687 = vmatpush1.msra.mxu0 %v2530
  %2688 = vmatprep.subr.mxu0 0.0
  %2689 = vmatpush1.msra.mxu0 0.0
  %2690 = vmatprep.subr.mxu0 0.0
  %2691 = vmatpush1.msra.mxu0 0.0
  %2692 = vmatprep.subr.mxu0 0.0
  %2693 = vmatpush1.msra.mxu0 0.0
  %2694 = vmatprep.subr.mxu0 0.0
  %2695 = vmatpush1.msra.mxu0 0.0
  %2696 = vmatprep.subr.mxu0 0.0
  %2697 = vmatpush1.msra.mxu0 0.0
  %2698 = vmatprep.subr.mxu0 0.0
  %2699 = vmatpush1.msra.mxu0 0.0
  %2700 = vmatprep.subr.mxu0 0.0
  %2701 = vmatpush1.msra.mxu0 0.0
  %2702 = vmatprep.subr.mxu0 0.0
  %2703 = vmatpush1.msra.mxu0 0.0
  %2704 = vmatprep.subr.mxu0 0.0
  %2705 = vmatpush1.msra.mxu0 0.0
  %2706 = vmatprep.subr.mxu0 0.0
  %2707 = vmatpush1.msra.mxu0 0.0
  %2708 = vmatprep.subr.mxu0 0.0
  %2709 = vmatpush1.msra.mxu0 0.0
  %2710 = vmatprep.subr.mxu0 0.0
  %2711 = vmatpush1.msra.mxu0 0.0
  %2712 = vmatprep.subr.mxu0 0.0
  %2713 = vmatpush1.msra.mxu0 0.0
  %2714 = vmatprep.subr.mxu0 0.0
  %2715 = vmatpush1.msra.mxu0 0.0
  %2716 = vmatprep.subr.mxu0 0.0
  %2717 = vmatpush1.msra.mxu0 0.0
  %2718 = vmatprep.subr.mxu0 0.0
  %2719 = vmatpush1.msra.mxu0 0.0
  %2720 = vmatprep.subr.mxu0 0.0
  %2721 = vmatpush1.msra.mxu0 0.0
  %2722 = vmatprep.subr.mxu0 0.0
  %2723 = vmatpush1.msra.mxu0 0.0
  %2724 = vmatprep.subr.mxu0 0.0
  %2725 = vmatpush1.msra.mxu0 0.0
  %2726 = vmatprep.subr.mxu0 0.0
  %2727 = vmatpush1.msra.mxu0 0.0
  %2728 = vmatprep.subr.mxu0 0.0
  %2729 = vmatpush1.msra.mxu0 0.0
  %2730 = vmatprep.subr.mxu0 0.0
  %2731 = vmatpush1.msra.mxu0 0.0
  %2732 = vmatprep.subr.mxu0 0.0
  %2733 = vmatpush1.msra.mxu0 0.0
  %2734 = vmatprep.subr.mxu0 0.0
  %2735 = vmatpush1.msra.mxu0 0.0
  %2736 = vmatprep.subr.mxu0 0.0
  %2737 = vmatpush1.msra.mxu0 0.0
  %2738 = vmatprep.subr.mxu0 0.0
  %2739 = vmatpush1.msra.mxu0 0.0
  %2740 = vmatprep.subr.mxu0 0.0
  %2741 = vmatpush1.msra.mxu0 0.0
  %2742 = vmatprep.subr.mxu0 0.0
  %2743 = vmatpush1.msra.mxu0 0.0
  %2744 = vmatprep.mubr.f32.mxu0 0.0
  %2745 = vmatmul.mubr.f32.gmra.mrb[0].mxu0 %v2675
  %v2746 = vpop.f32.mrb[0].mxu0
  %v2747 = vadd.f32 %v2673, %v2746
  %v2748 = vpop.f32.mrb[0].mxu0
  %2749 = vmatprep.mubr.f32.mxu0 0.0
  %2750 = vmatmul.mubr.f32.gmra.mrb[0].mxu0 %v2678
  %v2751 = vpop.f32.mrb[0].mxu0
  %v2752 = vadd.f32 %v2673, %v2751
  %v2753 = vpop.f32.mrb[0].mxu0
  %2754 = vdwg.mxu0
  %v2755 = vmax.f32 %v2747, 0.0
  %v2756 = vmax.f32 %v2752, 0.0
  %v2757 = vlaneseq
  %v2758 = vshrl.u32 %v2757, 7
  %v2759 = vsub.s32 4, %v2758
  %v2760 = vrot.slane %v2544, %v2759
  %v2762 = vsel %vm1334, %v2755, 0
  %v2765 = vsel %vm1334, %v2756, 0
  %2767 = vmatprep.subr.mxu0 0.0
  %2768 = vmatpush1.msra.mxu0 %v2531
  %2769 = vmatprep.subr.mxu0 0.0
  %2770 = vmatpush1.msra.mxu0 %v2532
  %2771 = vmatprep.subr.mxu0 0.0
  %2772 = vmatpush1.msra.mxu0 %v2533
  %2773 = vmatprep.subr.mxu0 0.0
  %2774 = vmatpush1.msra.mxu0 %v2534
  %2775 = vmatprep.subr.mxu0 0.0
  %2776 = vmatpush1.msra.mxu0 %v2535
  %2777 = vmatprep.subr.mxu0 0.0
  %2778 = vmatpush1.msra.mxu0 %v2536
  %2779 = vmatprep.subr.mxu0 0.0
  %2780 = vmatpush1.msra.mxu0 %v2537
  %2781 = vmatprep.subr.mxu0 0.0
  %2782 = vmatpush1.msra.mxu0 %v2538
  %2783 = vmatprep.subr.mxu0 0.0
  %2784 = vmatpush1.msra.mxu0 0.0
  %2785 = vmatprep.subr.mxu0 0.0
  %2786 = vmatpush1.msra.mxu0 0.0
  %2787 = vmatprep.subr.mxu0 0.0
  %2788 = vmatpush1.msra.mxu0 0.0
  %2789 = vmatprep.subr.mxu0 0.0
  %2790 = vmatpush1.msra.mxu0 0.0
  %2791 = vmatprep.subr.mxu0 0.0
  %2792 = vmatpush1.msra.mxu0 0.0
  %2793 = vmatprep.subr.mxu0 0.0
  %2794 = vmatpush1.msra.mxu0 0.0
  %2795 = vmatprep.subr.mxu0 0.0
  %2796 = vmatpush1.msra.mxu0 0.0
  %2797 = vmatprep.subr.mxu0 0.0
  %2798 = vmatpush1.msra.mxu0 0.0
  %2799 = vmatprep.subr.mxu0 0.0
  %2800 = vmatpush1.msra.mxu0 0.0
  %2801 = vmatprep.subr.mxu0 0.0
  %2802 = vmatpush1.msra.mxu0 0.0
  %2803 = vmatprep.subr.mxu0 0.0
  %2804 = vmatpush1.msra.mxu0 0.0
  %2805 = vmatprep.subr.mxu0 0.0
  %2806 = vmatpush1.msra.mxu0 0.0
  %2807 = vmatprep.subr.mxu0 0.0
  %2808 = vmatpush1.msra.mxu0 0.0
  %2809 = vmatprep.subr.mxu0 0.0
  %2810 = vmatpush1.msra.mxu0 0.0
  %2811 = vmatprep.subr.mxu0 0.0
  %2812 = vmatpush1.msra.mxu0 0.0
  %2813 = vmatprep.subr.mxu0 0.0
  %2814 = vmatpush1.msra.mxu0 0.0
  %2815 = vmatprep.subr.mxu0 0.0
  %2816 = vmatpush1.msra.mxu0 0.0
  %2817 = vmatprep.subr.mxu0 0.0
  %2818 = vmatpush1.msra.mxu0 0.0
  %2819 = vmatprep.subr.mxu0 0.0
  %2820 = vmatpush1.msra.mxu0 0.0
  %2821 = vmatprep.subr.mxu0 0.0
  %2822 = vmatpush1.msra.mxu0 0.0
  %2823 = vmatprep.subr.mxu0 0.0
  %2824 = vmatpush1.msra.mxu0 0.0
  %2825 = vmatprep.subr.mxu0 0.0
  %2826 = vmatpush1.msra.mxu0 0.0
  %2827 = vmatprep.subr.mxu0 0.0
  %2828 = vmatpush1.msra.mxu0 0.0
  %2829 = vmatprep.subr.mxu0 0.0
  %2830 = vmatpush1.msra.mxu0 0.0
  %2831 = vmatprep.mubr.f32.mxu0 0.0
  %2832 = vmatmul.mubr.f32.gmra.mrb[0].mxu0 %v2762
  %v2833 = vpop.f32.mrb[0].mxu0
  %v2834 = vadd.f32 %v2760, %v2833
  %v2835 = vpop.f32.mrb[0].mxu0
  %2836 = vmatprep.mubr.f32.mxu0 0.0
  %2837 = vmatmul.mubr.f32.gmra.mrb[0].mxu0 %v2765
  %v2838 = vpop.f32.mrb[0].mxu0
  %v2839 = vadd.f32 %v2760, %v2838
  %v2840 = vpop.f32.mrb[0].mxu0
  %2841 = vdwg.mxu0
  %v2842 = vadd.f32 %v2668, %v2834
  %v2843 = vadd.f32 %v2669, %v2839
  %v2844 = vsel %vm27, %v2842, 0.0
  %2845 = vadd.xlane.f32.xlu0 %v2844
  %v2846 = vpop.xlane.xlu0 %2845
  %v2847 = vsel %vm27, %v2843, 0.0
  %2848 = vadd.xlane.f32.xlu0 %v2847
  %v2849 = vpop.xlane.xlu0 %2848
  %v2850 = vmul.f32 %v2846, %v1210
  %v2851 = vmul.f32 %v2849, %v1210
  %v2852 = vsub.f32 %v2842, %v2850
  %v2853 = vsub.f32 %v2843, %v2851
  %v2854 = vmul.f32 %v2852, %v2852
  %v2855 = vmul.f32 %v2853, %v2853
  %v2856 = vsel %vm27, %v2854, 0.0
  %2857 = vadd.xlane.f32.xlu0 %v2856
  %v2858 = vpop.xlane.xlu0 %2857
  %v2859 = vsel %vm27, %v2855, 0.0
  %2860 = vadd.xlane.f32.xlu0 %v2859
  %v2861 = vpop.xlane.xlu0 %2860
  %v2862 = vmul.f32 %v2858, %v1210
  %v2863 = vmul.f32 %v2861, %v1210
  %v2864 = vadd.f32 %v2862, 1e-05
  %v2865 = vadd.f32 %v2863, 1e-05
  %v2866 = vrsqrt.pop %v2864
  %v2867 = vrsqrt.pop %v2865
  %v2868 = vmul.f32 %v2852, %v2866
  %v2869 = vmul.f32 %v2853, %v2867
  %v2870 = vlaneseq
  %v2871 = vshrl.u32 %v2870, 7
  %v2872 = vsub.s32 5, %v2871
  %v2873 = vrot.slane %v2544, %v2872
  %v2874 = vmul.f32 %v2868, %v2873
  %v2875 = vmul.f32 %v2869, %v2873
  %v2876 = vlaneseq
  %v2877 = vshrl.u32 %v2876, 7
  %v2878 = vsub.s32 6, %v2877
  %v2879 = vrot.slane %v2544, %v2878
  %v2880 = vadd.f32 %v2874, %v2879
  %v2881 = vadd.f32 %v2875, %v2879
  %v2882 = vsel %vm27, %v2880, 1.0
  %v2883 = vsel %vm27, %v2881, 1.0
  %v2884 = vld [vmem:[%s5] sm:$0xff]
  %v2885 = vld [vmem:[%s5 + $0x8] sm:$0xff]
  %v2886 = vld [vmem:[%s5 + $0x10] sm:$0xff]
  %v2887 = vld [vmem:[%s5 + $0x18] sm:$0xff]
  %v2888 = vld [vmem:[%s5 + $0x20] sm:$0x1]
  %v2890 = vsel %vm42, %v2882, 0
  %v2893 = vsel %vm42, %v2883, 0
  %vm2895 = vcmask 1040384
  %v2897 = vsel %vm2895, %v2888, 0
  %2899 = vmatprep.subr.mxu0 0.0
  %2900 = vmatpush1.msra.mxu0 %v2884
  %2901 = vmatprep.subr.mxu0 0.0
  %2902 = vmatpush1.msra.mxu0 %v2885
  %2903 = vmatprep.subr.mxu0 0.0
  %2904 = vmatpush1.msra.mxu0 %v2886
  %2905 = vmatprep.subr.mxu0 0.0
  %2906 = vmatpush1.msra.mxu0 %v2887
  %2907 = vmatprep.subr.mxu0 0.0
  %2908 = vmatpush1.msra.mxu0 %v2897
  %2909 = vmatprep.subr.mxu0 0.0
  %2910 = vmatpush1.msra.mxu0 0.0
  %2911 = vmatprep.subr.mxu0 0.0
  %2912 = vmatpush1.msra.mxu0 0.0
  %2913 = vmatprep.subr.mxu0 0.0
  %2914 = vmatpush1.msra.mxu0 0.0
  %2915 = vmatprep.subr.mxu0 0.0
  %2916 = vmatpush1.msra.mxu0 0.0
  %2917 = vmatprep.subr.mxu0 0.0
  %2918 = vmatpush1.msra.mxu0 0.0
  %2919 = vmatprep.subr.mxu0 0.0
  %2920 = vmatpush1.msra.mxu0 0.0
  %2921 = vmatprep.subr.mxu0 0.0
  %2922 = vmatpush1.msra.mxu0 0.0
  %2923 = vmatprep.subr.mxu0 0.0
  %2924 = vmatpush1.msra.mxu0 0.0
  %2925 = vmatprep.subr.mxu0 0.0
  %2926 = vmatpush1.msra.mxu0 0.0
  %2927 = vmatprep.subr.mxu0 0.0
  %2928 = vmatpush1.msra.mxu0 0.0
  %2929 = vmatprep.subr.mxu0 0.0
  %2930 = vmatpush1.msra.mxu0 0.0
  %2931 = vmatprep.subr.mxu0 0.0
  %2932 = vmatpush1.msra.mxu0 0.0
  %2933 = vmatprep.subr.mxu0 0.0
  %2934 = vmatpush1.msra.mxu0 0.0
  %2935 = vmatprep.subr.mxu0 0.0
  %2936 = vmatpush1.msra.mxu0 0.0
  %2937 = vmatprep.subr.mxu0 0.0
  %2938 = vmatpush1.msra.mxu0 0.0
  %2939 = vmatprep.subr.mxu0 0.0
  %2940 = vmatpush1.msra.mxu0 0.0
  %2941 = vmatprep.subr.mxu0 0.0
  %2942 = vmatpush1.msra.mxu0 0.0
  %2943 = vmatprep.subr.mxu0 0.0
  %2944 = vmatpush1.msra.mxu0 0.0
  %2945 = vmatprep.subr.mxu0 0.0
  %2946 = vmatpush1.msra.mxu0 0.0
  %2947 = vmatprep.subr.mxu0 0.0
  %2948 = vmatpush1.msra.mxu0 0.0
  %2949 = vmatprep.subr.mxu0 0.0
  %2950 = vmatpush1.msra.mxu0 0.0
  %2951 = vmatprep.subr.mxu0 0.0
  %2952 = vmatpush1.msra.mxu0 0.0
  %2953 = vmatprep.subr.mxu0 0.0
  %2954 = vmatpush1.msra.mxu0 0.0
  %2955 = vmatprep.subr.mxu0 0.0
  %2956 = vmatpush1.msra.mxu0 0.0
  %2957 = vmatprep.subr.mxu0 0.0
  %2958 = vmatpush1.msra.mxu0 0.0
  %2959 = vmatprep.subr.mxu0 0.0
  %2960 = vmatpush1.msra.mxu0 0.0
  %2961 = vmatprep.subr.mxu0 0.0
  %2962 = vmatpush1.msra.mxu0 0.0
  %2963 = vmatprep.mubr.f32.mxu0 0.0
  %2964 = vmatmul.mubr.f32.gmra.mrb[0].mxu0 %v2890
  %v2965 = vpop.f32.mrb[0].mxu0
  %v2966 = vadd.f32 0.0, %v2965
  %v2967 = vpop.f32.mrb[0].mxu0
  %2968 = vmatprep.mubr.f32.mxu0 0.0
  %2969 = vmatmul.mubr.f32.gmra.mrb[0].mxu0 %v2893
  %v2970 = vpop.f32.mrb[0].mxu0
  %v2971 = vadd.f32 0.0, %v2970
  %v2972 = vpop.f32.mrb[0].mxu0
  %2973 = vdwg.mxu0
  %2974 = vst [vmem:[%s6] sm:$0xff] %v2966
  %2975 = vst [vmem:[%s6 + $0x8] sm:$0xff] %v2971
  // Predicated region
  $region26: #{transformer_forward.1} parent=0 // pred_check
    _
  $region27: #{transformer_forward.1} parent=0 // pred_check_branch
    %2977 = sbr.rel (0) target = $region29
  $region28: #{transformer_forward.1} parent=0 // pred_region
    _
  $region29: #{transformer_forward.1} parent=0 // pred_fallthru
    _
  // Predicated region
  $region30: #{transformer_forward.1} parent=0 // pred_check
    _
  $region31: #{transformer_forward.1} parent=0 // pred_check_branch
    %2979 = sbr.rel (0) target = $region33
  $region32: #{transformer_forward.1} parent=0 // pred_region
    _
  $region33: #{transformer_forward.1} parent=0 // pred_fallthru
    _

</llo_original>
